<compile_context>
chip_gen: v7x
topology: tpu7x:2x2x1
jax: 0.10.0
libtpu: 0.0.40
codegen_flags: <defaults>
</compile_context>

<pallas_src>
import math

import jax
import jax.numpy as jnp
import numpy as np
from jax import lax
from jax.experimental import pallas as pl
from jax.experimental.pallas import tpu as pltpu  # noqa: F401  (TPU backend assumed)


# ----------------------------------------------------------------------------
# In-kernel helpers
# ----------------------------------------------------------------------------
def _mm(a, w_ref):
    """Single-pass bf16 MXU matmul with f32 accumulation.

    Weights are pre-cast to bf16 outside the kernel; casting the tiny activation
    operand is one VPU op.  Replaces the previous precision=HIGHEST f32 matmuls
    that multiplied MXU passes on the serial recurrence chain."""
    return jnp.dot(a.astype(jnp.bfloat16), w_ref[...],
                   preferred_element_type=jnp.float32)


def _lstm2_stack(xs, wih0_ref, b0_ref, cat_ref, whh1_ref, b1_ref, *,
                 collect=False):
    """2-layer stacked LSTM over a short list of per-step (B, Din) inputs.

    cat_ref holds [whh0 | wih1] so each newly produced layer-1 hidden h1 needs
    ONE MXU push that simultaneously yields the layer-2 input-gate term for the
    current step and the layer-1 recurrent term for the next step.  dot(h2,whh1)
    only feeds the NEXT step's layer-2 gates, so it is off the h1 critical chain.
    Everything is fully unrolled (T <= 8) and stays in vregs."""
    B = xs[0].shape[0]
    H = whh1_ref.shape[0]
    G = 4 * H
    T = len(xs)

    # Hoisted activation constants: tanh on g-gate lanes from a single sigmoid
    # pass via tanh(x) = 2*sigmoid(2x) - 1  => ~half the EUP work per cell.
    lane = lax.broadcasted_iota(jnp.int32, (B, G), 1)
    is_g = (lane >= 2 * H) & (lane < 3 * H)
    act_scale = jnp.where(is_g, 2.0, 1.0).astype(jnp.float32)
    act_shift = jnp.where(is_g, -1.0, 0.0).astype(jnp.float32)

    def cell(gates, c):
        a = jax.nn.sigmoid(gates * act_scale) * act_scale + act_shift
        i_g = a[:, 0 * H:1 * H]
        f_g = a[:, 1 * H:2 * H]
        g_g = a[:, 2 * H:3 * H]
        o_g = a[:, 3 * H:4 * H]
        c_new = f_g * c + i_g * g_g
        return o_g * jnp.tanh(c_new), c_new

    z = jnp.zeros((B, H), jnp.float32)
    h1, c1, h2, c2 = z, z, z, z
    rec1 = jnp.zeros((B, G), jnp.float32)   # dot(h1, whh0) carried from prev step
    rec2 = jnp.zeros((B, G), jnp.float32)   # dot(h2, whh1) carried from prev step
    outs = []
    for t in range(T):
        # Layer-1 input projection: independent of the recurrence -> off the
        # critical path (overlaps with previous steps' serial chain).
        # TODO(synk): nn.LSTM inter-layer dropout (p=0.1) is train-only; eval
        # (identity) semantics are implemented here.
        g1 = _mm(xs[t], wih0_ref) + b0_ref[...] + rec1
        h1, c1 = cell(g1, c1)
        m = _mm(h1, cat_ref)                 # (B, 8H): one push for both terms
        rec1 = m[:, :G]
        g2 = m[:, G:] + b1_ref[...] + rec2
        h2, c2 = cell(g2, c2)
        if t + 1 < T:
            rec2 = _mm(h2, whh1_ref)         # off the h1 critical chain
        if collect:
            outs.append(h2)
    return outs, h1, c1, h2, c2


# ----------------------------------------------------------------------------
# The single fused encoder kernel.
# ----------------------------------------------------------------------------
def _encoder_kernel(x_ref,
                    s1_wih0, s1_b0, s1_cat, s1_whh1, s1_b1,
                    fca_w, fca_b,
                    s2_wih0, s2_b0, s2_cat, s2_whh1, s2_b1,
                    fcb_w, fcb_b,
                    s3_wih0, s3_b0, s3_cat, s3_whh1, s3_b1,
                    out_ref, hn_ref, cn_ref):
    fin = s1_wih0.shape[0]
    T = x_ref.shape[1] // fin

    # Stage 1: three branch LSTMs (r/p/t) fused block-diagonally.  x arrives
    # batch-first as (B, T*F); per-step inputs are static lane slices, so the
    # wrapper needs no transpose and no VMEM scratch round trip is required.
    xs = [x_ref[:, t * fin:(t + 1) * fin] for t in range(T)]
    _, s1_h1, _, s1_h2, _ = _lstm2_stack(xs, s1_wih0, s1_b0, s1_cat,
                                         s1_whh1, s1_b1)

    # Fused stage1_fc1/fc2 + tanh, applied to both stacked hidden layers.
    # TODO(synk): nn.Dropout(p=0.2) is train-only; eval identity here.
    u = [jnp.tanh(_mm(h, fca_w) + fca_b[...]) for h in (s1_h1, s1_h2)]

    # Stage 2: the two stage-2 LSTMs fused block-diagonally (length-2 sequence).
    _, s2_h1, _, s2_h2, _ = _lstm2_stack(u, s2_wih0, s2_b0, s2_cat,
                                         s2_whh1, s2_b1)

    # stage2_fc1 + tanh.
    v = [jnp.tanh(_mm(h, fcb_w) + fcb_b[...]) for h in (s2_h1, s2_h2)]

    # Stage 3: final 2-layer LSTM; keep the full (length-2) output sequence.
    outs, s3_h1, s3_c1, s3_h2, s3_c2 = _lstm2_stack(
        v, s3_wih0, s3_b0, s3_cat, s3_whh1, s3_b1, collect=True)

    # Single lane-/sublane-dense stores (no per-step masked writebacks).
    out_ref[...] = jnp.concatenate(outs, axis=1)           # (B, L*H3): [t0 | t1]
    hn_ref[...] = jnp.concatenate([s3_h1, s3_h2], axis=0)  # (2B, H3): [l1 ; l2]
    cn_ref[...] = jnp.concatenate([s3_c1, s3_c2], axis=0)


# ----------------------------------------------------------------------------
# One-time (outside jit) weight fusion: block-diagonal branch fusion, fused
# stage-1 FC pair, [whh0 | wih1] concatenation, bf16 pre-cast of matmul weights.
# ----------------------------------------------------------------------------
def _fuse_gate_blocks(mats, Hs):
    blocks = []
    for g in range(4):
        blocks.append(jax.scipy.linalg.block_diag(
            *[m[:, g * H:(g + 1) * H] for m, H in zip(mats, Hs)]))
    return jnp.concatenate(blocks, axis=1)


def _fuse_gate_bias(bs, Hs):
    parts = []
    for g in range(4):
        parts.append(jnp.concatenate(
            [b[:, g * H:(g + 1) * H] for b, H in zip(bs, Hs)], axis=1))
    return jnp.concatenate(parts, axis=1)


def fuse_lstm_params(branch_params):
    """Fuse independent 2-layer LSTMs into one block-diagonal 2-layer LSTM."""
    Hs = [p[1].shape[0] for p in branch_params]
    wih0 = _fuse_gate_blocks([p[0] for p in branch_params], Hs)
    whh0 = _fuse_gate_blocks([p[1] for p in branch_params], Hs)
    b0 = _fuse_gate_bias([p[2] for p in branch_params], Hs)
    wih1 = _fuse_gate_blocks([p[3] for p in branch_params], Hs)
    whh1 = _fuse_gate_blocks([p[4] for p in branch_params], Hs)
    b1 = _fuse_gate_bias([p[5] for p in branch_params], Hs)
    return wih0, whh0, b0, wih1, whh1, b1


def fuse_stage1_fcs(fc1, fc2, H_r, H_p, H_t):
    """One linear mapping [h_r | h_p | h_t] -> [fc1_out | fc2_out].
    fc1 acts on cat(h_p, h_r); fc2 acts on cat(h_p, h_t)."""
    w1, b1 = fc1                                      # (H_p+H_r, F1), (1, F1)
    w2, b2 = fc2                                      # (H_p+H_t, F2), (1, F2)
    F1, F2 = w1.shape[1], w2.shape[1]
    zero = lambda r, c: jnp.zeros((r, c), jnp.float32)
    rows_hr = jnp.concatenate([w1[H_p:, :], zero(H_r, F2)], axis=1)
    rows_hp = jnp.concatenate([w1[:H_p, :], w2[:H_p, :]], axis=1)
    rows_ht = jnp.concatenate([zero(H_t, F1), w2[H_p:, :]], axis=1)
    w = jnp.concatenate([rows_hr, rows_hp, rows_ht], axis=0)
    b = jnp.concatenate([b1, b2], axis=1)
    return w, b


def prepare_encoder_params(params, weight_dtype=jnp.bfloat16):
    """Fold nn.LSTM / nn.Linear weights into the single-kernel fused layout.
    Per 2-layer stack we emit (wih0, b0, [whh0|wih1], whh1, b1); matmul weights
    are pre-cast to bf16 (single MXU pass), biases stay f32.  Called once."""
    def pack(p):
        wih0, whh0, b0, wih1, whh1, b1 = p
        cat = jnp.concatenate([whh0, wih1], axis=1)       # (H, 8H)
        return (wih0.astype(weight_dtype), b0,
                cat.astype(weight_dtype), whh1.astype(weight_dtype), b1)

    H_r = params['lstm_r'][1].shape[0]
    H_p = params['lstm_p'][1].shape[0]
    H_t = params['lstm_t'][1].shape[0]
    fca_w, fca_b = fuse_stage1_fcs(params['stage1_fc1'], params['stage1_fc2'],
                                   H_r, H_p, H_t)
    fcb_w, fcb_b = params['stage2_fc1']
    return {
        's1': pack(fuse_lstm_params([params['lstm_r'], params['lstm_p'],
                                     params['lstm_t']])),
        'fca': (fca_w.astype(weight_dtype), fca_b),
        's2': pack(fuse_lstm_params([params['stage2_lstm1'],
                                     params['stage2_lstm2']])),
        'fcb': (fcb_w.astype(weight_dtype), fcb_b),
        's3': pack(params['stage3_lstm']),
    }


# ----------------------------------------------------------------------------
# Encoder forward (mirrors lstm_encoder.forward, eval mode) — ONE pallas_call.
# ----------------------------------------------------------------------------
def encoder_forward(fused, x):
    """x: (B, T, F) batch-first with features [rot(3) | pose(F-7) | trans(4)].
    Returns (stage3_out (B, 2, H3), (h_n, c_n) each (2, B, H3))."""
    B, T, F = x.shape
    H3 = fused['s3'][3].shape[0]
    L = 2                                        # num_layers of every nn.LSTM
    x2 = x.reshape(B, T * F)                     # free row-major reshape
    args = (x2, *fused['s1'], *fused['fca'], *fused['s2'], *fused['fcb'],
            *fused['s3'])
    out2, hn, cn = pl.pallas_call(
        _encoder_kernel,
        out_shape=(jax.ShapeDtypeStruct((B, L * H3), jnp.float32),
                   jax.ShapeDtypeStruct((L * B, H3), jnp.float32),
                   jax.ShapeDtypeStruct((L * B, H3), jnp.float32)),
    )(*args)
    # Free row-major reshapes only (no transposes left in the wrapper).
    return (out2.reshape(B, L, H3),
            (hn.reshape(L, B, H3), cn.reshape(L, B, H3)))


# ----------------------------------------------------------------------------
# Pure-JAX reference (unfused, per-module, lax.scan) for correctness checking.
# bf16_matmul=True matches the kernel's single-pass bf16 MXU math exactly.
# ----------------------------------------------------------------------------
def _ref_dot(a, b, bf16_matmul):
    if bf16_matmul:
        return jnp.dot(a.astype(jnp.bfloat16), b.astype(jnp.bfloat16),
                       preferred_element_type=jnp.float32)
    return jnp.dot(a, b, precision=lax.Precision.HIGHEST,
                   preferred_element_type=jnp.float32)


def lstm2_ref(x_btd, params, bf16_matmul=False):
    wih0, whh0, b0, wih1, whh1, b1 = params
    B = x_btd.shape[0]
    H = whh0.shape[0]

    def cell(x, h, c, wih, whh, b):
        gates = (_ref_dot(x, wih, bf16_matmul)
                 + _ref_dot(h, whh, bf16_matmul) + b)
        i = jax.nn.sigmoid(gates[:, :H])
        f = jax.nn.sigmoid(gates[:, H:2 * H])
        g = jnp.tanh(gates[:, 2 * H:3 * H])
        o = jax.nn.sigmoid(gates[:, 3 * H:])
        c = f * c + i * g
        h = o * jnp.tanh(c)
        return h, c

    def step(carry, x_t):
        h1, c1, h2, c2 = carry
        h1, c1 = cell(x_t, h1, c1, wih0, whh0, b0)
        h2, c2 = cell(h1, h2, c2, wih1, whh1, b1)
        return (h1, c1, h2, c2), h2

    z = jnp.zeros((B, H), jnp.float32)
    (h1, c1, h2, c2), outs = lax.scan(step, (z, z, z, z),
                                      jnp.transpose(x_btd, (1, 0, 2)))
    return (jnp.transpose(outs, (1, 0, 2)),
            (jnp.stack([h1, h2]), jnp.stack([c1, c2])))


def linear_tanh_ref(x, w_t, b, bf16_matmul=False):
    return jnp.tanh(_ref_dot(x, w_t, bf16_matmul) + b)


def encoder_forward_ref(params, x, bf16_matmul=False):
    r_in = x[:, :, :3]
    t_in = x[:, :, -4:]
    p_in = x[:, :, 3:-4]
    _, (hr, _) = lstm2_ref(r_in, params['lstm_r'], bf16_matmul)
    _, (hp, _) = lstm2_ref(p_in, params['lstm_p'], bf16_matmul)
    _, (ht, _) = lstm2_ref(t_in, params['lstm_t'], bf16_matmul)
    hr = jnp.transpose(hr, (1, 0, 2))
    hp = jnp.transpose(hp, (1, 0, 2))
    ht = jnp.transpose(ht, (1, 0, 2))

    fc1_out = linear_tanh_ref(jnp.concatenate([hp, hr], axis=2),
                              *params['stage1_fc1'], bf16_matmul=bf16_matmul)
    fc2_out = linear_tanh_ref(jnp.concatenate([hp, ht], axis=2),
                              *params['stage1_fc2'], bf16_matmul=bf16_matmul)

    _, (h21, _) = lstm2_ref(fc1_out, params['stage2_lstm1'], bf16_matmul)
    _, (h22, _) = lstm2_ref(fc2_out, params['stage2_lstm2'], bf16_matmul)
    h21 = jnp.transpose(h21, (1, 0, 2))
    h22 = jnp.transpose(h22, (1, 0, 2))

    s2 = linear_tanh_ref(jnp.concatenate([h21, h22], axis=2),
                         *params['stage2_fc1'], bf16_matmul=bf16_matmul)
    return lstm2_ref(s2, params['stage3_lstm'], bf16_matmul)


# ----------------------------------------------------------------------------
# Deterministic parameter init (PyTorch-style uniform(-1/sqrt(H), 1/sqrt(H))).
# Weights pre-transposed to (in, 4H)/(in, out); LSTM biases merged (b_ih+b_hh).
# ----------------------------------------------------------------------------
def init_lstm_params(key, D, H):
    bound = 1.0 / math.sqrt(H)
    ks = jax.random.split(key, 8)

    def u(k, shape):
        return jax.random.uniform(k, shape, jnp.float32, -bound, bound)

    wih0 = u(ks[0], (D, 4 * H))
    whh0 = u(ks[1], (H, 4 * H))
    b0 = u(ks[2], (1, 4 * H)) + u(ks[3], (1, 4 * H))
    wih1 = u(ks[4], (H, 4 * H))
    whh1 = u(ks[5], (H, 4 * H))
    b1 = u(ks[6], (1, 4 * H)) + u(ks[7], (1, 4 * H))
    return (wih0, whh0, b0, wih1, whh1, b1)


def init_linear_params(key, fin, fout):
    bound = 1.0 / math.sqrt(fin)
    kw, kb = jax.random.split(key)
    w_t = jax.random.uniform(kw, (fin, fout), jnp.float32, -bound, bound)
    b = jax.random.uniform(kb, (1, fout), jnp.float32, -bound, bound)
    return (w_t, b)


if __name__ == "__main__":
    # input features = 3 (rot) + 8 (pose) + 4 (trans) = 15
    B, T = 2, 8
    P_FEAT = 8
    F = 3 + P_FEAT + 4
    H_R, H_P, H_T = 16, 32, 16
    H2, H3 = 32, 32

    root = jax.random.PRNGKey(0)
    keys = jax.random.split(root, 10)
    params = {
        'lstm_r':       init_lstm_params(keys[0], 3, H_R),
        'lstm_p':       init_lstm_params(keys[1], P_FEAT, H_P),
        'lstm_t':       init_lstm_params(keys[2], 4, H_T),
        'stage1_fc1':   init_linear_params(keys[3], H_P + H_R, H2),
        'stage1_fc2':   init_linear_params(keys[4], H_P + H_T, H2),
        'stage2_lstm1': init_lstm_params(keys[5], H2, H2),
        'stage2_lstm2': init_lstm_params(keys[6], H2, H2),
        'stage2_fc1':   init_linear_params(keys[7], 2 * H2, H3),
        'stage3_lstm':  init_lstm_params(keys[8], H3, H3),
    }
    x = jax.random.normal(keys[9], (B, T, F), jnp.float32)

    fused = prepare_encoder_params(params)        # one-time weight fusion
    out_k, (hn_k, cn_k) = jax.jit(encoder_forward)(fused, x)
    jax.block_until_ready((out_k, hn_k, cn_k))

    # Matched-precision reference (same bf16-operand matmuls, unfused modules):
    # validates the fusion / scheduling / activation rewrites tightly.
    out_m, (hn_m, cn_m) = jax.jit(
        lambda p, xx: encoder_forward_ref(p, xx, bf16_matmul=True))(params, x)
    # Full-f32 reference: confirms the bf16 fast path stays close to f32 math.
    out_f, (hn_f, cn_f) = jax.jit(
        lambda p, xx: encoder_forward_ref(p, xx, bf16_matmul=False))(params, x)
    jax.block_until_ready((out_m, hn_m, cn_m, out_f, hn_f, cn_f))

    # The encoder's output sequence length equals num_layers (=2), NOT T:
    # stage-1 collapses the time axis into the stacked-layer hidden states.
    assert out_k.shape == (B, 2, H3), out_k.shape
    assert hn_k.shape == (2, B, H3) and cn_k.shape == (2, B, H3)

    for got, want in ((out_k, out_m), (hn_k, hn_m), (cn_k, cn_m)):
        np.testing.assert_allclose(np.asarray(got), np.asarray(want),
                                   rtol=2e-3, atol=2e-3)
    for got, want in ((out_k, out_f), (hn_k, hn_f), (cn_k, cn_f)):
        np.testing.assert_allclose(np.asarray(got), np.asarray(want),
                                   rtol=5e-2, atol=5e-2)

    print("KERNEL_OK")
</pallas_src>

<mosaic_0001>
module attributes {stable_mosaic.version = 11 : i64} {
  func.func @_encoder_kernel(%arg0: memref<2x120xf32, #tpu.memory_space<vmem>>, %arg1: memref<15x256xbf16, #tpu.memory_space<vmem>>, %arg2: memref<1x256xf32, #tpu.memory_space<vmem>>, %arg3: memref<64x512xbf16, #tpu.memory_space<vmem>>, %arg4: memref<64x256xbf16, #tpu.memory_space<vmem>>, %arg5: memref<1x256xf32, #tpu.memory_space<vmem>>, %arg6: memref<64x64xbf16, #tpu.memory_space<vmem>>, %arg7: memref<1x64xf32, #tpu.memory_space<vmem>>, %arg8: memref<64x256xbf16, #tpu.memory_space<vmem>>, %arg9: memref<1x256xf32, #tpu.memory_space<vmem>>, %arg10: memref<64x512xbf16, #tpu.memory_space<vmem>>, %arg11: memref<64x256xbf16, #tpu.memory_space<vmem>>, %arg12: memref<1x256xf32, #tpu.memory_space<vmem>>, %arg13: memref<64x32xbf16, #tpu.memory_space<vmem>>, %arg14: memref<1x32xf32, #tpu.memory_space<vmem>>, %arg15: memref<32x128xbf16, #tpu.memory_space<vmem>>, %arg16: memref<1x128xf32, #tpu.memory_space<vmem>>, %arg17: memref<32x256xbf16, #tpu.memory_space<vmem>>, %arg18: memref<32x128xbf16, #tpu.memory_space<vmem>>, %arg19: memref<1x128xf32, #tpu.memory_space<vmem>>, %arg20: memref<2x64xf32, #tpu.memory_space<vmem>>, %arg21: memref<4x32xf32, #tpu.memory_space<vmem>>, %arg22: memref<4x32xf32, #tpu.memory_space<vmem>>) attributes {dimension_semantics = [], scalar_prefetch = 0 : i64, scratch_operands = 0 : i64, tpu.core_type = #tpu.core_type<tc>} {
    %c0 = arith.constant 0 : index
    %c0_0 = arith.constant 0 : index
    %0 = vector.load %arg0[%c0, %c0_0] : memref<2x120xf32, #tpu.memory_space<vmem>>, vector<2x15xf32>
    %c0_1 = arith.constant 0 : index
    %c15 = arith.constant 15 : index
    %1 = vector.load %arg0[%c0_1, %c15] : memref<2x120xf32, #tpu.memory_space<vmem>>, vector<2x15xf32>
    %c0_2 = arith.constant 0 : index
    %c30 = arith.constant 30 : index
    %2 = vector.load %arg0[%c0_2, %c30] : memref<2x120xf32, #tpu.memory_space<vmem>>, vector<2x15xf32>
    %c0_3 = arith.constant 0 : index
    %c45 = arith.constant 45 : index
    %3 = vector.load %arg0[%c0_3, %c45] : memref<2x120xf32, #tpu.memory_space<vmem>>, vector<2x15xf32>
    %c0_4 = arith.constant 0 : index
    %c60 = arith.constant 60 : index
    %4 = vector.load %arg0[%c0_4, %c60] : memref<2x120xf32, #tpu.memory_space<vmem>>, vector<2x15xf32>
    %c0_5 = arith.constant 0 : index
    %c75 = arith.constant 75 : index
    %5 = vector.load %arg0[%c0_5, %c75] : memref<2x120xf32, #tpu.memory_space<vmem>>, vector<2x15xf32>
    %c0_6 = arith.constant 0 : index
    %c90 = arith.constant 90 : index
    %6 = vector.load %arg0[%c0_6, %c90] : memref<2x120xf32, #tpu.memory_space<vmem>>, vector<2x15xf32>
    %c0_7 = arith.constant 0 : index
    %c105 = arith.constant 105 : index
    %7 = vector.load %arg0[%c0_7, %c105] : memref<2x120xf32, #tpu.memory_space<vmem>>, vector<2x15xf32>
    %8 = tpu.iota {dimensions = array<i32: 1>} : vector<2x256xi32>
    %c128_i32 = arith.constant 128 : i32
    %9 = vector.broadcast %c128_i32 : i32 to vector<2x256xi32>
    %10 = arith.cmpi sge, %8, %9 : vector<2x256xi32>
    %c192_i32 = arith.constant 192 : i32
    %11 = vector.broadcast %c192_i32 : i32 to vector<2x256xi32>
    %12 = arith.cmpi slt, %8, %11 : vector<2x256xi32>
    %13 = arith.andi %10, %12 : vector<2x256xi1>
    %cst = arith.constant 2.000000e+00 : f32
    %cst_8 = arith.constant 1.000000e+00 : f32
    %14 = vector.broadcast %cst : f32 to vector<2x256xf32>
    %15 = vector.broadcast %cst_8 : f32 to vector<2x256xf32>
    %16 = arith.select %13, %14, %15 : vector<2x256xi1>, vector<2x256xf32>
    %cst_9 = arith.constant -1.000000e+00 : f32
    %cst_10 = arith.constant 0.000000e+00 : f32
    %17 = vector.broadcast %cst_9 : f32 to vector<2x256xf32>
    %18 = vector.broadcast %cst_10 : f32 to vector<2x256xf32>
    %19 = arith.select %13, %17, %18 : vector<2x256xi1>, vector<2x256xf32>
    %cst_11 = arith.constant 0.000000e+00 : f32
    %20 = vector.broadcast %cst_11 : f32 to vector<2x64xf32>
    %cst_12 = arith.constant 0.000000e+00 : f32
    %21 = vector.broadcast %cst_12 : f32 to vector<2x256xf32>
    %cst_13 = arith.constant 0.000000e+00 : f32
    %22 = vector.broadcast %cst_13 : f32 to vector<2x256xf32>
    %23 = arith.truncf %0 : vector<2x15xf32> to vector<2x15xbf16>
    %c0_14 = arith.constant 0 : index
    %c0_15 = arith.constant 0 : index
    %24 = vector.load %arg1[%c0_14, %c0_15] : memref<15x256xbf16, #tpu.memory_space<vmem>>, vector<15x256xbf16>
    %cst_16 = arith.constant dense<0.000000e+00> : vector<2x256xf32>
    %25 = tpu.matmul %23, %24, %cst_16 {dimension_numbers = #tpu.dot_dimension_numbers<[1], [0], [0], [1], [0, 0, 1, 1], [], []>} : vector<2x15xbf16>, vector<15x256xbf16>, vector<2x256xf32> -> vector<2x256xf32>
    %c0_17 = arith.constant 0 : index
    %c0_18 = arith.constant 0 : index
    %26 = vector.load %arg2[%c0_17, %c0_18] : memref<1x256xf32, #tpu.memory_space<vmem>>, vector<1x256xf32>
    %27 = vector.broadcast %26 : vector<1x256xf32> to vector<2x256xf32>
    %28 = arith.addf %25, %27 : vector<2x256xf32>
    %29 = arith.addf %28, %21 : vector<2x256xf32>
    %30 = arith.mulf %29, %16 : vector<2x256xf32>
    %31 = arith.negf %30 : vector<2x256xf32>
    %32 = math.exp %31 : vector<2x256xf32>
    %cst_19 = arith.constant 1.000000e+00 : f32
    %33 = vector.broadcast %cst_19 : f32 to vector<2x256xf32>
    %34 = arith.addf %33, %32 : vector<2x256xf32>
    %35 = arith.divf %33, %34 : vector<2x256xf32>
    %36 = arith.mulf %35, %16 : vector<2x256xf32>
    %37 = arith.addf %36, %19 : vector<2x256xf32>
    %38 = vector.extract_strided_slice %37 {offsets = [0, 0], sizes = [2, 64], strides = [1, 1]} : vector<2x256xf32> to vector<2x64xf32>
    %39 = vector.extract_strided_slice %37 {offsets = [0, 64], sizes = [2, 64], strides = [1, 1]} : vector<2x256xf32> to vector<2x64xf32>
    %40 = vector.extract_strided_slice %37 {offsets = [0, 128], sizes = [2, 64], strides = [1, 1]} : vector<2x256xf32> to vector<2x64xf32>
    %41 = vector.extract_strided_slice %37 {offsets = [0, 192], sizes = [2, 64], strides = [1, 1]} : vector<2x256xf32> to vector<2x64xf32>
    %42 = arith.mulf %39, %20 : vector<2x64xf32>
    %43 = arith.mulf %38, %40 : vector<2x64xf32>
    %44 = arith.addf %42, %43 : vector<2x64xf32>
    %45 = math.tanh %44 : vector<2x64xf32>
    %46 = arith.mulf %41, %45 : vector<2x64xf32>
    %47 = arith.truncf %46 : vector<2x64xf32> to vector<2x64xbf16>
    %c0_20 = arith.constant 0 : index
    %c0_21 = arith.constant 0 : index
    %48 = vector.load %arg3[%c0_20, %c0_21] : memref<64x512xbf16, #tpu.memory_space<vmem>>, vector<64x512xbf16>
    %cst_22 = arith.constant dense<0.000000e+00> : vector<2x512xf32>
    %49 = tpu.matmul %47, %48, %cst_22 {dimension_numbers = #tpu.dot_dimension_numbers<[1], [0], [0], [1], [0, 0, 1, 1], [], []>} : vector<2x64xbf16>, vector<64x512xbf16>, vector<2x512xf32> -> vector<2x512xf32>
    %50 = vector.extract_strided_slice %49 {offsets = [0, 0], sizes = [2, 256], strides = [1, 1]} : vector<2x512xf32> to vector<2x256xf32>
    %51 = vector.extract_strided_slice %49 {offsets = [0, 256], sizes = [2, 256], strides = [1, 1]} : vector<2x512xf32> to vector<2x256xf32>
    %c0_23 = arith.constant 0 : index
    %c0_24 = arith.constant 0 : index
    %52 = vector.load %arg5[%c0_23, %c0_24] : memref<1x256xf32, #tpu.memory_space<vmem>>, vector<1x256xf32>
    %53 = vector.broadcast %52 : vector<1x256xf32> to vector<2x256xf32>
    %54 = arith.addf %51, %53 : vector<2x256xf32>
    %55 = arith.addf %54, %22 : vector<2x256xf32>
    %56 = arith.mulf %55, %16 : vector<2x256xf32>
    %57 = arith.negf %56 : vector<2x256xf32>
    %58 = math.exp %57 : vector<2x256xf32>
    %cst_25 = arith.constant 1.000000e+00 : f32
    %59 = vector.broadcast %cst_25 : f32 to vector<2x256xf32>
    %60 = arith.addf %59, %58 : vector<2x256xf32>
    %61 = arith.divf %59, %60 : vector<2x256xf32>
    %62 = arith.mulf %61, %16 : vector<2x256xf32>
    %63 = arith.addf %62, %19 : vector<2x256xf32>
    %64 = vector.extract_strided_slice %63 {offsets = [0, 0], sizes = [2, 64], strides = [1, 1]} : vector<2x256xf32> to vector<2x64xf32>
    %65 = vector.extract_strided_slice %63 {offsets = [0, 64], sizes = [2, 64], strides = [1, 1]} : vector<2x256xf32> to vector<2x64xf32>
    %66 = vector.extract_strided_slice %63 {offsets = [0, 128], sizes = [2, 64], strides = [1, 1]} : vector<2x256xf32> to vector<2x64xf32>
    %67 = vector.extract_strided_slice %63 {offsets = [0, 192], sizes = [2, 64], strides = [1, 1]} : vector<2x256xf32> to vector<2x64xf32>
    %68 = arith.mulf %65, %20 : vector<2x64xf32>
    %69 = arith.mulf %64, %66 : vector<2x64xf32>
    %70 = arith.addf %68, %69 : vector<2x64xf32>
    %71 = math.tanh %70 : vector<2x64xf32>
    %72 = arith.mulf %67, %71 : vector<2x64xf32>
    %73 = arith.truncf %72 : vector<2x64xf32> to vector<2x64xbf16>
    %c0_26 = arith.constant 0 : index
    %c0_27 = arith.constant 0 : index
    %74 = vector.load %arg4[%c0_26, %c0_27] : memref<64x256xbf16, #tpu.memory_space<vmem>>, vector<64x256xbf16>
    %cst_28 = arith.constant dense<0.000000e+00> : vector<2x256xf32>
    %75 = tpu.matmul %73, %74, %cst_28 {dimension_numbers = #tpu.dot_dimension_numbers<[1], [0], [0], [1], [0, 0, 1, 1], [], []>} : vector<2x64xbf16>, vector<64x256xbf16>, vector<2x256xf32> -> vector<2x256xf32>
    %76 = arith.truncf %1 : vector<2x15xf32> to vector<2x15xbf16>
    %c0_29 = arith.constant 0 : index
    %c0_30 = arith.constant 0 : index
    %77 = vector.load %arg1[%c0_29, %c0_30] : memref<15x256xbf16, #tpu.memory_space<vmem>>, vector<15x256xbf16>
    %cst_31 = arith.constant dense<0.000000e+00> : vector<2x256xf32>
    %78 = tpu.matmul %76, %77, %cst_31 {dimension_numbers = #tpu.dot_dimension_numbers<[1], [0], [0], [1], [0, 0, 1, 1], [], []>} : vector<2x15xbf16>, vector<15x256xbf16>, vector<2x256xf32> -> vector<2x256xf32>
    %c0_32 = arith.constant 0 : index
    %c0_33 = arith.constant 0 : index
    %79 = vector.load %arg2[%c0_32, %c0_33] : memref<1x256xf32, #tpu.memory_space<vmem>>, vector<1x256xf32>
    %80 = vector.broadcast %79 : vector<1x256xf32> to vector<2x256xf32>
    %81 = arith.addf %78, %80 : vector<2x256xf32>
    %82 = arith.addf %81, %50 : vector<2x256xf32>
    %83 = arith.mulf %82, %16 : vector<2x256xf32>
    %84 = arith.negf %83 : vector<2x256xf32>
    %85 = math.exp %84 : vector<2x256xf32>
    %cst_34 = arith.constant 1.000000e+00 : f32
    %86 = vector.broadcast %cst_34 : f32 to vector<2x256xf32>
    %87 = arith.addf %86, %85 : vector<2x256xf32>
    %88 = arith.divf %86, %87 : vector<2x256xf32>
    %89 = arith.mulf %88, %16 : vector<2x256xf32>
    %90 = arith.addf %89, %19 : vector<2x256xf32>
    %91 = vector.extract_strided_slice %90 {offsets = [0, 0], sizes = [2, 64], strides = [1, 1]} : vector<2x256xf32> to vector<2x64xf32>
    %92 = vector.extract_strided_slice %90 {offsets = [0, 64], sizes = [2, 64], strides = [1, 1]} : vector<2x256xf32> to vector<2x64xf32>
    %93 = vector.extract_strided_slice %90 {offsets = [0, 128], sizes = [2, 64], strides = [1, 1]} : vector<2x256xf32> to vector<2x64xf32>
    %94 = vector.extract_strided_slice %90 {offsets = [0, 192], sizes = [2, 64], strides = [1, 1]} : vector<2x256xf32> to vector<2x64xf32>
    %95 = arith.mulf %92, %44 : vector<2x64xf32>
    %96 = arith.mulf %91, %93 : vector<2x64xf32>
    %97 = arith.addf %95, %96 : vector<2x64xf32>
    %98 = math.tanh %97 : vector<2x64xf32>
    %99 = arith.mulf %94, %98 : vector<2x64xf32>
    %100 = arith.truncf %99 : vector<2x64xf32> to vector<2x64xbf16>
    %c0_35 = arith.constant 0 : index
    %c0_36 = arith.constant 0 : index
    %101 = vector.load %arg3[%c0_35, %c0_36] : memref<64x512xbf16, #tpu.memory_space<vmem>>, vector<64x512xbf16>
    %cst_37 = arith.constant dense<0.000000e+00> : vector<2x512xf32>
    %102 = tpu.matmul %100, %101, %cst_37 {dimension_numbers = #tpu.dot_dimension_numbers<[1], [0], [0], [1], [0, 0, 1, 1], [], []>} : vector<2x64xbf16>, vector<64x512xbf16>, vector<2x512xf32> -> vector<2x512xf32>
    %103 = vector.extract_strided_slice %102 {offsets = [0, 0], sizes = [2, 256], strides = [1, 1]} : vector<2x512xf32> to vector<2x256xf32>
    %104 = vector.extract_strided_slice %102 {offsets = [0, 256], sizes = [2, 256], strides = [1, 1]} : vector<2x512xf32> to vector<2x256xf32>
    %c0_38 = arith.constant 0 : index
    %c0_39 = arith.constant 0 : index
    %105 = vector.load %arg5[%c0_38, %c0_39] : memref<1x256xf32, #tpu.memory_space<vmem>>, vector<1x256xf32>
    %106 = vector.broadcast %105 : vector<1x256xf32> to vector<2x256xf32>
    %107 = arith.addf %104, %106 : vector<2x256xf32>
    %108 = arith.addf %107, %75 : vector<2x256xf32>
    %109 = arith.mulf %108, %16 : vector<2x256xf32>
    %110 = arith.negf %109 : vector<2x256xf32>
    %111 = math.exp %110 : vector<2x256xf32>
    %cst_40 = arith.constant 1.000000e+00 : f32
    %112 = vector.broadcast %cst_40 : f32 to vector<2x256xf32>
    %113 = arith.addf %112, %111 : vector<2x256xf32>
    %114 = arith.divf %112, %113 : vector<2x256xf32>
    %115 = arith.mulf %114, %16 : vector<2x256xf32>
    %116 = arith.addf %115, %19 : vector<2x256xf32>
    %117 = vector.extract_strided_slice %116 {offsets = [0, 0], sizes = [2, 64], strides = [1, 1]} : vector<2x256xf32> to vector<2x64xf32>
    %118 = vector.extract_strided_slice %116 {offsets = [0, 64], sizes = [2, 64], strides = [1, 1]} : vector<2x256xf32> to vector<2x64xf32>
    %119 = vector.extract_strided_slice %116 {offsets = [0, 128], sizes = [2, 64], strides = [1, 1]} : vector<2x256xf32> to vector<2x64xf32>
    %120 = vector.extract_strided_slice %116 {offsets = [0, 192], sizes = [2, 64], strides = [1, 1]} : vector<2x256xf32> to vector<2x64xf32>
    %121 = arith.mulf %118, %70 : vector<2x64xf32>
    %122 = arith.mulf %117, %119 : vector<2x64xf32>
    %123 = arith.addf %121, %122 : vector<2x64xf32>
    %124 = math.tanh %123 : vector<2x64xf32>
    %125 = arith.mulf %120, %124 : vector<2x64xf32>
    %126 = arith.truncf %125 : vector<2x64xf32> to vector<2x64xbf16>
    %c0_41 = arith.constant 0 : index
    %c0_42 = arith.constant 0 : index
    %127 = vector.load %arg4[%c0_41, %c0_42] : memref<64x256xbf16, #tpu.memory_space<vmem>>, vector<64x256xbf16>
    %cst_43 = arith.constant dense<0.000000e+00> : vector<2x256xf32>
    %128 = tpu.matmul %126, %127, %cst_43 {dimension_numbers = #tpu.dot_dimension_numbers<[1], [0], [0], [1], [0, 0, 1, 1], [], []>} : vector<2x64xbf16>, vector<64x256xbf16>, vector<2x256xf32> -> vector<2x256xf32>
    %129 = arith.truncf %2 : vector<2x15xf32> to vector<2x15xbf16>
    %c0_44 = arith.constant 0 : index
    %c0_45 = arith.constant 0 : index
    %130 = vector.load %arg1[%c0_44, %c0_45] : memref<15x256xbf16, #tpu.memory_space<vmem>>, vector<15x256xbf16>
    %cst_46 = arith.constant dense<0.000000e+00> : vector<2x256xf32>
    %131 = tpu.matmul %129, %130, %cst_46 {dimension_numbers = #tpu.dot_dimension_numbers<[1], [0], [0], [1], [0, 0, 1, 1], [], []>} : vector<2x15xbf16>, vector<15x256xbf16>, vector<2x256xf32> -> vector<2x256xf32>
    %c0_47 = arith.constant 0 : index
    %c0_48 = arith.constant 0 : index
    %132 = vector.load %arg2[%c0_47, %c0_48] : memref<1x256xf32, #tpu.memory_space<vmem>>, vector<1x256xf32>
    %133 = vector.broadcast %132 : vector<1x256xf32> to vector<2x256xf32>
    %134 = arith.addf %131, %133 : vector<2x256xf32>
    %135 = arith.addf %134, %103 : vector<2x256xf32>
    %136 = arith.mulf %135, %16 : vector<2x256xf32>
    %137 = arith.negf %136 : vector<2x256xf32>
    %138 = math.exp %137 : vector<2x256xf32>
    %cst_49 = arith.constant 1.000000e+00 : f32
    %139 = vector.broadcast %cst_49 : f32 to vector<2x256xf32>
    %140 = arith.addf %139, %138 : vector<2x256xf32>
    %141 = arith.divf %139, %140 : vector<2x256xf32>
    %142 = arith.mulf %141, %16 : vector<2x256xf32>
    %143 = arith.addf %142, %19 : vector<2x256xf32>
    %144 = vector.extract_strided_slice %143 {offsets = [0, 0], sizes = [2, 64], strides = [1, 1]} : vector<2x256xf32> to vector<2x64xf32>
    %145 = vector.extract_strided_slice %143 {offsets = [0, 64], sizes = [2, 64], strides = [1, 1]} : vector<2x256xf32> to vector<2x64xf32>
    %146 = vector.extract_strided_slice %143 {offsets = [0, 128], sizes = [2, 64], strides = [1, 1]} : vector<2x256xf32> to vector<2x64xf32>
    %147 = vector.extract_strided_slice %143 {offsets = [0, 192], sizes = [2, 64], strides = [1, 1]} : vector<2x256xf32> to vector<2x64xf32>
    %148 = arith.mulf %145, %97 : vector<2x64xf32>
    %149 = arith.mulf %144, %146 : vector<2x64xf32>
    %150 = arith.addf %148, %149 : vector<2x64xf32>
    %151 = math.tanh %150 : vector<2x64xf32>
    %152 = arith.mulf %147, %151 : vector<2x64xf32>
    %153 = arith.truncf %152 : vector<2x64xf32> to vector<2x64xbf16>
    %c0_50 = arith.constant 0 : index
    %c0_51 = arith.constant 0 : index
    %154 = vector.load %arg3[%c0_50, %c0_51] : memref<64x512xbf16, #tpu.memory_space<vmem>>, vector<64x512xbf16>
    %cst_52 = arith.constant dense<0.000000e+00> : vector<2x512xf32>
    %155 = tpu.matmul %153, %154, %cst_52 {dimension_numbers = #tpu.dot_dimension_numbers<[1], [0], [0], [1], [0, 0, 1, 1], [], []>} : vector<2x64xbf16>, vector<64x512xbf16>, vector<2x512xf32> -> vector<2x512xf32>
    %156 = vector.extract_strided_slice %155 {offsets = [0, 0], sizes = [2, 256], strides = [1, 1]} : vector<2x512xf32> to vector<2x256xf32>
    %157 = vector.extract_strided_slice %155 {offsets = [0, 256], sizes = [2, 256], strides = [1, 1]} : vector<2x512xf32> to vector<2x256xf32>
    %c0_53 = arith.constant 0 : index
    %c0_54 = arith.constant 0 : index
    %158 = vector.load %arg5[%c0_53, %c0_54] : memref<1x256xf32, #tpu.memory_space<vmem>>, vector<1x256xf32>
    %159 = vector.broadcast %158 : vector<1x256xf32> to vector<2x256xf32>
    %160 = arith.addf %157, %159 : vector<2x256xf32>
    %161 = arith.addf %160, %128 : vector<2x256xf32>
    %162 = arith.mulf %161, %16 : vector<2x256xf32>
    %163 = arith.negf %162 : vector<2x256xf32>
    %164 = math.exp %163 : vector<2x256xf32>
    %cst_55 = arith.constant 1.000000e+00 : f32
    %165 = vector.broadcast %cst_55 : f32 to vector<2x256xf32>
    %166 = arith.addf %165, %164 : vector<2x256xf32>
    %167 = arith.divf %165, %166 : vector<2x256xf32>
    %168 = arith.mulf %167, %16 : vector<2x256xf32>
    %169 = arith.addf %168, %19 : vector<2x256xf32>
    %170 = vector.extract_strided_slice %169 {offsets = [0, 0], sizes = [2, 64], strides = [1, 1]} : vector<2x256xf32> to vector<2x64xf32>
    %171 = vector.extract_strided_slice %169 {offsets = [0, 64], sizes = [2, 64], strides = [1, 1]} : vector<2x256xf32> to vector<2x64xf32>
    %172 = vector.extract_strided_slice %169 {offsets = [0, 128], sizes = [2, 64], strides = [1, 1]} : vector<2x256xf32> to vector<2x64xf32>
    %173 = vector.extract_strided_slice %169 {offsets = [0, 192], sizes = [2, 64], strides = [1, 1]} : vector<2x256xf32> to vector<2x64xf32>
    %174 = arith.mulf %171, %123 : vector<2x64xf32>
    %175 = arith.mulf %170, %172 : vector<2x64xf32>
    %176 = arith.addf %174, %175 : vector<2x64xf32>
    %177 = math.tanh %176 : vector<2x64xf32>
    %178 = arith.mulf %173, %177 : vector<2x64xf32>
    %179 = arith.truncf %178 : vector<2x64xf32> to vector<2x64xbf16>
    %c0_56 = arith.constant 0 : index
    %c0_57 = arith.constant 0 : index
    %180 = vector.load %arg4[%c0_56, %c0_57] : memref<64x256xbf16, #tpu.memory_space<vmem>>, vector<64x256xbf16>
    %cst_58 = arith.constant dense<0.000000e+00> : vector<2x256xf32>
    %181 = tpu.matmul %179, %180, %cst_58 {dimension_numbers = #tpu.dot_dimension_numbers<[1], [0], [0], [1], [0, 0, 1, 1], [], []>} : vector<2x64xbf16>, vector<64x256xbf16>, vector<2x256xf32> -> vector<2x256xf32>
    %182 = arith.truncf %3 : vector<2x15xf32> to vector<2x15xbf16>
    %c0_59 = arith.constant 0 : index
    %c0_60 = arith.constant 0 : index
    %183 = vector.load %arg1[%c0_59, %c0_60] : memref<15x256xbf16, #tpu.memory_space<vmem>>, vector<15x256xbf16>
    %cst_61 = arith.constant dense<0.000000e+00> : vector<2x256xf32>
    %184 = tpu.matmul %182, %183, %cst_61 {dimension_numbers = #tpu.dot_dimension_numbers<[1], [0], [0], [1], [0, 0, 1, 1], [], []>} : vector<2x15xbf16>, vector<15x256xbf16>, vector<2x256xf32> -> vector<2x256xf32>
    %c0_62 = arith.constant 0 : index
    %c0_63 = arith.constant 0 : index
    %185 = vector.load %arg2[%c0_62, %c0_63] : memref<1x256xf32, #tpu.memory_space<vmem>>, vector<1x256xf32>
    %186 = vector.broadcast %185 : vector<1x256xf32> to vector<2x256xf32>
    %187 = arith.addf %184, %186 : vector<2x256xf32>
    %188 = arith.addf %187, %156 : vector<2x256xf32>
    %189 = arith.mulf %188, %16 : vector<2x256xf32>
    %190 = arith.negf %189 : vector<2x256xf32>
    %191 = math.exp %190 : vector<2x256xf32>
    %cst_64 = arith.constant 1.000000e+00 : f32
    %192 = vector.broadcast %cst_64 : f32 to vector<2x256xf32>
    %193 = arith.addf %192, %191 : vector<2x256xf32>
    %194 = arith.divf %192, %193 : vector<2x256xf32>
    %195 = arith.mulf %194, %16 : vector<2x256xf32>
    %196 = arith.addf %195, %19 : vector<2x256xf32>
    %197 = vector.extract_strided_slice %196 {offsets = [0, 0], sizes = [2, 64], strides = [1, 1]} : vector<2x256xf32> to vector<2x64xf32>
    %198 = vector.extract_strided_slice %196 {offsets = [0, 64], sizes = [2, 64], strides = [1, 1]} : vector<2x256xf32> to vector<2x64xf32>
    %199 = vector.extract_strided_slice %196 {offsets = [0, 128], sizes = [2, 64], strides = [1, 1]} : vector<2x256xf32> to vector<2x64xf32>
    %200 = vector.extract_strided_slice %196 {offsets = [0, 192], sizes = [2, 64], strides = [1, 1]} : vector<2x256xf32> to vector<2x64xf32>
    %201 = arith.mulf %198, %150 : vector<2x64xf32>
    %202 = arith.mulf %197, %199 : vector<2x64xf32>
    %203 = arith.addf %201, %202 : vector<2x64xf32>
    %204 = math.tanh %203 : vector<2x64xf32>
    %205 = arith.mulf %200, %204 : vector<2x64xf32>
    %206 = arith.truncf %205 : vector<2x64xf32> to vector<2x64xbf16>
    %c0_65 = arith.constant 0 : index
    %c0_66 = arith.constant 0 : index
    %207 = vector.load %arg3[%c0_65, %c0_66] : memref<64x512xbf16, #tpu.memory_space<vmem>>, vector<64x512xbf16>
    %cst_67 = arith.constant dense<0.000000e+00> : vector<2x512xf32>
    %208 = tpu.matmul %206, %207, %cst_67 {dimension_numbers = #tpu.dot_dimension_numbers<[1], [0], [0], [1], [0, 0, 1, 1], [], []>} : vector<2x64xbf16>, vector<64x512xbf16>, vector<2x512xf32> -> vector<2x512xf32>
    %209 = vector.extract_strided_slice %208 {offsets = [0, 0], sizes = [2, 256], strides = [1, 1]} : vector<2x512xf32> to vector<2x256xf32>
    %210 = vector.extract_strided_slice %208 {offsets = [0, 256], sizes = [2, 256], strides = [1, 1]} : vector<2x512xf32> to vector<2x256xf32>
    %c0_68 = arith.constant 0 : index
    %c0_69 = arith.constant 0 : index
    %211 = vector.load %arg5[%c0_68, %c0_69] : memref<1x256xf32, #tpu.memory_space<vmem>>, vector<1x256xf32>
    %212 = vector.broadcast %211 : vector<1x256xf32> to vector<2x256xf32>
    %213 = arith.addf %210, %212 : vector<2x256xf32>
    %214 = arith.addf %213, %181 : vector<2x256xf32>
    %215 = arith.mulf %214, %16 : vector<2x256xf32>
    %216 = arith.negf %215 : vector<2x256xf32>
    %217 = math.exp %216 : vector<2x256xf32>
    %cst_70 = arith.constant 1.000000e+00 : f32
    %218 = vector.broadcast %cst_70 : f32 to vector<2x256xf32>
    %219 = arith.addf %218, %217 : vector<2x256xf32>
    %220 = arith.divf %218, %219 : vector<2x256xf32>
    %221 = arith.mulf %220, %16 : vector<2x256xf32>
    %222 = arith.addf %221, %19 : vector<2x256xf32>
    %223 = vector.extract_strided_slice %222 {offsets = [0, 0], sizes = [2, 64], strides = [1, 1]} : vector<2x256xf32> to vector<2x64xf32>
    %224 = vector.extract_strided_slice %222 {offsets = [0, 64], sizes = [2, 64], strides = [1, 1]} : vector<2x256xf32> to vector<2x64xf32>
    %225 = vector.extract_strided_slice %222 {offsets = [0, 128], sizes = [2, 64], strides = [1, 1]} : vector<2x256xf32> to vector<2x64xf32>
    %226 = vector.extract_strided_slice %222 {offsets = [0, 192], sizes = [2, 64], strides = [1, 1]} : vector<2x256xf32> to vector<2x64xf32>
    %227 = arith.mulf %224, %176 : vector<2x64xf32>
    %228 = arith.mulf %223, %225 : vector<2x64xf32>
    %229 = arith.addf %227, %228 : vector<2x64xf32>
    %230 = math.tanh %229 : vector<2x64xf32>
    %231 = arith.mulf %226, %230 : vector<2x64xf32>
    %232 = arith.truncf %231 : vector<2x64xf32> to vector<2x64xbf16>
    %c0_71 = arith.constant 0 : index
    %c0_72 = arith.constant 0 : index
    %233 = vector.load %arg4[%c0_71, %c0_72] : memref<64x256xbf16, #tpu.memory_space<vmem>>, vector<64x256xbf16>
    %cst_73 = arith.constant dense<0.000000e+00> : vector<2x256xf32>
    %234 = tpu.matmul %232, %233, %cst_73 {dimension_numbers = #tpu.dot_dimension_numbers<[1], [0], [0], [1], [0, 0, 1, 1], [], []>} : vector<2x64xbf16>, vector<64x256xbf16>, vector<2x256xf32> -> vector<2x256xf32>
    %235 = arith.truncf %4 : vector<2x15xf32> to vector<2x15xbf16>
    %c0_74 = arith.constant 0 : index
    %c0_75 = arith.constant 0 : index
    %236 = vector.load %arg1[%c0_74, %c0_75] : memref<15x256xbf16, #tpu.memory_space<vmem>>, vector<15x256xbf16>
    %cst_76 = arith.constant dense<0.000000e+00> : vector<2x256xf32>
    %237 = tpu.matmul %235, %236, %cst_76 {dimension_numbers = #tpu.dot_dimension_numbers<[1], [0], [0], [1], [0, 0, 1, 1], [], []>} : vector<2x15xbf16>, vector<15x256xbf16>, vector<2x256xf32> -> vector<2x256xf32>
    %c0_77 = arith.constant 0 : index
    %c0_78 = arith.constant 0 : index
    %238 = vector.load %arg2[%c0_77, %c0_78] : memref<1x256xf32, #tpu.memory_space<vmem>>, vector<1x256xf32>
    %239 = vector.broadcast %238 : vector<1x256xf32> to vector<2x256xf32>
    %240 = arith.addf %237, %239 : vector<2x256xf32>
    %241 = arith.addf %240, %209 : vector<2x256xf32>
    %242 = arith.mulf %241, %16 : vector<2x256xf32>
    %243 = arith.negf %242 : vector<2x256xf32>
    %244 = math.exp %243 : vector<2x256xf32>
    %cst_79 = arith.constant 1.000000e+00 : f32
    %245 = vector.broadcast %cst_79 : f32 to vector<2x256xf32>
    %246 = arith.addf %245, %244 : vector<2x256xf32>
    %247 = arith.divf %245, %246 : vector<2x256xf32>
    %248 = arith.mulf %247, %16 : vector<2x256xf32>
    %249 = arith.addf %248, %19 : vector<2x256xf32>
    %250 = vector.extract_strided_slice %249 {offsets = [0, 0], sizes = [2, 64], strides = [1, 1]} : vector<2x256xf32> to vector<2x64xf32>
    %251 = vector.extract_strided_slice %249 {offsets = [0, 64], sizes = [2, 64], strides = [1, 1]} : vector<2x256xf32> to vector<2x64xf32>
    %252 = vector.extract_strided_slice %249 {offsets = [0, 128], sizes = [2, 64], strides = [1, 1]} : vector<2x256xf32> to vector<2x64xf32>
    %253 = vector.extract_strided_slice %249 {offsets = [0, 192], sizes = [2, 64], strides = [1, 1]} : vector<2x256xf32> to vector<2x64xf32>
    %254 = arith.mulf %251, %203 : vector<2x64xf32>
    %255 = arith.mulf %250, %252 : vector<2x64xf32>
    %256 = arith.addf %254, %255 : vector<2x64xf32>
    %257 = math.tanh %256 : vector<2x64xf32>
    %258 = arith.mulf %253, %257 : vector<2x64xf32>
    %259 = arith.truncf %258 : vector<2x64xf32> to vector<2x64xbf16>
    %c0_80 = arith.constant 0 : index
    %c0_81 = arith.constant 0 : index
    %260 = vector.load %arg3[%c0_80, %c0_81] : memref<64x512xbf16, #tpu.memory_space<vmem>>, vector<64x512xbf16>
    %cst_82 = arith.constant dense<0.000000e+00> : vector<2x512xf32>
    %261 = tpu.matmul %259, %260, %cst_82 {dimension_numbers = #tpu.dot_dimension_numbers<[1], [0], [0], [1], [0, 0, 1, 1], [], []>} : vector<2x64xbf16>, vector<64x512xbf16>, vector<2x512xf32> -> vector<2x512xf32>
    %262 = vector.extract_strided_slice %261 {offsets = [0, 0], sizes = [2, 256], strides = [1, 1]} : vector<2x512xf32> to vector<2x256xf32>
    %263 = vector.extract_strided_slice %261 {offsets = [0, 256], sizes = [2, 256], strides = [1, 1]} : vector<2x512xf32> to vector<2x256xf32>
    %c0_83 = arith.constant 0 : index
    %c0_84 = arith.constant 0 : index
    %264 = vector.load %arg5[%c0_83, %c0_84] : memref<1x256xf32, #tpu.memory_space<vmem>>, vector<1x256xf32>
    %265 = vector.broadcast %264 : vector<1x256xf32> to vector<2x256xf32>
    %266 = arith.addf %263, %265 : vector<2x256xf32>
    %267 = arith.addf %266, %234 : vector<2x256xf32>
    %268 = arith.mulf %267, %16 : vector<2x256xf32>
    %269 = arith.negf %268 : vector<2x256xf32>
    %270 = math.exp %269 : vector<2x256xf32>
    %cst_85 = arith.constant 1.000000e+00 : f32
    %271 = vector.broadcast %cst_85 : f32 to vector<2x256xf32>
    %272 = arith.addf %271, %270 : vector<2x256xf32>
    %273 = arith.divf %271, %272 : vector<2x256xf32>
    %274 = arith.mulf %273, %16 : vector<2x256xf32>
    %275 = arith.addf %274, %19 : vector<2x256xf32>
    %276 = vector.extract_strided_slice %275 {offsets = [0, 0], sizes = [2, 64], strides = [1, 1]} : vector<2x256xf32> to vector<2x64xf32>
    %277 = vector.extract_strided_slice %275 {offsets = [0, 64], sizes = [2, 64], strides = [1, 1]} : vector<2x256xf32> to vector<2x64xf32>
    %278 = vector.extract_strided_slice %275 {offsets = [0, 128], sizes = [2, 64], strides = [1, 1]} : vector<2x256xf32> to vector<2x64xf32>
    %279 = vector.extract_strided_slice %275 {offsets = [0, 192], sizes = [2, 64], strides = [1, 1]} : vector<2x256xf32> to vector<2x64xf32>
    %280 = arith.mulf %277, %229 : vector<2x64xf32>
    %281 = arith.mulf %276, %278 : vector<2x64xf32>
    %282 = arith.addf %280, %281 : vector<2x64xf32>
    %283 = math.tanh %282 : vector<2x64xf32>
    %284 = arith.mulf %279, %283 : vector<2x64xf32>
    %285 = arith.truncf %284 : vector<2x64xf32> to vector<2x64xbf16>
    %c0_86 = arith.constant 0 : index
    %c0_87 = arith.constant 0 : index
    %286 = vector.load %arg4[%c0_86, %c0_87] : memref<64x256xbf16, #tpu.memory_space<vmem>>, vector<64x256xbf16>
    %cst_88 = arith.constant dense<0.000000e+00> : vector<2x256xf32>
    %287 = tpu.matmul %285, %286, %cst_88 {dimension_numbers = #tpu.dot_dimension_numbers<[1], [0], [0], [1], [0, 0, 1, 1], [], []>} : vector<2x64xbf16>, vector<64x256xbf16>, vector<2x256xf32> -> vector<2x256xf32>
    %288 = arith.truncf %5 : vector<2x15xf32> to vector<2x15xbf16>
    %c0_89 = arith.constant 0 : index
    %c0_90 = arith.constant 0 : index
    %289 = vector.load %arg1[%c0_89, %c0_90] : memref<15x256xbf16, #tpu.memory_space<vmem>>, vector<15x256xbf16>
    %cst_91 = arith.constant dense<0.000000e+00> : vector<2x256xf32>
    %290 = tpu.matmul %288, %289, %cst_91 {dimension_numbers = #tpu.dot_dimension_numbers<[1], [0], [0], [1], [0, 0, 1, 1], [], []>} : vector<2x15xbf16>, vector<15x256xbf16>, vector<2x256xf32> -> vector<2x256xf32>
    %c0_92 = arith.constant 0 : index
    %c0_93 = arith.constant 0 : index
    %291 = vector.load %arg2[%c0_92, %c0_93] : memref<1x256xf32, #tpu.memory_space<vmem>>, vector<1x256xf32>
    %292 = vector.broadcast %291 : vector<1x256xf32> to vector<2x256xf32>
    %293 = arith.addf %290, %292 : vector<2x256xf32>
    %294 = arith.addf %293, %262 : vector<2x256xf32>
    %295 = arith.mulf %294, %16 : vector<2x256xf32>
    %296 = arith.negf %295 : vector<2x256xf32>
    %297 = math.exp %296 : vector<2x256xf32>
    %cst_94 = arith.constant 1.000000e+00 : f32
    %298 = vector.broadcast %cst_94 : f32 to vector<2x256xf32>
    %299 = arith.addf %298, %297 : vector<2x256xf32>
    %300 = arith.divf %298, %299 : vector<2x256xf32>
    %301 = arith.mulf %300, %16 : vector<2x256xf32>
    %302 = arith.addf %301, %19 : vector<2x256xf32>
    %303 = vector.extract_strided_slice %302 {offsets = [0, 0], sizes = [2, 64], strides = [1, 1]} : vector<2x256xf32> to vector<2x64xf32>
    %304 = vector.extract_strided_slice %302 {offsets = [0, 64], sizes = [2, 64], strides = [1, 1]} : vector<2x256xf32> to vector<2x64xf32>
    %305 = vector.extract_strided_slice %302 {offsets = [0, 128], sizes = [2, 64], strides = [1, 1]} : vector<2x256xf32> to vector<2x64xf32>
    %306 = vector.extract_strided_slice %302 {offsets = [0, 192], sizes = [2, 64], strides = [1, 1]} : vector<2x256xf32> to vector<2x64xf32>
    %307 = arith.mulf %304, %256 : vector<2x64xf32>
    %308 = arith.mulf %303, %305 : vector<2x64xf32>
    %309 = arith.addf %307, %308 : vector<2x64xf32>
    %310 = math.tanh %309 : vector<2x64xf32>
    %311 = arith.mulf %306, %310 : vector<2x64xf32>
    %312 = arith.truncf %311 : vector<2x64xf32> to vector<2x64xbf16>
    %c0_95 = arith.constant 0 : index
    %c0_96 = arith.constant 0 : index
    %313 = vector.load %arg3[%c0_95, %c0_96] : memref<64x512xbf16, #tpu.memory_space<vmem>>, vector<64x512xbf16>
    %cst_97 = arith.constant dense<0.000000e+00> : vector<2x512xf32>
    %314 = tpu.matmul %312, %313, %cst_97 {dimension_numbers = #tpu.dot_dimension_numbers<[1], [0], [0], [1], [0, 0, 1, 1], [], []>} : vector<2x64xbf16>, vector<64x512xbf16>, vector<2x512xf32> -> vector<2x512xf32>
    %315 = vector.extract_strided_slice %314 {offsets = [0, 0], sizes = [2, 256], strides = [1, 1]} : vector<2x512xf32> to vector<2x256xf32>
    %316 = vector.extract_strided_slice %314 {offsets = [0, 256], sizes = [2, 256], strides = [1, 1]} : vector<2x512xf32> to vector<2x256xf32>
    %c0_98 = arith.constant 0 : index
    %c0_99 = arith.constant 0 : index
    %317 = vector.load %arg5[%c0_98, %c0_99] : memref<1x256xf32, #tpu.memory_space<vmem>>, vector<1x256xf32>
    %318 = vector.broadcast %317 : vector<1x256xf32> to vector<2x256xf32>
    %319 = arith.addf %316, %318 : vector<2x256xf32>
    %320 = arith.addf %319, %287 : vector<2x256xf32>
    %321 = arith.mulf %320, %16 : vector<2x256xf32>
    %322 = arith.negf %321 : vector<2x256xf32>
    %323 = math.exp %322 : vector<2x256xf32>
    %cst_100 = arith.constant 1.000000e+00 : f32
    %324 = vector.broadcast %cst_100 : f32 to vector<2x256xf32>
    %325 = arith.addf %324, %323 : vector<2x256xf32>
    %326 = arith.divf %324, %325 : vector<2x256xf32>
    %327 = arith.mulf %326, %16 : vector<2x256xf32>
    %328 = arith.addf %327, %19 : vector<2x256xf32>
    %329 = vector.extract_strided_slice %328 {offsets = [0, 0], sizes = [2, 64], strides = [1, 1]} : vector<2x256xf32> to vector<2x64xf32>
    %330 = vector.extract_strided_slice %328 {offsets = [0, 64], sizes = [2, 64], strides = [1, 1]} : vector<2x256xf32> to vector<2x64xf32>
    %331 = vector.extract_strided_slice %328 {offsets = [0, 128], sizes = [2, 64], strides = [1, 1]} : vector<2x256xf32> to vector<2x64xf32>
    %332 = vector.extract_strided_slice %328 {offsets = [0, 192], sizes = [2, 64], strides = [1, 1]} : vector<2x256xf32> to vector<2x64xf32>
    %333 = arith.mulf %330, %282 : vector<2x64xf32>
    %334 = arith.mulf %329, %331 : vector<2x64xf32>
    %335 = arith.addf %333, %334 : vector<2x64xf32>
    %336 = math.tanh %335 : vector<2x64xf32>
    %337 = arith.mulf %332, %336 : vector<2x64xf32>
    %338 = arith.truncf %337 : vector<2x64xf32> to vector<2x64xbf16>
    %c0_101 = arith.constant 0 : index
    %c0_102 = arith.constant 0 : index
    %339 = vector.load %arg4[%c0_101, %c0_102] : memref<64x256xbf16, #tpu.memory_space<vmem>>, vector<64x256xbf16>
    %cst_103 = arith.constant dense<0.000000e+00> : vector<2x256xf32>
    %340 = tpu.matmul %338, %339, %cst_103 {dimension_numbers = #tpu.dot_dimension_numbers<[1], [0], [0], [1], [0, 0, 1, 1], [], []>} : vector<2x64xbf16>, vector<64x256xbf16>, vector<2x256xf32> -> vector<2x256xf32>
    %341 = arith.truncf %6 : vector<2x15xf32> to vector<2x15xbf16>
    %c0_104 = arith.constant 0 : index
    %c0_105 = arith.constant 0 : index
    %342 = vector.load %arg1[%c0_104, %c0_105] : memref<15x256xbf16, #tpu.memory_space<vmem>>, vector<15x256xbf16>
    %cst_106 = arith.constant dense<0.000000e+00> : vector<2x256xf32>
    %343 = tpu.matmul %341, %342, %cst_106 {dimension_numbers = #tpu.dot_dimension_numbers<[1], [0], [0], [1], [0, 0, 1, 1], [], []>} : vector<2x15xbf16>, vector<15x256xbf16>, vector<2x256xf32> -> vector<2x256xf32>
    %c0_107 = arith.constant 0 : index
    %c0_108 = arith.constant 0 : index
    %344 = vector.load %arg2[%c0_107, %c0_108] : memref<1x256xf32, #tpu.memory_space<vmem>>, vector<1x256xf32>
    %345 = vector.broadcast %344 : vector<1x256xf32> to vector<2x256xf32>
    %346 = arith.addf %343, %345 : vector<2x256xf32>
    %347 = arith.addf %346, %315 : vector<2x256xf32>
    %348 = arith.mulf %347, %16 : vector<2x256xf32>
    %349 = arith.negf %348 : vector<2x256xf32>
    %350 = math.exp %349 : vector<2x256xf32>
    %cst_109 = arith.constant 1.000000e+00 : f32
    %351 = vector.broadcast %cst_109 : f32 to vector<2x256xf32>
    %352 = arith.addf %351, %350 : vector<2x256xf32>
    %353 = arith.divf %351, %352 : vector<2x256xf32>
    %354 = arith.mulf %353, %16 : vector<2x256xf32>
    %355 = arith.addf %354, %19 : vector<2x256xf32>
    %356 = vector.extract_strided_slice %355 {offsets = [0, 0], sizes = [2, 64], strides = [1, 1]} : vector<2x256xf32> to vector<2x64xf32>
    %357 = vector.extract_strided_slice %355 {offsets = [0, 64], sizes = [2, 64], strides = [1, 1]} : vector<2x256xf32> to vector<2x64xf32>
    %358 = vector.extract_strided_slice %355 {offsets = [0, 128], sizes = [2, 64], strides = [1, 1]} : vector<2x256xf32> to vector<2x64xf32>
    %359 = vector.extract_strided_slice %355 {offsets = [0, 192], sizes = [2, 64], strides = [1, 1]} : vector<2x256xf32> to vector<2x64xf32>
    %360 = arith.mulf %357, %309 : vector<2x64xf32>
    %361 = arith.mulf %356, %358 : vector<2x64xf32>
    %362 = arith.addf %360, %361 : vector<2x64xf32>
    %363 = math.tanh %362 : vector<2x64xf32>
    %364 = arith.mulf %359, %363 : vector<2x64xf32>
    %365 = arith.truncf %364 : vector<2x64xf32> to vector<2x64xbf16>
    %c0_110 = arith.constant 0 : index
    %c0_111 = arith.constant 0 : index
    %366 = vector.load %arg3[%c0_110, %c0_111] : memref<64x512xbf16, #tpu.memory_space<vmem>>, vector<64x512xbf16>
    %cst_112 = arith.constant dense<0.000000e+00> : vector<2x512xf32>
    %367 = tpu.matmul %365, %366, %cst_112 {dimension_numbers = #tpu.dot_dimension_numbers<[1], [0], [0], [1], [0, 0, 1, 1], [], []>} : vector<2x64xbf16>, vector<64x512xbf16>, vector<2x512xf32> -> vector<2x512xf32>
    %368 = vector.extract_strided_slice %367 {offsets = [0, 0], sizes = [2, 256], strides = [1, 1]} : vector<2x512xf32> to vector<2x256xf32>
    %369 = vector.extract_strided_slice %367 {offsets = [0, 256], sizes = [2, 256], strides = [1, 1]} : vector<2x512xf32> to vector<2x256xf32>
    %c0_113 = arith.constant 0 : index
    %c0_114 = arith.constant 0 : index
    %370 = vector.load %arg5[%c0_113, %c0_114] : memref<1x256xf32, #tpu.memory_space<vmem>>, vector<1x256xf32>
    %371 = vector.broadcast %370 : vector<1x256xf32> to vector<2x256xf32>
    %372 = arith.addf %369, %371 : vector<2x256xf32>
    %373 = arith.addf %372, %340 : vector<2x256xf32>
    %374 = arith.mulf %373, %16 : vector<2x256xf32>
    %375 = arith.negf %374 : vector<2x256xf32>
    %376 = math.exp %375 : vector<2x256xf32>
    %cst_115 = arith.constant 1.000000e+00 : f32
    %377 = vector.broadcast %cst_115 : f32 to vector<2x256xf32>
    %378 = arith.addf %377, %376 : vector<2x256xf32>
    %379 = arith.divf %377, %378 : vector<2x256xf32>
    %380 = arith.mulf %379, %16 : vector<2x256xf32>
    %381 = arith.addf %380, %19 : vector<2x256xf32>
    %382 = vector.extract_strided_slice %381 {offsets = [0, 0], sizes = [2, 64], strides = [1, 1]} : vector<2x256xf32> to vector<2x64xf32>
    %383 = vector.extract_strided_slice %381 {offsets = [0, 64], sizes = [2, 64], strides = [1, 1]} : vector<2x256xf32> to vector<2x64xf32>
    %384 = vector.extract_strided_slice %381 {offsets = [0, 128], sizes = [2, 64], strides = [1, 1]} : vector<2x256xf32> to vector<2x64xf32>
    %385 = vector.extract_strided_slice %381 {offsets = [0, 192], sizes = [2, 64], strides = [1, 1]} : vector<2x256xf32> to vector<2x64xf32>
    %386 = arith.mulf %383, %335 : vector<2x64xf32>
    %387 = arith.mulf %382, %384 : vector<2x64xf32>
    %388 = arith.addf %386, %387 : vector<2x64xf32>
    %389 = math.tanh %388 : vector<2x64xf32>
    %390 = arith.mulf %385, %389 : vector<2x64xf32>
    %391 = arith.truncf %390 : vector<2x64xf32> to vector<2x64xbf16>
    %c0_116 = arith.constant 0 : index
    %c0_117 = arith.constant 0 : index
    %392 = vector.load %arg4[%c0_116, %c0_117] : memref<64x256xbf16, #tpu.memory_space<vmem>>, vector<64x256xbf16>
    %cst_118 = arith.constant dense<0.000000e+00> : vector<2x256xf32>
    %393 = tpu.matmul %391, %392, %cst_118 {dimension_numbers = #tpu.dot_dimension_numbers<[1], [0], [0], [1], [0, 0, 1, 1], [], []>} : vector<2x64xbf16>, vector<64x256xbf16>, vector<2x256xf32> -> vector<2x256xf32>
    %394 = arith.truncf %7 : vector<2x15xf32> to vector<2x15xbf16>
    %c0_119 = arith.constant 0 : index
    %c0_120 = arith.constant 0 : index
    %395 = vector.load %arg1[%c0_119, %c0_120] : memref<15x256xbf16, #tpu.memory_space<vmem>>, vector<15x256xbf16>
    %cst_121 = arith.constant dense<0.000000e+00> : vector<2x256xf32>
    %396 = tpu.matmul %394, %395, %cst_121 {dimension_numbers = #tpu.dot_dimension_numbers<[1], [0], [0], [1], [0, 0, 1, 1], [], []>} : vector<2x15xbf16>, vector<15x256xbf16>, vector<2x256xf32> -> vector<2x256xf32>
    %c0_122 = arith.constant 0 : index
    %c0_123 = arith.constant 0 : index
    %397 = vector.load %arg2[%c0_122, %c0_123] : memref<1x256xf32, #tpu.memory_space<vmem>>, vector<1x256xf32>
    %398 = vector.broadcast %397 : vector<1x256xf32> to vector<2x256xf32>
    %399 = arith.addf %396, %398 : vector<2x256xf32>
    %400 = arith.addf %399, %368 : vector<2x256xf32>
    %401 = arith.mulf %400, %16 : vector<2x256xf32>
    %402 = arith.negf %401 : vector<2x256xf32>
    %403 = math.exp %402 : vector<2x256xf32>
    %cst_124 = arith.constant 1.000000e+00 : f32
    %404 = vector.broadcast %cst_124 : f32 to vector<2x256xf32>
    %405 = arith.addf %404, %403 : vector<2x256xf32>
    %406 = arith.divf %404, %405 : vector<2x256xf32>
    %407 = arith.mulf %406, %16 : vector<2x256xf32>
    %408 = arith.addf %407, %19 : vector<2x256xf32>
    %409 = vector.extract_strided_slice %408 {offsets = [0, 0], sizes = [2, 64], strides = [1, 1]} : vector<2x256xf32> to vector<2x64xf32>
    %410 = vector.extract_strided_slice %408 {offsets = [0, 64], sizes = [2, 64], strides = [1, 1]} : vector<2x256xf32> to vector<2x64xf32>
    %411 = vector.extract_strided_slice %408 {offsets = [0, 128], sizes = [2, 64], strides = [1, 1]} : vector<2x256xf32> to vector<2x64xf32>
    %412 = vector.extract_strided_slice %408 {offsets = [0, 192], sizes = [2, 64], strides = [1, 1]} : vector<2x256xf32> to vector<2x64xf32>
    %413 = arith.mulf %410, %362 : vector<2x64xf32>
    %414 = arith.mulf %409, %411 : vector<2x64xf32>
    %415 = arith.addf %413, %414 : vector<2x64xf32>
    %416 = math.tanh %415 : vector<2x64xf32>
    %417 = arith.mulf %412, %416 : vector<2x64xf32>
    %418 = arith.truncf %417 : vector<2x64xf32> to vector<2x64xbf16>
    %c0_125 = arith.constant 0 : index
    %c0_126 = arith.constant 0 : index
    %419 = vector.load %arg3[%c0_125, %c0_126] : memref<64x512xbf16, #tpu.memory_space<vmem>>, vector<64x512xbf16>
    %cst_127 = arith.constant dense<0.000000e+00> : vector<2x512xf32>
    %420 = tpu.matmul %418, %419, %cst_127 {dimension_numbers = #tpu.dot_dimension_numbers<[1], [0], [0], [1], [0, 0, 1, 1], [], []>} : vector<2x64xbf16>, vector<64x512xbf16>, vector<2x512xf32> -> vector<2x512xf32>
    %421 = vector.extract_strided_slice %420 {offsets = [0, 256], sizes = [2, 256], strides = [1, 1]} : vector<2x512xf32> to vector<2x256xf32>
    %c0_128 = arith.constant 0 : index
    %c0_129 = arith.constant 0 : index
    %422 = vector.load %arg5[%c0_128, %c0_129] : memref<1x256xf32, #tpu.memory_space<vmem>>, vector<1x256xf32>
    %423 = vector.broadcast %422 : vector<1x256xf32> to vector<2x256xf32>
    %424 = arith.addf %421, %423 : vector<2x256xf32>
    %425 = arith.addf %424, %393 : vector<2x256xf32>
    %426 = arith.mulf %425, %16 : vector<2x256xf32>
    %427 = arith.negf %426 : vector<2x256xf32>
    %428 = math.exp %427 : vector<2x256xf32>
    %cst_130 = arith.constant 1.000000e+00 : f32
    %429 = vector.broadcast %cst_130 : f32 to vector<2x256xf32>
    %430 = arith.addf %429, %428 : vector<2x256xf32>
    %431 = arith.divf %429, %430 : vector<2x256xf32>
    %432 = arith.mulf %431, %16 : vector<2x256xf32>
    %433 = arith.addf %432, %19 : vector<2x256xf32>
    %434 = vector.extract_strided_slice %433 {offsets = [0, 0], sizes = [2, 64], strides = [1, 1]} : vector<2x256xf32> to vector<2x64xf32>
    %435 = vector.extract_strided_slice %433 {offsets = [0, 64], sizes = [2, 64], strides = [1, 1]} : vector<2x256xf32> to vector<2x64xf32>
    %436 = vector.extract_strided_slice %433 {offsets = [0, 128], sizes = [2, 64], strides = [1, 1]} : vector<2x256xf32> to vector<2x64xf32>
    %437 = vector.extract_strided_slice %433 {offsets = [0, 192], sizes = [2, 64], strides = [1, 1]} : vector<2x256xf32> to vector<2x64xf32>
    %438 = arith.mulf %435, %388 : vector<2x64xf32>
    %439 = arith.mulf %434, %436 : vector<2x64xf32>
    %440 = arith.addf %438, %439 : vector<2x64xf32>
    %441 = math.tanh %440 : vector<2x64xf32>
    %442 = arith.mulf %437, %441 : vector<2x64xf32>
    %443 = arith.truncf %417 : vector<2x64xf32> to vector<2x64xbf16>
    %c0_131 = arith.constant 0 : index
    %c0_132 = arith.constant 0 : index
    %444 = vector.load %arg6[%c0_131, %c0_132] : memref<64x64xbf16, #tpu.memory_space<vmem>>, vector<64x64xbf16>
    %cst_133 = arith.constant dense<0.000000e+00> : vector<2x64xf32>
    %445 = tpu.matmul %443, %444, %cst_133 {dimension_numbers = #tpu.dot_dimension_numbers<[1], [0], [0], [1], [0, 0, 1, 1], [], []>} : vector<2x64xbf16>, vector<64x64xbf16>, vector<2x64xf32> -> vector<2x64xf32>
    %c0_134 = arith.constant 0 : index
    %c0_135 = arith.constant 0 : index
    %446 = vector.load %arg7[%c0_134, %c0_135] : memref<1x64xf32, #tpu.memory_space<vmem>>, vector<1x64xf32>
    %447 = vector.broadcast %446 : vector<1x64xf32> to vector<2x64xf32>
    %448 = arith.addf %445, %447 : vector<2x64xf32>
    %449 = math.tanh %448 : vector<2x64xf32>
    %450 = arith.truncf %442 : vector<2x64xf32> to vector<2x64xbf16>
    %c0_136 = arith.constant 0 : index
    %c0_137 = arith.constant 0 : index
    %451 = vector.load %arg6[%c0_136, %c0_137] : memref<64x64xbf16, #tpu.memory_space<vmem>>, vector<64x64xbf16>
    %cst_138 = arith.constant dense<0.000000e+00> : vector<2x64xf32>
    %452 = tpu.matmul %450, %451, %cst_138 {dimension_numbers = #tpu.dot_dimension_numbers<[1], [0], [0], [1], [0, 0, 1, 1], [], []>} : vector<2x64xbf16>, vector<64x64xbf16>, vector<2x64xf32> -> vector<2x64xf32>
    %c0_139 = arith.constant 0 : index
    %c0_140 = arith.constant 0 : index
    %453 = vector.load %arg7[%c0_139, %c0_140] : memref<1x64xf32, #tpu.memory_space<vmem>>, vector<1x64xf32>
    %454 = vector.broadcast %453 : vector<1x64xf32> to vector<2x64xf32>
    %455 = arith.addf %452, %454 : vector<2x64xf32>
    %456 = math.tanh %455 : vector<2x64xf32>
    %457 = tpu.iota {dimensions = array<i32: 1>} : vector<2x256xi32>
    %c128_i32_141 = arith.constant 128 : i32
    %458 = vector.broadcast %c128_i32_141 : i32 to vector<2x256xi32>
    %459 = arith.cmpi sge, %457, %458 : vector<2x256xi32>
    %c192_i32_142 = arith.constant 192 : i32
    %460 = vector.broadcast %c192_i32_142 : i32 to vector<2x256xi32>
    %461 = arith.cmpi slt, %457, %460 : vector<2x256xi32>
    %462 = arith.andi %459, %461 : vector<2x256xi1>
    %cst_143 = arith.constant 2.000000e+00 : f32
    %cst_144 = arith.constant 1.000000e+00 : f32
    %463 = vector.broadcast %cst_143 : f32 to vector<2x256xf32>
    %464 = vector.broadcast %cst_144 : f32 to vector<2x256xf32>
    %465 = arith.select %462, %463, %464 : vector<2x256xi1>, vector<2x256xf32>
    %cst_145 = arith.constant -1.000000e+00 : f32
    %cst_146 = arith.constant 0.000000e+00 : f32
    %466 = vector.broadcast %cst_145 : f32 to vector<2x256xf32>
    %467 = vector.broadcast %cst_146 : f32 to vector<2x256xf32>
    %468 = arith.select %462, %466, %467 : vector<2x256xi1>, vector<2x256xf32>
    %cst_147 = arith.constant 0.000000e+00 : f32
    %469 = vector.broadcast %cst_147 : f32 to vector<2x64xf32>
    %cst_148 = arith.constant 0.000000e+00 : f32
    %470 = vector.broadcast %cst_148 : f32 to vector<2x256xf32>
    %cst_149 = arith.constant 0.000000e+00 : f32
    %471 = vector.broadcast %cst_149 : f32 to vector<2x256xf32>
    %472 = arith.truncf %449 : vector<2x64xf32> to vector<2x64xbf16>
    %c0_150 = arith.constant 0 : index
    %c0_151 = arith.constant 0 : index
    %473 = vector.load %arg8[%c0_150, %c0_151] : memref<64x256xbf16, #tpu.memory_space<vmem>>, vector<64x256xbf16>
    %cst_152 = arith.constant dense<0.000000e+00> : vector<2x256xf32>
    %474 = tpu.matmul %472, %473, %cst_152 {dimension_numbers = #tpu.dot_dimension_numbers<[1], [0], [0], [1], [0, 0, 1, 1], [], []>} : vector<2x64xbf16>, vector<64x256xbf16>, vector<2x256xf32> -> vector<2x256xf32>
    %c0_153 = arith.constant 0 : index
    %c0_154 = arith.constant 0 : index
    %475 = vector.load %arg9[%c0_153, %c0_154] : memref<1x256xf32, #tpu.memory_space<vmem>>, vector<1x256xf32>
    %476 = vector.broadcast %475 : vector<1x256xf32> to vector<2x256xf32>
    %477 = arith.addf %474, %476 : vector<2x256xf32>
    %478 = arith.addf %477, %470 : vector<2x256xf32>
    %479 = arith.mulf %478, %465 : vector<2x256xf32>
    %480 = arith.negf %479 : vector<2x256xf32>
    %481 = math.exp %480 : vector<2x256xf32>
    %cst_155 = arith.constant 1.000000e+00 : f32
    %482 = vector.broadcast %cst_155 : f32 to vector<2x256xf32>
    %483 = arith.addf %482, %481 : vector<2x256xf32>
    %484 = arith.divf %482, %483 : vector<2x256xf32>
    %485 = arith.mulf %484, %465 : vector<2x256xf32>
    %486 = arith.addf %485, %468 : vector<2x256xf32>
    %487 = vector.extract_strided_slice %486 {offsets = [0, 0], sizes = [2, 64], strides = [1, 1]} : vector<2x256xf32> to vector<2x64xf32>
    %488 = vector.extract_strided_slice %486 {offsets = [0, 64], sizes = [2, 64], strides = [1, 1]} : vector<2x256xf32> to vector<2x64xf32>
    %489 = vector.extract_strided_slice %486 {offsets = [0, 128], sizes = [2, 64], strides = [1, 1]} : vector<2x256xf32> to vector<2x64xf32>
    %490 = vector.extract_strided_slice %486 {offsets = [0, 192], sizes = [2, 64], strides = [1, 1]} : vector<2x256xf32> to vector<2x64xf32>
    %491 = arith.mulf %488, %469 : vector<2x64xf32>
    %492 = arith.mulf %487, %489 : vector<2x64xf32>
    %493 = arith.addf %491, %492 : vector<2x64xf32>
    %494 = math.tanh %493 : vector<2x64xf32>
    %495 = arith.mulf %490, %494 : vector<2x64xf32>
    %496 = arith.truncf %495 : vector<2x64xf32> to vector<2x64xbf16>
    %c0_156 = arith.constant 0 : index
    %c0_157 = arith.constant 0 : index
    %497 = vector.load %arg10[%c0_156, %c0_157] : memref<64x512xbf16, #tpu.memory_space<vmem>>, vector<64x512xbf16>
    %cst_158 = arith.constant dense<0.000000e+00> : vector<2x512xf32>
    %498 = tpu.matmul %496, %497, %cst_158 {dimension_numbers = #tpu.dot_dimension_numbers<[1], [0], [0], [1], [0, 0, 1, 1], [], []>} : vector<2x64xbf16>, vector<64x512xbf16>, vector<2x512xf32> -> vector<2x512xf32>
    %499 = vector.extract_strided_slice %498 {offsets = [0, 0], sizes = [2, 256], strides = [1, 1]} : vector<2x512xf32> to vector<2x256xf32>
    %500 = vector.extract_strided_slice %498 {offsets = [0, 256], sizes = [2, 256], strides = [1, 1]} : vector<2x512xf32> to vector<2x256xf32>
    %c0_159 = arith.constant 0 : index
    %c0_160 = arith.constant 0 : index
    %501 = vector.load %arg12[%c0_159, %c0_160] : memref<1x256xf32, #tpu.memory_space<vmem>>, vector<1x256xf32>
    %502 = vector.broadcast %501 : vector<1x256xf32> to vector<2x256xf32>
    %503 = arith.addf %500, %502 : vector<2x256xf32>
    %504 = arith.addf %503, %471 : vector<2x256xf32>
    %505 = arith.mulf %504, %465 : vector<2x256xf32>
    %506 = arith.negf %505 : vector<2x256xf32>
    %507 = math.exp %506 : vector<2x256xf32>
    %cst_161 = arith.constant 1.000000e+00 : f32
    %508 = vector.broadcast %cst_161 : f32 to vector<2x256xf32>
    %509 = arith.addf %508, %507 : vector<2x256xf32>
    %510 = arith.divf %508, %509 : vector<2x256xf32>
    %511 = arith.mulf %510, %465 : vector<2x256xf32>
    %512 = arith.addf %511, %468 : vector<2x256xf32>
    %513 = vector.extract_strided_slice %512 {offsets = [0, 0], sizes = [2, 64], strides = [1, 1]} : vector<2x256xf32> to vector<2x64xf32>
    %514 = vector.extract_strided_slice %512 {offsets = [0, 64], sizes = [2, 64], strides = [1, 1]} : vector<2x256xf32> to vector<2x64xf32>
    %515 = vector.extract_strided_slice %512 {offsets = [0, 128], sizes = [2, 64], strides = [1, 1]} : vector<2x256xf32> to vector<2x64xf32>
    %516 = vector.extract_strided_slice %512 {offsets = [0, 192], sizes = [2, 64], strides = [1, 1]} : vector<2x256xf32> to vector<2x64xf32>
    %517 = arith.mulf %514, %469 : vector<2x64xf32>
    %518 = arith.mulf %513, %515 : vector<2x64xf32>
    %519 = arith.addf %517, %518 : vector<2x64xf32>
    %520 = math.tanh %519 : vector<2x64xf32>
    %521 = arith.mulf %516, %520 : vector<2x64xf32>
    %522 = arith.truncf %521 : vector<2x64xf32> to vector<2x64xbf16>
    %c0_162 = arith.constant 0 : index
    %c0_163 = arith.constant 0 : index
    %523 = vector.load %arg11[%c0_162, %c0_163] : memref<64x256xbf16, #tpu.memory_space<vmem>>, vector<64x256xbf16>
    %cst_164 = arith.constant dense<0.000000e+00> : vector<2x256xf32>
    %524 = tpu.matmul %522, %523, %cst_164 {dimension_numbers = #tpu.dot_dimension_numbers<[1], [0], [0], [1], [0, 0, 1, 1], [], []>} : vector<2x64xbf16>, vector<64x256xbf16>, vector<2x256xf32> -> vector<2x256xf32>
    %525 = arith.truncf %456 : vector<2x64xf32> to vector<2x64xbf16>
    %c0_165 = arith.constant 0 : index
    %c0_166 = arith.constant 0 : index
    %526 = vector.load %arg8[%c0_165, %c0_166] : memref<64x256xbf16, #tpu.memory_space<vmem>>, vector<64x256xbf16>
    %cst_167 = arith.constant dense<0.000000e+00> : vector<2x256xf32>
    %527 = tpu.matmul %525, %526, %cst_167 {dimension_numbers = #tpu.dot_dimension_numbers<[1], [0], [0], [1], [0, 0, 1, 1], [], []>} : vector<2x64xbf16>, vector<64x256xbf16>, vector<2x256xf32> -> vector<2x256xf32>
    %c0_168 = arith.constant 0 : index
    %c0_169 = arith.constant 0 : index
    %528 = vector.load %arg9[%c0_168, %c0_169] : memref<1x256xf32, #tpu.memory_space<vmem>>, vector<1x256xf32>
    %529 = vector.broadcast %528 : vector<1x256xf32> to vector<2x256xf32>
    %530 = arith.addf %527, %529 : vector<2x256xf32>
    %531 = arith.addf %530, %499 : vector<2x256xf32>
    %532 = arith.mulf %531, %465 : vector<2x256xf32>
    %533 = arith.negf %532 : vector<2x256xf32>
    %534 = math.exp %533 : vector<2x256xf32>
    %cst_170 = arith.constant 1.000000e+00 : f32
    %535 = vector.broadcast %cst_170 : f32 to vector<2x256xf32>
    %536 = arith.addf %535, %534 : vector<2x256xf32>
    %537 = arith.divf %535, %536 : vector<2x256xf32>
    %538 = arith.mulf %537, %465 : vector<2x256xf32>
    %539 = arith.addf %538, %468 : vector<2x256xf32>
    %540 = vector.extract_strided_slice %539 {offsets = [0, 0], sizes = [2, 64], strides = [1, 1]} : vector<2x256xf32> to vector<2x64xf32>
    %541 = vector.extract_strided_slice %539 {offsets = [0, 64], sizes = [2, 64], strides = [1, 1]} : vector<2x256xf32> to vector<2x64xf32>
    %542 = vector.extract_strided_slice %539 {offsets = [0, 128], sizes = [2, 64], strides = [1, 1]} : vector<2x256xf32> to vector<2x64xf32>
    %543 = vector.extract_strided_slice %539 {offsets = [0, 192], sizes = [2, 64], strides = [1, 1]} : vector<2x256xf32> to vector<2x64xf32>
    %544 = arith.mulf %541, %493 : vector<2x64xf32>
    %545 = arith.mulf %540, %542 : vector<2x64xf32>
    %546 = arith.addf %544, %545 : vector<2x64xf32>
    %547 = math.tanh %546 : vector<2x64xf32>
    %548 = arith.mulf %543, %547 : vector<2x64xf32>
    %549 = arith.truncf %548 : vector<2x64xf32> to vector<2x64xbf16>
    %c0_171 = arith.constant 0 : index
    %c0_172 = arith.constant 0 : index
    %550 = vector.load %arg10[%c0_171, %c0_172] : memref<64x512xbf16, #tpu.memory_space<vmem>>, vector<64x512xbf16>
    %cst_173 = arith.constant dense<0.000000e+00> : vector<2x512xf32>
    %551 = tpu.matmul %549, %550, %cst_173 {dimension_numbers = #tpu.dot_dimension_numbers<[1], [0], [0], [1], [0, 0, 1, 1], [], []>} : vector<2x64xbf16>, vector<64x512xbf16>, vector<2x512xf32> -> vector<2x512xf32>
    %552 = vector.extract_strided_slice %551 {offsets = [0, 256], sizes = [2, 256], strides = [1, 1]} : vector<2x512xf32> to vector<2x256xf32>
    %c0_174 = arith.constant 0 : index
    %c0_175 = arith.constant 0 : index
    %553 = vector.load %arg12[%c0_174, %c0_175] : memref<1x256xf32, #tpu.memory_space<vmem>>, vector<1x256xf32>
    %554 = vector.broadcast %553 : vector<1x256xf32> to vector<2x256xf32>
    %555 = arith.addf %552, %554 : vector<2x256xf32>
    %556 = arith.addf %555, %524 : vector<2x256xf32>
    %557 = arith.mulf %556, %465 : vector<2x256xf32>
    %558 = arith.negf %557 : vector<2x256xf32>
    %559 = math.exp %558 : vector<2x256xf32>
    %cst_176 = arith.constant 1.000000e+00 : f32
    %560 = vector.broadcast %cst_176 : f32 to vector<2x256xf32>
    %561 = arith.addf %560, %559 : vector<2x256xf32>
    %562 = arith.divf %560, %561 : vector<2x256xf32>
    %563 = arith.mulf %562, %465 : vector<2x256xf32>
    %564 = arith.addf %563, %468 : vector<2x256xf32>
    %565 = vector.extract_strided_slice %564 {offsets = [0, 0], sizes = [2, 64], strides = [1, 1]} : vector<2x256xf32> to vector<2x64xf32>
    %566 = vector.extract_strided_slice %564 {offsets = [0, 64], sizes = [2, 64], strides = [1, 1]} : vector<2x256xf32> to vector<2x64xf32>
    %567 = vector.extract_strided_slice %564 {offsets = [0, 128], sizes = [2, 64], strides = [1, 1]} : vector<2x256xf32> to vector<2x64xf32>
    %568 = vector.extract_strided_slice %564 {offsets = [0, 192], sizes = [2, 64], strides = [1, 1]} : vector<2x256xf32> to vector<2x64xf32>
    %569 = arith.mulf %566, %519 : vector<2x64xf32>
    %570 = arith.mulf %565, %567 : vector<2x64xf32>
    %571 = arith.addf %569, %570 : vector<2x64xf32>
    %572 = math.tanh %571 : vector<2x64xf32>
    %573 = arith.mulf %568, %572 : vector<2x64xf32>
    %574 = arith.truncf %548 : vector<2x64xf32> to vector<2x64xbf16>
    %c0_177 = arith.constant 0 : index
    %c0_178 = arith.constant 0 : index
    %575 = vector.load %arg13[%c0_177, %c0_178] : memref<64x32xbf16, #tpu.memory_space<vmem>>, vector<64x32xbf16>
    %cst_179 = arith.constant dense<0.000000e+00> : vector<2x32xf32>
    %576 = tpu.matmul %574, %575, %cst_179 {dimension_numbers = #tpu.dot_dimension_numbers<[1], [0], [0], [1], [0, 0, 1, 1], [], []>} : vector<2x64xbf16>, vector<64x32xbf16>, vector<2x32xf32> -> vector<2x32xf32>
    %c0_180 = arith.constant 0 : index
    %c0_181 = arith.constant 0 : index
    %577 = vector.load %arg14[%c0_180, %c0_181] : memref<1x32xf32, #tpu.memory_space<vmem>>, vector<1x32xf32>
    %578 = vector.broadcast %577 : vector<1x32xf32> to vector<2x32xf32>
    %579 = arith.addf %576, %578 : vector<2x32xf32>
    %580 = math.tanh %579 : vector<2x32xf32>
    %581 = arith.truncf %573 : vector<2x64xf32> to vector<2x64xbf16>
    %c0_182 = arith.constant 0 : index
    %c0_183 = arith.constant 0 : index
    %582 = vector.load %arg13[%c0_182, %c0_183] : memref<64x32xbf16, #tpu.memory_space<vmem>>, vector<64x32xbf16>
    %cst_184 = arith.constant dense<0.000000e+00> : vector<2x32xf32>
    %583 = tpu.matmul %581, %582, %cst_184 {dimension_numbers = #tpu.dot_dimension_numbers<[1], [0], [0], [1], [0, 0, 1, 1], [], []>} : vector<2x64xbf16>, vector<64x32xbf16>, vector<2x32xf32> -> vector<2x32xf32>
    %c0_185 = arith.constant 0 : index
    %c0_186 = arith.constant 0 : index
    %584 = vector.load %arg14[%c0_185, %c0_186] : memref<1x32xf32, #tpu.memory_space<vmem>>, vector<1x32xf32>
    %585 = vector.broadcast %584 : vector<1x32xf32> to vector<2x32xf32>
    %586 = arith.addf %583, %585 : vector<2x32xf32>
    %587 = math.tanh %586 : vector<2x32xf32>
    %588 = tpu.iota {dimensions = array<i32: 1>} : vector<2x128xi32>
    %c64_i32 = arith.constant 64 : i32
    %589 = vector.broadcast %c64_i32 : i32 to vector<2x128xi32>
    %590 = arith.cmpi sge, %588, %589 : vector<2x128xi32>
    %c96_i32 = arith.constant 96 : i32
    %591 = vector.broadcast %c96_i32 : i32 to vector<2x128xi32>
    %592 = arith.cmpi slt, %588, %591 : vector<2x128xi32>
    %593 = arith.andi %590, %592 : vector<2x128xi1>
    %cst_187 = arith.constant 2.000000e+00 : f32
    %cst_188 = arith.constant 1.000000e+00 : f32
    %594 = vector.broadcast %cst_187 : f32 to vector<2x128xf32>
    %595 = vector.broadcast %cst_188 : f32 to vector<2x128xf32>
    %596 = arith.select %593, %594, %595 : vector<2x128xi1>, vector<2x128xf32>
    %cst_189 = arith.constant -1.000000e+00 : f32
    %cst_190 = arith.constant 0.000000e+00 : f32
    %597 = vector.broadcast %cst_189 : f32 to vector<2x128xf32>
    %598 = vector.broadcast %cst_190 : f32 to vector<2x128xf32>
    %599 = arith.select %593, %597, %598 : vector<2x128xi1>, vector<2x128xf32>
    %cst_191 = arith.constant 0.000000e+00 : f32
    %600 = vector.broadcast %cst_191 : f32 to vector<2x32xf32>
    %cst_192 = arith.constant 0.000000e+00 : f32
    %601 = vector.broadcast %cst_192 : f32 to vector<2x128xf32>
    %cst_193 = arith.constant 0.000000e+00 : f32
    %602 = vector.broadcast %cst_193 : f32 to vector<2x128xf32>
    %603 = arith.truncf %580 : vector<2x32xf32> to vector<2x32xbf16>
    %c0_194 = arith.constant 0 : index
    %c0_195 = arith.constant 0 : index
    %604 = vector.load %arg15[%c0_194, %c0_195] : memref<32x128xbf16, #tpu.memory_space<vmem>>, vector<32x128xbf16>
    %cst_196 = arith.constant dense<0.000000e+00> : vector<2x128xf32>
    %605 = tpu.matmul %603, %604, %cst_196 {dimension_numbers = #tpu.dot_dimension_numbers<[1], [0], [0], [1], [0, 0, 1, 1], [], []>} : vector<2x32xbf16>, vector<32x128xbf16>, vector<2x128xf32> -> vector<2x128xf32>
    %c0_197 = arith.constant 0 : index
    %c0_198 = arith.constant 0 : index
    %606 = vector.load %arg16[%c0_197, %c0_198] : memref<1x128xf32, #tpu.memory_space<vmem>>, vector<1x128xf32>
    %607 = vector.broadcast %606 : vector<1x128xf32> to vector<2x128xf32>
    %608 = arith.addf %605, %607 : vector<2x128xf32>
    %609 = arith.addf %608, %601 : vector<2x128xf32>
    %610 = arith.mulf %609, %596 : vector<2x128xf32>
    %611 = arith.negf %610 : vector<2x128xf32>
    %612 = math.exp %611 : vector<2x128xf32>
    %cst_199 = arith.constant 1.000000e+00 : f32
    %613 = vector.broadcast %cst_199 : f32 to vector<2x128xf32>
    %614 = arith.addf %613, %612 : vector<2x128xf32>
    %615 = arith.divf %613, %614 : vector<2x128xf32>
    %616 = arith.mulf %615, %596 : vector<2x128xf32>
    %617 = arith.addf %616, %599 : vector<2x128xf32>
    %618 = vector.extract_strided_slice %617 {offsets = [0, 0], sizes = [2, 32], strides = [1, 1]} : vector<2x128xf32> to vector<2x32xf32>
    %619 = vector.extract_strided_slice %617 {offsets = [0, 32], sizes = [2, 32], strides = [1, 1]} : vector<2x128xf32> to vector<2x32xf32>
    %620 = vector.extract_strided_slice %617 {offsets = [0, 64], sizes = [2, 32], strides = [1, 1]} : vector<2x128xf32> to vector<2x32xf32>
    %621 = vector.extract_strided_slice %617 {offsets = [0, 96], sizes = [2, 32], strides = [1, 1]} : vector<2x128xf32> to vector<2x32xf32>
    %622 = arith.mulf %619, %600 : vector<2x32xf32>
    %623 = arith.mulf %618, %620 : vector<2x32xf32>
    %624 = arith.addf %622, %623 : vector<2x32xf32>
    %625 = math.tanh %624 : vector<2x32xf32>
    %626 = arith.mulf %621, %625 : vector<2x32xf32>
    %627 = arith.truncf %626 : vector<2x32xf32> to vector<2x32xbf16>
    %c0_200 = arith.constant 0 : index
    %c0_201 = arith.constant 0 : index
    %628 = vector.load %arg17[%c0_200, %c0_201] : memref<32x256xbf16, #tpu.memory_space<vmem>>, vector<32x256xbf16>
    %cst_202 = arith.constant dense<0.000000e+00> : vector<2x256xf32>
    %629 = tpu.matmul %627, %628, %cst_202 {dimension_numbers = #tpu.dot_dimension_numbers<[1], [0], [0], [1], [0, 0, 1, 1], [], []>} : vector<2x32xbf16>, vector<32x256xbf16>, vector<2x256xf32> -> vector<2x256xf32>
    %630 = vector.extract_strided_slice %629 {offsets = [0, 0], sizes = [2, 128], strides = [1, 1]} : vector<2x256xf32> to vector<2x128xf32>
    %631 = vector.extract_strided_slice %629 {offsets = [0, 128], sizes = [2, 128], strides = [1, 1]} : vector<2x256xf32> to vector<2x128xf32>
    %c0_203 = arith.constant 0 : index
    %c0_204 = arith.constant 0 : index
    %632 = vector.load %arg19[%c0_203, %c0_204] : memref<1x128xf32, #tpu.memory_space<vmem>>, vector<1x128xf32>
    %633 = vector.broadcast %632 : vector<1x128xf32> to vector<2x128xf32>
    %634 = arith.addf %631, %633 : vector<2x128xf32>
    %635 = arith.addf %634, %602 : vector<2x128xf32>
    %636 = arith.mulf %635, %596 : vector<2x128xf32>
    %637 = arith.negf %636 : vector<2x128xf32>
    %638 = math.exp %637 : vector<2x128xf32>
    %cst_205 = arith.constant 1.000000e+00 : f32
    %639 = vector.broadcast %cst_205 : f32 to vector<2x128xf32>
    %640 = arith.addf %639, %638 : vector<2x128xf32>
    %641 = arith.divf %639, %640 : vector<2x128xf32>
    %642 = arith.mulf %641, %596 : vector<2x128xf32>
    %643 = arith.addf %642, %599 : vector<2x128xf32>
    %644 = vector.extract_strided_slice %643 {offsets = [0, 0], sizes = [2, 32], strides = [1, 1]} : vector<2x128xf32> to vector<2x32xf32>
    %645 = vector.extract_strided_slice %643 {offsets = [0, 32], sizes = [2, 32], strides = [1, 1]} : vector<2x128xf32> to vector<2x32xf32>
    %646 = vector.extract_strided_slice %643 {offsets = [0, 64], sizes = [2, 32], strides = [1, 1]} : vector<2x128xf32> to vector<2x32xf32>
    %647 = vector.extract_strided_slice %643 {offsets = [0, 96], sizes = [2, 32], strides = [1, 1]} : vector<2x128xf32> to vector<2x32xf32>
    %648 = arith.mulf %645, %600 : vector<2x32xf32>
    %649 = arith.mulf %644, %646 : vector<2x32xf32>
    %650 = arith.addf %648, %649 : vector<2x32xf32>
    %651 = math.tanh %650 : vector<2x32xf32>
    %652 = arith.mulf %647, %651 : vector<2x32xf32>
    %653 = arith.truncf %652 : vector<2x32xf32> to vector<2x32xbf16>
    %c0_206 = arith.constant 0 : index
    %c0_207 = arith.constant 0 : index
    %654 = vector.load %arg18[%c0_206, %c0_207] : memref<32x128xbf16, #tpu.memory_space<vmem>>, vector<32x128xbf16>
    %cst_208 = arith.constant dense<0.000000e+00> : vector<2x128xf32>
    %655 = tpu.matmul %653, %654, %cst_208 {dimension_numbers = #tpu.dot_dimension_numbers<[1], [0], [0], [1], [0, 0, 1, 1], [], []>} : vector<2x32xbf16>, vector<32x128xbf16>, vector<2x128xf32> -> vector<2x128xf32>
    %656 = arith.truncf %587 : vector<2x32xf32> to vector<2x32xbf16>
    %c0_209 = arith.constant 0 : index
    %c0_210 = arith.constant 0 : index
    %657 = vector.load %arg15[%c0_209, %c0_210] : memref<32x128xbf16, #tpu.memory_space<vmem>>, vector<32x128xbf16>
    %cst_211 = arith.constant dense<0.000000e+00> : vector<2x128xf32>
    %658 = tpu.matmul %656, %657, %cst_211 {dimension_numbers = #tpu.dot_dimension_numbers<[1], [0], [0], [1], [0, 0, 1, 1], [], []>} : vector<2x32xbf16>, vector<32x128xbf16>, vector<2x128xf32> -> vector<2x128xf32>
    %c0_212 = arith.constant 0 : index
    %c0_213 = arith.constant 0 : index
    %659 = vector.load %arg16[%c0_212, %c0_213] : memref<1x128xf32, #tpu.memory_space<vmem>>, vector<1x128xf32>
    %660 = vector.broadcast %659 : vector<1x128xf32> to vector<2x128xf32>
    %661 = arith.addf %658, %660 : vector<2x128xf32>
    %662 = arith.addf %661, %630 : vector<2x128xf32>
    %663 = arith.mulf %662, %596 : vector<2x128xf32>
    %664 = arith.negf %663 : vector<2x128xf32>
    %665 = math.exp %664 : vector<2x128xf32>
    %cst_214 = arith.constant 1.000000e+00 : f32
    %666 = vector.broadcast %cst_214 : f32 to vector<2x128xf32>
    %667 = arith.addf %666, %665 : vector<2x128xf32>
    %668 = arith.divf %666, %667 : vector<2x128xf32>
    %669 = arith.mulf %668, %596 : vector<2x128xf32>
    %670 = arith.addf %669, %599 : vector<2x128xf32>
    %671 = vector.extract_strided_slice %670 {offsets = [0, 0], sizes = [2, 32], strides = [1, 1]} : vector<2x128xf32> to vector<2x32xf32>
    %672 = vector.extract_strided_slice %670 {offsets = [0, 32], sizes = [2, 32], strides = [1, 1]} : vector<2x128xf32> to vector<2x32xf32>
    %673 = vector.extract_strided_slice %670 {offsets = [0, 64], sizes = [2, 32], strides = [1, 1]} : vector<2x128xf32> to vector<2x32xf32>
    %674 = vector.extract_strided_slice %670 {offsets = [0, 96], sizes = [2, 32], strides = [1, 1]} : vector<2x128xf32> to vector<2x32xf32>
    %675 = arith.mulf %672, %624 : vector<2x32xf32>
    %676 = arith.mulf %671, %673 : vector<2x32xf32>
    %677 = arith.addf %675, %676 : vector<2x32xf32>
    %678 = math.tanh %677 : vector<2x32xf32>
    %679 = arith.mulf %674, %678 : vector<2x32xf32>
    %680 = arith.truncf %679 : vector<2x32xf32> to vector<2x32xbf16>
    %c0_215 = arith.constant 0 : index
    %c0_216 = arith.constant 0 : index
    %681 = vector.load %arg17[%c0_215, %c0_216] : memref<32x256xbf16, #tpu.memory_space<vmem>>, vector<32x256xbf16>
    %cst_217 = arith.constant dense<0.000000e+00> : vector<2x256xf32>
    %682 = tpu.matmul %680, %681, %cst_217 {dimension_numbers = #tpu.dot_dimension_numbers<[1], [0], [0], [1], [0, 0, 1, 1], [], []>} : vector<2x32xbf16>, vector<32x256xbf16>, vector<2x256xf32> -> vector<2x256xf32>
    %683 = vector.extract_strided_slice %682 {offsets = [0, 128], sizes = [2, 128], strides = [1, 1]} : vector<2x256xf32> to vector<2x128xf32>
    %c0_218 = arith.constant 0 : index
    %c0_219 = arith.constant 0 : index
    %684 = vector.load %arg19[%c0_218, %c0_219] : memref<1x128xf32, #tpu.memory_space<vmem>>, vector<1x128xf32>
    %685 = vector.broadcast %684 : vector<1x128xf32> to vector<2x128xf32>
    %686 = arith.addf %683, %685 : vector<2x128xf32>
    %687 = arith.addf %686, %655 : vector<2x128xf32>
    %688 = arith.mulf %687, %596 : vector<2x128xf32>
    %689 = arith.negf %688 : vector<2x128xf32>
    %690 = math.exp %689 : vector<2x128xf32>
    %cst_220 = arith.constant 1.000000e+00 : f32
    %691 = vector.broadcast %cst_220 : f32 to vector<2x128xf32>
    %692 = arith.addf %691, %690 : vector<2x128xf32>
    %693 = arith.divf %691, %692 : vector<2x128xf32>
    %694 = arith.mulf %693, %596 : vector<2x128xf32>
    %695 = arith.addf %694, %599 : vector<2x128xf32>
    %696 = vector.extract_strided_slice %695 {offsets = [0, 0], sizes = [2, 32], strides = [1, 1]} : vector<2x128xf32> to vector<2x32xf32>
    %697 = vector.extract_strided_slice %695 {offsets = [0, 32], sizes = [2, 32], strides = [1, 1]} : vector<2x128xf32> to vector<2x32xf32>
    %698 = vector.extract_strided_slice %695 {offsets = [0, 64], sizes = [2, 32], strides = [1, 1]} : vector<2x128xf32> to vector<2x32xf32>
    %699 = vector.extract_strided_slice %695 {offsets = [0, 96], sizes = [2, 32], strides = [1, 1]} : vector<2x128xf32> to vector<2x32xf32>
    %700 = arith.mulf %697, %650 : vector<2x32xf32>
    %701 = arith.mulf %696, %698 : vector<2x32xf32>
    %702 = arith.addf %700, %701 : vector<2x32xf32>
    %703 = math.tanh %702 : vector<2x32xf32>
    %704 = arith.mulf %699, %703 : vector<2x32xf32>
    %705 = tpu.concatenate %652, %704 in 1 : vector<2x32xf32>, vector<2x32xf32> -> vector<2x64xf32>
    %c0_221 = arith.constant 0 : index
    %c0_222 = arith.constant 0 : index
    %706 = vector.load %arg20[%c0_221, %c0_222] : memref<2x64xf32, #tpu.memory_space<vmem>>, vector<2x64xf32>
    tpu.vector_store %arg20[%c0_221, %c0_222], %705 {strides = array<i32>} : memref<2x64xf32, #tpu.memory_space<vmem>>, vector<2x64xf32>,
    %707 = tpu.concatenate %679, %704 in 0 : vector<2x32xf32>, vector<2x32xf32> -> vector<4x32xf32>
    %c0_223 = arith.constant 0 : index
    %c0_224 = arith.constant 0 : index
    %708 = vector.load %arg21[%c0_223, %c0_224] : memref<4x32xf32, #tpu.memory_space<vmem>>, vector<4x32xf32>
    tpu.vector_store %arg21[%c0_223, %c0_224], %707 {strides = array<i32>} : memref<4x32xf32, #tpu.memory_space<vmem>>, vector<4x32xf32>,
    %709 = tpu.concatenate %677, %702 in 0 : vector<2x32xf32>, vector<2x32xf32> -> vector<4x32xf32>
    %c0_225 = arith.constant 0 : index
    %c0_226 = arith.constant 0 : index
    %710 = vector.load %arg22[%c0_225, %c0_226] : memref<4x32xf32, #tpu.memory_space<vmem>>, vector<4x32xf32>
    tpu.vector_store %arg22[%c0_225, %c0_226], %709 {strides = array<i32>} : memref<4x32xf32, #tpu.memory_space<vmem>>, vector<4x32xf32>,
    return
  }
}

</mosaic_0001>

<llo_original>
// kernel: encoder_forward.1
$region0: #{encoder_forward.1}
  #allocation0 [shape = 'u32[]', space=smem, size = 0x4, offset = 0x4, fixed_abs, tag = 'smem constant byte address 0x4 - core index']
  #allocation1 [shape = 'u32[144,128]{1,0:T(1,128)}', space=vmem, size = 0x12000, scoped, tag = 'internal scratch']
  %s0 = inlined_call_operand.vmem [shape: f32[2,120], index: 0, kind: input, shape index: {}]
  %s1 = inlined_call_operand.hbm [shape: bf16[15,256], index: 1, kind: input, shape index: {}]
  %s2 = inlined_call_operand.hbm [shape: f32[1,256], index: 2, kind: input, shape index: {}]
  %s3 = inlined_call_operand.hbm [shape: bf16[64,512], index: 3, kind: input, shape index: {}]
  %s4 = inlined_call_operand.vmem [shape: bf16[64,256], index: 4, kind: input, shape index: {}]
  %s5 = inlined_call_operand.hbm [shape: f32[1,256], index: 5, kind: input, shape index: {}]
  %s6 = inlined_call_operand.hbm [shape: bf16[64,64], index: 6, kind: input, shape index: {}]
  %s7 = inlined_call_operand.hbm [shape: f32[1,64], index: 7, kind: input, shape index: {}]
  %s8 = inlined_call_operand.hbm [shape: bf16[64,256], index: 8, kind: input, shape index: {}]
  %s9 = inlined_call_operand.vmem [shape: f32[1,256], index: 9, kind: input, shape index: {}]
  %s10 = inlined_call_operand.hbm [shape: bf16[64,512], index: 10, kind: input, shape index: {}]
  %s11 = inlined_call_operand.hbm [shape: bf16[64,256], index: 11, kind: input, shape index: {}]
  %s12 = inlined_call_operand.hbm [shape: f32[1,256], index: 12, kind: input, shape index: {}]
  %s13 = inlined_call_operand.vmem [shape: bf16[64,32], index: 13, kind: input, shape index: {}]
  %s14 = inlined_call_operand.hbm [shape: f32[1,32], index: 14, kind: input, shape index: {}]
  %s15 = inlined_call_operand.vmem [shape: bf16[32,128], index: 15, kind: input, shape index: {}]
  %s16 = inlined_call_operand.hbm [shape: f32[1,128], index: 16, kind: input, shape index: {}]
  %s17 = inlined_call_operand.vmem [shape: bf16[32,256], index: 17, kind: input, shape index: {}]
  %s18 = inlined_call_operand.vmem [shape: bf16[32,128], index: 18, kind: input, shape index: {}]
  %s19 = inlined_call_operand.vmem [shape: f32[1,128], index: 19, kind: input, shape index: {}]
  %s20 = inlined_call_operand.vmem [shape: f32[2,64], index: 20, kind: output, shape index: {0}]
  %s21 = inlined_call_operand.hbm [shape: f32[4,32], index: 21, kind: output, shape index: {1}]
  %s22 = inlined_call_operand.hbm [shape: f32[4,32], index: 22, kind: output, shape index: {2}]
  %23 = xla_tuple %s20, %s21, %s22
  %s24 = sld [smem:[#allocation0]]
  $region154: #{encoder_forward.1} parent=0
    _
  %s26 = ssub.s32 1, %s24
  %s27 = scalar_select 0, %s26, %s24
  $region1: #{encoder_forward.1} parent=0
    #allocation2 [shape = 'u8[8192]{0}', space=vmem, size = 0x2000, scoped, tag = 'input window, operand 1, single buffered']
    #allocation3 [shape = 's32[1]{0}', space=sflag, size = 0x4, scoped, tag = 'scoped memory for encoder_forward.1']
    #allocation4 [shape = 's32[1]{0}', space=sflag, size = 0x4, scoped, tag = 'scoped memory for encoder_forward.1']
    #allocation5 [shape = 'u8[1024]{0}', space=vmem, size = 0x400, scoped, tag = 'input window, operand 2, single buffered']
    #allocation6 [shape = 's32[1]{0}', space=sflag, size = 0x4, scoped, tag = 'scoped memory for encoder_forward.1']
    #allocation7 [shape = 'u8[65536]{0}', space=vmem, size = 0x10000, scoped, tag = 'input window, operand 3, single buffered']
    #allocation8 [shape = 'u8[1024]{0}', space=vmem, size = 0x400, scoped, tag = 'input window, operand 5, single buffered']
    #allocation9 [shape = 's32[1]{0}', space=sflag, size = 0x4, scoped, tag = 'scoped memory for encoder_forward.1']
    #allocation10 [shape = 'u8[16384]{0}', space=vmem, size = 0x4000, scoped, tag = 'input window, operand 6, single buffered']
    #allocation11 [shape = 'u8[512]{0}', space=vmem, size = 0x400, scoped, tag = 'input window, operand 7, single buffered']
    #allocation12 [shape = 's32[1]{0}', space=sflag, size = 0x4, scoped, tag = 'scoped memory for encoder_forward.1']
    #allocation13 [shape = 'u8[32768]{0}', space=vmem, size = 0x8000, scoped, tag = 'input window, operand 8, single buffered']
    #allocation14 [shape = 'u8[65536]{0}', space=vmem, size = 0x10000, scoped, tag = 'input window, operand 10, single buffered']
    #allocation15 [shape = 's32[1]{0}', space=sflag, size = 0x4, scoped, tag = 'scoped memory for encoder_forward.1']
    #allocation16 [shape = 'u8[32768]{0}', space=vmem, size = 0x8000, scoped, tag = 'input window, operand 11, single buffered']
    #allocation17 [shape = 'u8[1024]{0}', space=vmem, size = 0x400, scoped, tag = 'input window, operand 12, single buffered']
    #allocation18 [shape = 's32[1]{0}', space=sflag, size = 0x4, scoped, tag = 'scoped memory for encoder_forward.1']
    #allocation19 [shape = 'u8[512]{0}', space=vmem, size = 0x400, scoped, tag = 'input window, operand 14, single buffered']
    #allocation20 [shape = 'u8[512]{0}', space=vmem, size = 0x400, scoped, tag = 'input window, operand 16, single buffered']
    #allocation21 [shape = 's32[1]{0}', space=sflag, size = 0x4, scoped, tag = 'scoped memory for encoder_forward.1']
    #allocation22 [shape = 'u8[2048]{0}', space=vmem, size = 0x800, scoped, tag = 'output window, operand 1, single buffered']
    #allocation23 [shape = 'u8[2048]{0}', space=vmem, size = 0x800, scoped, tag = 'output window, operand 2, single buffered']
    #allocation24 [shape = 's32[1]{0}', space=sflag, size = 0x4, scoped, tag = 'scoped memory for encoder_forward.1']
    %28 = vsyncpa [#allocation3], 0
    %29 = vsyncpa [#allocation6], 0
    %30 = vsyncpa [#allocation9], 0
    %31 = vsyncpa [#allocation12], 0
    %32 = vsyncpa [#allocation15], 0
    %33 = vsyncpa [#allocation18], 0
    %34 = vsyncpa [#allocation21], 0
    %35 = vsyncpa [#allocation4], 0
    %36 = vsyncpa [#allocation24], 0
    // Predicated region
    $region2: #{encoder_forward.1} parent=1 // pred_check
      _
    $region3: #{encoder_forward.1} parent=1 // pred_check_branch
      %38 = sbr.rel (0) target = $region5
    $region4: #{encoder_forward.1} parent=1 // pred_region
      _
    $region5: #{encoder_forward.1} parent=1 // pred_fallthru
      _
    // Predicated region
    $region6: #{encoder_forward.1} parent=1 // pred_check
      _
    $region7: #{encoder_forward.1} parent=1 // pred_check_branch
      %40 = sbr.rel (0) target = $region9
    $region8: #{encoder_forward.1} parent=1 // pred_region
      %s42 = ssub.s32 256, 256
      %43 = vsyncadd [#allocation3], %s42
      %s44 = sshll.u32 [#allocation2], 4
      %s45 = int_to_ptr.vmem [resolvable:$true] %s44
      %50 = dma.hbm_to_vmem [thread:$0]  %s1, 256, %s45, [#allocation3], 128, 128, 8
    $region9: #{encoder_forward.1} parent=1 // pred_fallthru
      _
    // Predicated region
    $region10: #{encoder_forward.1} parent=1 // pred_check
      _
    $region11: #{encoder_forward.1} parent=1 // pred_check_branch
      %52 = sbr.rel (0) target = $region13
    $region12: #{encoder_forward.1} parent=1 // pred_region
      %s54 = ssub.s32 32, 32
      %55 = vsyncadd [#allocation6], %s54
      %s57 = sshll.u32 [#allocation5], 4
      %s58 = int_to_ptr.vmem [resolvable:$true] %s57
      %60 = dma.hbm_to_vmem [thread:$0]  %s2, 32, %s58, [#allocation6]
    $region13: #{encoder_forward.1} parent=1 // pred_fallthru
      _
    // Predicated region
    $region14: #{encoder_forward.1} parent=1 // pred_check
      _
    $region15: #{encoder_forward.1} parent=1 // pred_check_branch
      %62 = sbr.rel (0) target = $region17
    $region16: #{encoder_forward.1} parent=1 // pred_region
      %s64 = ssub.s32 2048, 2048
      %65 = vsyncadd [#allocation6], %s64
      %s66 = sshll.u32 [#allocation7], 4
      %s67 = int_to_ptr.vmem [resolvable:$true] %s66
      %72 = dma.hbm_to_vmem [thread:$0]  %s3, 2048, %s67, [#allocation6], 256, 256, 16
    $region17: #{encoder_forward.1} parent=1 // pred_fallthru
      _
    // Predicated region
    $region18: #{encoder_forward.1} parent=1 // pred_check
      _
    $region19: #{encoder_forward.1} parent=1 // pred_check_branch
      %74 = sbr.rel (0) target = $region21
    $region20: #{encoder_forward.1} parent=1 // pred_region
      _
    $region21: #{encoder_forward.1} parent=1 // pred_fallthru
      _
    // Predicated region
    $region22: #{encoder_forward.1} parent=1 // pred_check
      _
    $region23: #{encoder_forward.1} parent=1 // pred_check_branch
      %76 = sbr.rel (0) target = $region25
    $region24: #{encoder_forward.1} parent=1 // pred_region
      %s78 = ssub.s32 32, 32
      %79 = vsyncadd [#allocation9], %s78
      %s81 = sshll.u32 [#allocation8], 4
      %s82 = int_to_ptr.vmem [resolvable:$true] %s81
      %84 = dma.hbm_to_vmem [thread:$0]  %s5, 32, %s82, [#allocation9]
    $region25: #{encoder_forward.1} parent=1 // pred_fallthru
      _
    // Predicated region
    $region26: #{encoder_forward.1} parent=1 // pred_check
      _
    $region27: #{encoder_forward.1} parent=1 // pred_check_branch
      %86 = sbr.rel (0) target = $region29
    $region28: #{encoder_forward.1} parent=1 // pred_region
      %s88 = ssub.s32 512, 512
      %89 = vsyncadd [#allocation9], %s88
      %s90 = sshll.u32 [#allocation10], 4
      %s91 = int_to_ptr.vmem [resolvable:$true] %s90
      %96 = dma.hbm_to_vmem [thread:$0]  %s6, 512, %s91, [#allocation9], 64, 64, 4
    $region29: #{encoder_forward.1} parent=1 // pred_fallthru
      _
    // Predicated region
    $region30: #{encoder_forward.1} parent=1 // pred_check
      _
    $region31: #{encoder_forward.1} parent=1 // pred_check_branch
      %98 = sbr.rel (0) target = $region33
    $region32: #{encoder_forward.1} parent=1 // pred_region
      %s100 = ssub.s32 16, 16
      %101 = vsyncadd [#allocation12], %s100
      %s103 = sshll.u32 [#allocation11], 4
      %s104 = int_to_ptr.vmem [resolvable:$true] %s103
      %106 = dma.hbm_to_vmem [thread:$0]  %s7, 16, %s104, [#allocation12]
    $region33: #{encoder_forward.1} parent=1 // pred_fallthru
      _
    // Predicated region
    $region34: #{encoder_forward.1} parent=1 // pred_check
      _
    $region35: #{encoder_forward.1} parent=1 // pred_check_branch
      %108 = sbr.rel (0) target = $region37
    $region36: #{encoder_forward.1} parent=1 // pred_region
      %s110 = ssub.s32 1024, 1024
      %111 = vsyncadd [#allocation12], %s110
      %s112 = sshll.u32 [#allocation13], 4
      %s113 = int_to_ptr.vmem [resolvable:$true] %s112
      %118 = dma.hbm_to_vmem [thread:$0]  %s8, 1024, %s113, [#allocation12], 128, 128, 8
    $region37: #{encoder_forward.1} parent=1 // pred_fallthru
      _
    // Predicated region
    $region38: #{encoder_forward.1} parent=1 // pred_check
      _
    $region39: #{encoder_forward.1} parent=1 // pred_check_branch
      %120 = sbr.rel (0) target = $region41
    $region40: #{encoder_forward.1} parent=1 // pred_region
      _
    $region41: #{encoder_forward.1} parent=1 // pred_fallthru
      _
    // Predicated region
    $region42: #{encoder_forward.1} parent=1 // pred_check
      _
    $region43: #{encoder_forward.1} parent=1 // pred_check_branch
      %122 = sbr.rel (0) target = $region45
    $region44: #{encoder_forward.1} parent=1 // pred_region
      %s124 = ssub.s32 2048, 2048
      %125 = vsyncadd [#allocation15], %s124
      %s126 = sshll.u32 [#allocation14], 4
      %s127 = int_to_ptr.vmem [resolvable:$true] %s126
      %132 = dma.hbm_to_vmem [thread:$0]  %s10, 2048, %s127, [#allocation15], 256, 256, 16
    $region45: #{encoder_forward.1} parent=1 // pred_fallthru
      _
    // Predicated region
    $region46: #{encoder_forward.1} parent=1 // pred_check
      _
    $region47: #{encoder_forward.1} parent=1 // pred_check_branch
      %134 = sbr.rel (0) target = $region49
    $region48: #{encoder_forward.1} parent=1 // pred_region
      %s136 = ssub.s32 1024, 1024
      %137 = vsyncadd [#allocation15], %s136
      %s138 = sshll.u32 [#allocation16], 4
      %s139 = int_to_ptr.vmem [resolvable:$true] %s138
      %144 = dma.hbm_to_vmem [thread:$0]  %s11, 1024, %s139, [#allocation15], 128, 128, 8
    $region49: #{encoder_forward.1} parent=1 // pred_fallthru
      _
    // Predicated region
    $region50: #{encoder_forward.1} parent=1 // pred_check
      _
    $region51: #{encoder_forward.1} parent=1 // pred_check_branch
      %146 = sbr.rel (0) target = $region53
    $region52: #{encoder_forward.1} parent=1 // pred_region
      %s148 = ssub.s32 32, 32
      %149 = vsyncadd [#allocation18], %s148
      %s151 = sshll.u32 [#allocation17], 4
      %s152 = int_to_ptr.vmem [resolvable:$true] %s151
      %154 = dma.hbm_to_vmem [thread:$0]  %s12, 32, %s152, [#allocation18]
    $region53: #{encoder_forward.1} parent=1 // pred_fallthru
      _
    // Predicated region
    $region54: #{encoder_forward.1} parent=1 // pred_check
      _
    $region55: #{encoder_forward.1} parent=1 // pred_check_branch
      %156 = sbr.rel (0) target = $region57
    $region56: #{encoder_forward.1} parent=1 // pred_region
      _
    $region57: #{encoder_forward.1} parent=1 // pred_fallthru
      _
    // Predicated region
    $region58: #{encoder_forward.1} parent=1 // pred_check
      _
    $region59: #{encoder_forward.1} parent=1 // pred_check_branch
      %158 = sbr.rel (0) target = $region61
    $region60: #{encoder_forward.1} parent=1 // pred_region
      %s160 = ssub.s32 16, 16
      %161 = vsyncadd [#allocation18], %s160
      %s163 = sshll.u32 [#allocation19], 4
      %s164 = int_to_ptr.vmem [resolvable:$true] %s163
      %166 = dma.hbm_to_vmem [thread:$0]  %s14, 16, %s164, [#allocation18]
    $region61: #{encoder_forward.1} parent=1 // pred_fallthru
      _
    // Predicated region
    $region62: #{encoder_forward.1} parent=1 // pred_check
      _
    $region63: #{encoder_forward.1} parent=1 // pred_check_branch
      %168 = sbr.rel (0) target = $region65
    $region64: #{encoder_forward.1} parent=1 // pred_region
      _
    $region65: #{encoder_forward.1} parent=1 // pred_fallthru
      _
    // Predicated region
    $region66: #{encoder_forward.1} parent=1 // pred_check
      _
    $region67: #{encoder_forward.1} parent=1 // pred_check_branch
      %170 = sbr.rel (0) target = $region69
    $region68: #{encoder_forward.1} parent=1 // pred_region
      %s172 = ssub.s32 16, 16
      %173 = vsyncadd [#allocation21], %s172
      %s175 = sshll.u32 [#allocation20], 4
      %s176 = int_to_ptr.vmem [resolvable:$true] %s175
      %178 = dma.hbm_to_vmem [thread:$0]  %s16, 16, %s176, [#allocation21]
    $region69: #{encoder_forward.1} parent=1 // pred_fallthru
      _
    // Predicated region
    $region70: #{encoder_forward.1} parent=1 // pred_check
      _
    $region71: #{encoder_forward.1} parent=1 // pred_check_branch
      %180 = sbr.rel (0) target = $region73
    $region72: #{encoder_forward.1} parent=1 // pred_region
      _
    $region73: #{encoder_forward.1} parent=1 // pred_fallthru
      _
    // Predicated region
    $region74: #{encoder_forward.1} parent=1 // pred_check
      _
    $region75: #{encoder_forward.1} parent=1 // pred_check_branch
      %182 = sbr.rel (0) target = $region77
    $region76: #{encoder_forward.1} parent=1 // pred_region
      _
    $region77: #{encoder_forward.1} parent=1 // pred_fallthru
      _
    // Predicated region
    $region78: #{encoder_forward.1} parent=1 // pred_check
      _
    $region79: #{encoder_forward.1} parent=1 // pred_check_branch
      %184 = sbr.rel (0) target = $region81
    $region80: #{encoder_forward.1} parent=1 // pred_region
      _
    $region81: #{encoder_forward.1} parent=1 // pred_fallthru
      _
    // Predicated region
    $region82: #{encoder_forward.1} parent=1 // pred_check
      _
    $region83: #{encoder_forward.1} parent=1 // pred_check_branch
      %186 = sbr.rel (0) target = $region85
    $region84: #{encoder_forward.1} parent=1 // pred_region
      %187 = dma.done [#allocation3], 256
    $region85: #{encoder_forward.1} parent=1 // pred_fallthru
      _
    // Predicated region
    $region86: #{encoder_forward.1} parent=1 // pred_check
      _
    $region87: #{encoder_forward.1} parent=1 // pred_check_branch
      %189 = sbr.rel (0) target = $region89
    $region88: #{encoder_forward.1} parent=1 // pred_region
      %190 = dma.done [#allocation6], 32
    $region89: #{encoder_forward.1} parent=1 // pred_fallthru
      _
    // Predicated region
    $region90: #{encoder_forward.1} parent=1 // pred_check
      _
    $region91: #{encoder_forward.1} parent=1 // pred_check_branch
      %192 = sbr.rel (0) target = $region93
    $region92: #{encoder_forward.1} parent=1 // pred_region
      %193 = dma.done [#allocation6], 2048
    $region93: #{encoder_forward.1} parent=1 // pred_fallthru
      _
    // Predicated region
    $region94: #{encoder_forward.1} parent=1 // pred_check
      _
    $region95: #{encoder_forward.1} parent=1 // pred_check_branch
      %195 = sbr.rel (0) target = $region97
    $region96: #{encoder_forward.1} parent=1 // pred_region
      %196 = dma.done [#allocation9], 32
    $region97: #{encoder_forward.1} parent=1 // pred_fallthru
      _
    // Predicated region
    $region98: #{encoder_forward.1} parent=1 // pred_check
      _
    $region99: #{encoder_forward.1} parent=1 // pred_check_branch
      %198 = sbr.rel (0) target = $region101
    $region100: #{encoder_forward.1} parent=1 // pred_region
      %199 = dma.done [#allocation9], 512
    $region101: #{encoder_forward.1} parent=1 // pred_fallthru
      _
    // Predicated region
    $region102: #{encoder_forward.1} parent=1 // pred_check
      _
    $region103: #{encoder_forward.1} parent=1 // pred_check_branch
      %201 = sbr.rel (0) target = $region105
    $region104: #{encoder_forward.1} parent=1 // pred_region
      %202 = dma.done [#allocation12], 16
    $region105: #{encoder_forward.1} parent=1 // pred_fallthru
      _
    // Predicated region
    $region106: #{encoder_forward.1} parent=1 // pred_check
      _
    $region107: #{encoder_forward.1} parent=1 // pred_check_branch
      %204 = sbr.rel (0) target = $region109
    $region108: #{encoder_forward.1} parent=1 // pred_region
      %205 = dma.done [#allocation12], 1024
    $region109: #{encoder_forward.1} parent=1 // pred_fallthru
      _
    // Predicated region
    $region110: #{encoder_forward.1} parent=1 // pred_check
      _
    $region111: #{encoder_forward.1} parent=1 // pred_check_branch
      %207 = sbr.rel (0) target = $region113
    $region112: #{encoder_forward.1} parent=1 // pred_region
      %208 = dma.done [#allocation15], 2048
    $region113: #{encoder_forward.1} parent=1 // pred_fallthru
      _
    // Predicated region
    $region114: #{encoder_forward.1} parent=1 // pred_check
      _
    $region115: #{encoder_forward.1} parent=1 // pred_check_branch
      %210 = sbr.rel (0) target = $region117
    $region116: #{encoder_forward.1} parent=1 // pred_region
      %211 = dma.done [#allocation15], 1024
    $region117: #{encoder_forward.1} parent=1 // pred_fallthru
      _
    // Predicated region
    $region118: #{encoder_forward.1} parent=1 // pred_check
      _
    $region119: #{encoder_forward.1} parent=1 // pred_check_branch
      %213 = sbr.rel (0) target = $region121
    $region120: #{encoder_forward.1} parent=1 // pred_region
      %214 = dma.done [#allocation18], 32
    $region121: #{encoder_forward.1} parent=1 // pred_fallthru
      _
    // Predicated region
    $region122: #{encoder_forward.1} parent=1 // pred_check
      _
    $region123: #{encoder_forward.1} parent=1 // pred_check_branch
      %216 = sbr.rel (0) target = $region125
    $region124: #{encoder_forward.1} parent=1 // pred_region
      %217 = dma.done [#allocation18], 16
    $region125: #{encoder_forward.1} parent=1 // pred_fallthru
      _
    // Predicated region
    $region126: #{encoder_forward.1} parent=1 // pred_check
      _
    $region127: #{encoder_forward.1} parent=1 // pred_check_branch
      %219 = sbr.rel (0) target = $region129
    $region128: #{encoder_forward.1} parent=1 // pred_region
      %220 = dma.done [#allocation21], 16
    $region129: #{encoder_forward.1} parent=1 // pred_fallthru
      _
    %v222 = vld [vmem:[%s0] sm:$0x3]
    %v223 = vlaneseq
    %v224 = vand.u32 %v223, 127
    %v225 = vadd.s32 %v224, 128
    %vm226 = vcmp.ge.s32.totalorder %v224, 128
    %vm227 = vcmp.ge.s32.totalorder %v225, 128
    %vm228 = vcmp.lt.s32.totalorder %v224, 192
    %vm229 = vcmp.lt.s32.totalorder %v225, 192
    %vm230 = vmand %vm226, %vm228
    %vm231 = vmand %vm227, %vm229
    %v232 = vsel %vm230, 2.0, 1.0
    %v233 = vsel %vm231, 2.0, 1.0
    %v234 = vsel %vm230, -1.0, 0.0
    %v235 = vsel %vm231, -1.0, 0.0
    %v236 = vpack.c.bf16 %v222, %v222
    %v237 = vld [vmem:[#allocation2] sm:$0xff]
    %v238 = vld [vmem:[#allocation2 + $0x8] sm:$0xff]
    %v239 = vld [vmem:[#allocation5] sm:$0x3]
    %v241 = vlaneseq
    %v242 = vshrl.u32 %v241, 7
    %v243 = vsub.s32 0, %v242
    %v244 = vrot.slane %v239, %v243
    %v245 = vlaneseq
    %v246 = vshrl.u32 %v245, 7
    %v247 = vsub.s32 1, %v246
    %v248 = vrot.slane %v239, %v247
    %v253 = vunpack.c.l.b16 %v237
    %v254 = vunpack.c.h.b16 %v237
    %v255 = vunpack.c.l.b16 %v238
    %v256 = vunpack.c.h.b16 %v238
    %v257 = vpack.c.b16 %v255, %v253
    %v258 = vpack.c.b16 %v256, %v254
    %vm259 = vcmask 121856
    %v261 = vsel %vm259, %v236, 0
    %vm263 = vcmask 1046528
    %vm264 = vcmask 1047552
    %v265 = vsel %vm263, 4294967295, 65535
    %v266 = vsel %vm264, %v265, 0
    %v268 = vand.u32 %v257, %v266
    %v271 = vand.u32 %v258, %v266
    %273 = vmatprep.subr.bf16.mxu0 %v271
    %274 = vmatpush1.bf16.msra.mxu0 %v268
    %275 = vmatprep.subr.bf16.mxu0 0
    %276 = vmatpush1.bf16.msra.mxu0 0
    %277 = vmatprep.subr.bf16.mxu0 0
    %278 = vmatpush1.bf16.msra.mxu0 0
    %279 = vmatprep.subr.bf16.mxu0 0
    %280 = vmatpush1.bf16.msra.mxu0 0
    %281 = vmatprep.subr.bf16.mxu0 0
    %282 = vmatpush1.bf16.msra.mxu0 0
    %283 = vmatprep.subr.bf16.mxu0 0
    %284 = vmatpush1.bf16.msra.mxu0 0
    %285 = vmatprep.subr.bf16.mxu0 0
    %286 = vmatpush1.bf16.msra.mxu0 0
    %287 = vmatprep.subr.bf16.mxu0 0
    %288 = vmatpush1.bf16.msra.mxu0 0
    %289 = vmatprep.subr.bf16.mxu0 0
    %290 = vmatpush1.bf16.msra.mxu0 0
    %291 = vmatprep.subr.bf16.mxu0 0
    %292 = vmatpush1.bf16.msra.mxu0 0
    %293 = vmatprep.subr.bf16.mxu0 0
    %294 = vmatpush1.bf16.msra.mxu0 0
    %295 = vmatprep.subr.bf16.mxu0 0
    %296 = vmatpush1.bf16.msra.mxu0 0
    %297 = vmatprep.subr.bf16.mxu0 0
    %298 = vmatpush1.bf16.msra.mxu0 0
    %299 = vmatprep.subr.bf16.mxu0 0
    %300 = vmatpush1.bf16.msra.mxu0 0
    %301 = vmatprep.subr.bf16.mxu0 0
    %302 = vmatpush1.bf16.msra.mxu0 0
    %303 = vmatprep.subr.bf16.mxu0 0
    %304 = vmatpush1.bf16.msra.mxu0 0
    %305 = vmatprep.mubr.bf16.mxu0 0
    %306 = vmatmul.mubr.bf16.gmra.mrb[0].mxu0 %v261
    %v307 = vpop.f32.mrb[0].mxu0
    %v308 = vadd.f32 %v244, %v307
    %v309 = vpop.f32.mrb[0].mxu0
    %v310 = vadd.f32 %v248, %v309
    %v311 = vpop.f32.mrb[0].mxu0
    %v312 = vpop.f32.mrb[0].mxu0
    %313 = vdwg.mxu0
    %v314 = vadd.f32 %v308, 0.0
    %v315 = vadd.f32 %v310, 0.0
    %v316 = vmul.f32 %v314, %v232
    %v317 = vmul.f32 %v315, %v233
    %v318 = vxor.u32 %v316, 2147483648
    %v319 = vxor.u32 %v317, 2147483648
    %v320 = vmul.f32 %v318, 1.442695
    %v321 = vpow.pop %v320
    %v322 = vmul.f32 %v319, 1.442695
    %v323 = vpow.pop %v322
    %v324 = vadd.f32 %v321, 1.0
    %v325 = vadd.f32 %v323, 1.0
    %v326 = vrcp.pop %v324
    %v327 = vmul.f32 1.0, %v326
    %v328 = vrcp.pop %v325
    %v329 = vmul.f32 1.0, %v328
    %v330 = vmul.f32 %v327, %v232
    %v331 = vmul.f32 %v329, %v233
    %v332 = vadd.f32 %v330, %v234
    %v333 = vadd.f32 %v331, %v235
    %v334 = vmul.f32 %v332, 0.0
    %v335 = vmul.f32 %v332, %v333
    %337 = vrot.lane.b32.xlu0 %v335, 64
    %v338 = vpop.permute.xlu0 %337
    %v340 = vadd.f32 %v334, %v338
    %v341 = vtanh.pop %v340
    %v342 = vmul.f32 %v333, %v341
    %v343 = vpack.c.bf16 %v342, %v342
    %v344 = vld [vmem:[#allocation7] sm:$0xff]
    %v345 = vld [vmem:[#allocation7 + $0x8] sm:$0xff]
    %v346 = vld [vmem:[#allocation7 + $0x10] sm:$0xff]
    %v347 = vld [vmem:[#allocation7 + $0x18] sm:$0xff]
    %v348 = vld [vmem:[#allocation7 + $0x20] sm:$0xff]
    %v349 = vld [vmem:[#allocation7 + $0x28] sm:$0xff]
    %v350 = vld [vmem:[#allocation7 + $0x30] sm:$0xff]
    %v351 = vld [vmem:[#allocation7 + $0x38] sm:$0xff]
    %v352 = vld [vmem:[#allocation7 + $0x40] sm:$0xff]
    %v353 = vld [vmem:[#allocation7 + $0x48] sm:$0xff]
    %v354 = vld [vmem:[#allocation7 + $0x50] sm:$0xff]
    %v355 = vld [vmem:[#allocation7 + $0x58] sm:$0xff]
    %v356 = vld [vmem:[#allocation7 + $0x60] sm:$0xff]
    %v357 = vld [vmem:[#allocation7 + $0x68] sm:$0xff]
    %v358 = vld [vmem:[#allocation7 + $0x70] sm:$0xff]
    %v359 = vld [vmem:[#allocation7 + $0x78] sm:$0xff]
    %361 = vrot.lane.b32.xlu0 %v343, 64
    %v362 = vpop.permute.xlu0 %361
    %v379 = vunpack.c.l.b16 %v344
    %v380 = vunpack.c.h.b16 %v344
    %v381 = vunpack.c.l.b16 %v345
    %v382 = vunpack.c.h.b16 %v345
    %v383 = vunpack.c.l.b16 %v346
    %v384 = vunpack.c.h.b16 %v346
    %v385 = vunpack.c.l.b16 %v347
    %v386 = vunpack.c.h.b16 %v347
    %v387 = vunpack.c.l.b16 %v348
    %v388 = vunpack.c.h.b16 %v348
    %v389 = vunpack.c.l.b16 %v349
    %v390 = vunpack.c.h.b16 %v349
    %v391 = vunpack.c.l.b16 %v350
    %v392 = vunpack.c.h.b16 %v350
    %v393 = vunpack.c.l.b16 %v351
    %v394 = vunpack.c.h.b16 %v351
    %v395 = vunpack.c.l.b16 %v352
    %v396 = vunpack.c.h.b16 %v352
    %v397 = vunpack.c.l.b16 %v353
    %v398 = vunpack.c.h.b16 %v353
    %v399 = vunpack.c.l.b16 %v354
    %v400 = vunpack.c.h.b16 %v354
    %v401 = vunpack.c.l.b16 %v355
    %v402 = vunpack.c.h.b16 %v355
    %v403 = vunpack.c.l.b16 %v356
    %v404 = vunpack.c.h.b16 %v356
    %v405 = vunpack.c.l.b16 %v357
    %v406 = vunpack.c.h.b16 %v357
    %v407 = vunpack.c.l.b16 %v358
    %v408 = vunpack.c.h.b16 %v358
    %v409 = vunpack.c.l.b16 %v359
    %v410 = vunpack.c.h.b16 %v359
    %v411 = vpack.c.b16 %v383, %v379
    %v412 = vpack.c.b16 %v384, %v380
    %v413 = vpack.c.b16 %v385, %v381
    %v414 = vpack.c.b16 %v386, %v382
    %v415 = vpack.c.b16 %v391, %v387
    %v416 = vpack.c.b16 %v392, %v388
    %v417 = vpack.c.b16 %v393, %v389
    %v418 = vpack.c.b16 %v394, %v390
    %v419 = vpack.c.b16 %v399, %v395
    %v420 = vpack.c.b16 %v400, %v396
    %v421 = vpack.c.b16 %v401, %v397
    %v422 = vpack.c.b16 %v402, %v398
    %v423 = vpack.c.b16 %v407, %v403
    %v424 = vpack.c.b16 %v408, %v404
    %v425 = vpack.c.b16 %v409, %v405
    %v426 = vpack.c.b16 %v410, %v406
    %vm443 = vcmask 523264
    %v445 = vsel %vm443, %v362, 0
    %447 = vmatprep.subr.bf16.mxu0 %v412
    %448 = vmatpush1.bf16.msra.mxu0 %v411
    %449 = vmatprep.subr.bf16.mxu0 %v416
    %450 = vmatpush1.bf16.msra.mxu0 %v415
    %451 = vmatprep.subr.bf16.mxu0 %v420
    %452 = vmatpush1.bf16.msra.mxu0 %v419
    %453 = vmatprep.subr.bf16.mxu0 %v424
    %454 = vmatpush1.bf16.msra.mxu0 %v423
    %455 = vmatprep.subr.bf16.mxu0 0
    %456 = vmatpush1.bf16.msra.mxu0 0
    %457 = vmatprep.subr.bf16.mxu0 0
    %458 = vmatpush1.bf16.msra.mxu0 0
    %459 = vmatprep.subr.bf16.mxu0 0
    %460 = vmatpush1.bf16.msra.mxu0 0
    %461 = vmatprep.subr.bf16.mxu0 0
    %462 = vmatpush1.bf16.msra.mxu0 0
    %463 = vmatprep.subr.bf16.mxu0 0
    %464 = vmatpush1.bf16.msra.mxu0 0
    %465 = vmatprep.subr.bf16.mxu0 0
    %466 = vmatpush1.bf16.msra.mxu0 0
    %467 = vmatprep.subr.bf16.mxu0 0
    %468 = vmatpush1.bf16.msra.mxu0 0
    %469 = vmatprep.subr.bf16.mxu0 0
    %470 = vmatpush1.bf16.msra.mxu0 0
    %471 = vmatprep.subr.bf16.mxu0 0
    %472 = vmatpush1.bf16.msra.mxu0 0
    %473 = vmatprep.subr.bf16.mxu0 0
    %474 = vmatpush1.bf16.msra.mxu0 0
    %475 = vmatprep.subr.bf16.mxu0 0
    %476 = vmatpush1.bf16.msra.mxu0 0
    %477 = vmatprep.subr.bf16.mxu0 0
    %478 = vmatpush1.bf16.msra.mxu0 0
    %479 = vmatprep.mubr.bf16.mxu0 0
    %480 = vmatmul.mubr.bf16.gmra.mrb[0].mxu0 %v445
    %v481 = vpop.f32.mrb[0].mxu0
    %v482 = vadd.f32 0.0, %v481
    %v483 = vpop.f32.mrb[0].mxu0
    %v484 = vadd.f32 0.0, %v483
    %v485 = vpop.f32.mrb[0].mxu0
    %v486 = vpop.f32.mrb[0].mxu0
    %487 = vdwg.mxu0
    %488 = vmatprep.subr.bf16.mxu0 %v414
    %489 = vmatpush1.bf16.msra.mxu0 %v413
    %490 = vmatprep.subr.bf16.mxu0 %v418
    %491 = vmatpush1.bf16.msra.mxu0 %v417
    %492 = vmatprep.subr.bf16.mxu0 %v422
    %493 = vmatpush1.bf16.msra.mxu0 %v421
    %494 = vmatprep.subr.bf16.mxu0 %v426
    %495 = vmatpush1.bf16.msra.mxu0 %v425
    %496 = vmatprep.subr.bf16.mxu0 0
    %497 = vmatpush1.bf16.msra.mxu0 0
    %498 = vmatprep.subr.bf16.mxu0 0
    %499 = vmatpush1.bf16.msra.mxu0 0
    %500 = vmatprep.subr.bf16.mxu0 0
    %501 = vmatpush1.bf16.msra.mxu0 0
    %502 = vmatprep.subr.bf16.mxu0 0
    %503 = vmatpush1.bf16.msra.mxu0 0
    %504 = vmatprep.subr.bf16.mxu0 0
    %505 = vmatpush1.bf16.msra.mxu0 0
    %506 = vmatprep.subr.bf16.mxu0 0
    %507 = vmatpush1.bf16.msra.mxu0 0
    %508 = vmatprep.subr.bf16.mxu0 0
    %509 = vmatpush1.bf16.msra.mxu0 0
    %510 = vmatprep.subr.bf16.mxu0 0
    %511 = vmatpush1.bf16.msra.mxu0 0
    %512 = vmatprep.subr.bf16.mxu0 0
    %513 = vmatpush1.bf16.msra.mxu0 0
    %514 = vmatprep.subr.bf16.mxu0 0
    %515 = vmatpush1.bf16.msra.mxu0 0
    %516 = vmatprep.subr.bf16.mxu0 0
    %517 = vmatpush1.bf16.msra.mxu0 0
    %518 = vmatprep.subr.bf16.mxu0 0
    %519 = vmatpush1.bf16.msra.mxu0 0
    %520 = vmatprep.mubr.bf16.mxu0 0
    %521 = vmatmul.mubr.bf16.gmra.mrb[0].mxu0 %v445
    %v522 = vpop.f32.mrb[0].mxu0
    %v523 = vadd.f32 0.0, %v522
    %v524 = vpop.f32.mrb[0].mxu0
    %v525 = vadd.f32 0.0, %v524
    %v526 = vpop.f32.mrb[0].mxu0
    %v527 = vpop.f32.mrb[0].mxu0
    %528 = vdwg.mxu0
    %v529 = vld [vmem:[#allocation8] sm:$0x3]
    %v531 = vlaneseq
    %v532 = vshrl.u32 %v531, 7
    %v533 = vsub.s32 0, %v532
    %v534 = vrot.slane %v529, %v533
    %v535 = vlaneseq
    %v536 = vshrl.u32 %v535, 7
    %v537 = vsub.s32 1, %v536
    %v538 = vrot.slane %v529, %v537
    %v541 = vadd.f32 %v523, %v534
    %v542 = vadd.f32 %v525, %v538
    %v543 = vadd.f32 %v541, 0.0
    %v544 = vadd.f32 %v542, 0.0
    %v545 = vmul.f32 %v543, %v232
    %v546 = vmul.f32 %v544, %v233
    %v547 = vxor.u32 %v545, 2147483648
    %v548 = vxor.u32 %v546, 2147483648
    %v549 = vmul.f32 %v547, 1.442695
    %v550 = vpow.pop %v549
    %v551 = vmul.f32 %v548, 1.442695
    %v552 = vpow.pop %v551
    %v553 = vadd.f32 %v550, 1.0
    %v554 = vadd.f32 %v552, 1.0
    %v555 = vrcp.pop %v553
    %v556 = vmul.f32 1.0, %v555
    %v557 = vrcp.pop %v554
    %v558 = vmul.f32 1.0, %v557
    %v559 = vmul.f32 %v556, %v232
    %v560 = vmul.f32 %v558, %v233
    %v561 = vadd.f32 %v559, %v234
    %v562 = vadd.f32 %v560, %v235
    %v563 = vmul.f32 %v561, 0.0
    %v564 = vmul.f32 %v561, %v562
    %566 = vrot.lane.b32.xlu0 %v564, 64
    %v567 = vpop.permute.xlu0 %566
    %v569 = vadd.f32 %v563, %v567
    %v570 = vtanh.pop %v569
    %v571 = vmul.f32 %v562, %v570
    %v572 = vpack.c.bf16 %v571, %v571
    %v573 = vld [vmem:[%s4] sm:$0xff]
    %v574 = vld [vmem:[%s4 + $0x8] sm:$0xff]
    %v575 = vld [vmem:[%s4 + $0x10] sm:$0xff]
    %v576 = vld [vmem:[%s4 + $0x18] sm:$0xff]
    %v577 = vld [vmem:[%s4 + $0x20] sm:$0xff]
    %v578 = vld [vmem:[%s4 + $0x28] sm:$0xff]
    %v579 = vld [vmem:[%s4 + $0x30] sm:$0xff]
    %v580 = vld [vmem:[%s4 + $0x38] sm:$0xff]
    %582 = vrot.lane.b32.xlu0 %v572, 64
    %v583 = vpop.permute.xlu0 %582
    %v592 = vunpack.c.l.b16 %v573
    %v593 = vunpack.c.h.b16 %v573
    %v594 = vunpack.c.l.b16 %v574
    %v595 = vunpack.c.h.b16 %v574
    %v596 = vunpack.c.l.b16 %v575
    %v597 = vunpack.c.h.b16 %v575
    %v598 = vunpack.c.l.b16 %v576
    %v599 = vunpack.c.h.b16 %v576
    %v600 = vunpack.c.l.b16 %v577
    %v601 = vunpack.c.h.b16 %v577
    %v602 = vunpack.c.l.b16 %v578
    %v603 = vunpack.c.h.b16 %v578
    %v604 = vunpack.c.l.b16 %v579
    %v605 = vunpack.c.h.b16 %v579
    %v606 = vunpack.c.l.b16 %v580
    %v607 = vunpack.c.h.b16 %v580
    %v608 = vpack.c.b16 %v594, %v592
    %v609 = vpack.c.b16 %v595, %v593
    %v610 = vpack.c.b16 %v598, %v596
    %v611 = vpack.c.b16 %v599, %v597
    %v612 = vpack.c.b16 %v602, %v600
    %v613 = vpack.c.b16 %v603, %v601
    %v614 = vpack.c.b16 %v606, %v604
    %v615 = vpack.c.b16 %v607, %v605
    %v625 = vsel %vm443, %v583, 0
    %627 = vmatprep.subr.bf16.mxu0 %v609
    %628 = vmatpush1.bf16.msra.mxu0 %v608
    %629 = vmatprep.subr.bf16.mxu0 %v611
    %630 = vmatpush1.bf16.msra.mxu0 %v610
    %631 = vmatprep.subr.bf16.mxu0 %v613
    %632 = vmatpush1.bf16.msra.mxu0 %v612
    %633 = vmatprep.subr.bf16.mxu0 %v615
    %634 = vmatpush1.bf16.msra.mxu0 %v614
    %635 = vmatprep.subr.bf16.mxu0 0
    %636 = vmatpush1.bf16.msra.mxu0 0
    %637 = vmatprep.subr.bf16.mxu0 0
    %638 = vmatpush1.bf16.msra.mxu0 0
    %639 = vmatprep.subr.bf16.mxu0 0
    %640 = vmatpush1.bf16.msra.mxu0 0
    %641 = vmatprep.subr.bf16.mxu0 0
    %642 = vmatpush1.bf16.msra.mxu0 0
    %643 = vmatprep.subr.bf16.mxu0 0
    %644 = vmatpush1.bf16.msra.mxu0 0
    %645 = vmatprep.subr.bf16.mxu0 0
    %646 = vmatpush1.bf16.msra.mxu0 0
    %647 = vmatprep.subr.bf16.mxu0 0
    %648 = vmatpush1.bf16.msra.mxu0 0
    %649 = vmatprep.subr.bf16.mxu0 0
    %650 = vmatpush1.bf16.msra.mxu0 0
    %651 = vmatprep.subr.bf16.mxu0 0
    %652 = vmatpush1.bf16.msra.mxu0 0
    %653 = vmatprep.subr.bf16.mxu0 0
    %654 = vmatpush1.bf16.msra.mxu0 0
    %655 = vmatprep.subr.bf16.mxu0 0
    %656 = vmatpush1.bf16.msra.mxu0 0
    %657 = vmatprep.subr.bf16.mxu0 0
    %658 = vmatpush1.bf16.msra.mxu0 0
    %659 = vmatprep.mubr.bf16.mxu0 0
    %660 = vmatmul.mubr.bf16.gmra.mrb[0].mxu0 %v625
    %v661 = vpop.f32.mrb[0].mxu0
    %v662 = vadd.f32 0.0, %v661
    %v663 = vpop.f32.mrb[0].mxu0
    %v664 = vadd.f32 0.0, %v663
    %v665 = vpop.f32.mrb[0].mxu0
    %v666 = vpop.f32.mrb[0].mxu0
    %667 = vdwg.mxu0
    %669 = vrot.lane.b32.xlu0 %v236, 113
    %v670 = vpop.permute.xlu0 %669
    %v672 = vsel %vm259, %v670, 0
    %674 = vmatprep.subr.bf16.mxu0 %v271
    %675 = vmatpush1.bf16.msra.mxu0 %v268
    %676 = vmatprep.subr.bf16.mxu0 0
    %677 = vmatpush1.bf16.msra.mxu0 0
    %678 = vmatprep.subr.bf16.mxu0 0
    %679 = vmatpush1.bf16.msra.mxu0 0
    %680 = vmatprep.subr.bf16.mxu0 0
    %681 = vmatpush1.bf16.msra.mxu0 0
    %682 = vmatprep.subr.bf16.mxu0 0
    %683 = vmatpush1.bf16.msra.mxu0 0
    %684 = vmatprep.subr.bf16.mxu0 0
    %685 = vmatpush1.bf16.msra.mxu0 0
    %686 = vmatprep.subr.bf16.mxu0 0
    %687 = vmatpush1.bf16.msra.mxu0 0
    %688 = vmatprep.subr.bf16.mxu0 0
    %689 = vmatpush1.bf16.msra.mxu0 0
    %690 = vmatprep.subr.bf16.mxu0 0
    %691 = vmatpush1.bf16.msra.mxu0 0
    %692 = vmatprep.subr.bf16.mxu0 0
    %693 = vmatpush1.bf16.msra.mxu0 0
    %694 = vmatprep.subr.bf16.mxu0 0
    %695 = vmatpush1.bf16.msra.mxu0 0
    %696 = vmatprep.subr.bf16.mxu0 0
    %697 = vmatpush1.bf16.msra.mxu0 0
    %698 = vmatprep.subr.bf16.mxu0 0
    %699 = vmatpush1.bf16.msra.mxu0 0
    %700 = vmatprep.subr.bf16.mxu0 0
    %701 = vmatpush1.bf16.msra.mxu0 0
    %702 = vmatprep.subr.bf16.mxu0 0
    %703 = vmatpush1.bf16.msra.mxu0 0
    %704 = vmatprep.subr.bf16.mxu0 0
    %705 = vmatpush1.bf16.msra.mxu0 0
    %706 = vmatprep.mubr.bf16.mxu0 0
    %707 = vmatmul.mubr.bf16.gmra.mrb[0].mxu0 %v672
    %v708 = vpop.f32.mrb[0].mxu0
    %v709 = vadd.f32 %v244, %v708
    %v710 = vpop.f32.mrb[0].mxu0
    %v711 = vadd.f32 %v248, %v710
    %v712 = vpop.f32.mrb[0].mxu0
    %v713 = vpop.f32.mrb[0].mxu0
    %714 = vdwg.mxu0
    %v715 = vadd.f32 %v709, %v482
    %v716 = vadd.f32 %v711, %v484
    %v717 = vmul.f32 %v715, %v232
    %v718 = vmul.f32 %v716, %v233
    %v719 = vxor.u32 %v717, 2147483648
    %v720 = vxor.u32 %v718, 2147483648
    %v721 = vmul.f32 %v719, 1.442695
    %v722 = vpow.pop %v721
    %v723 = vmul.f32 %v720, 1.442695
    %v724 = vpow.pop %v723
    %v725 = vadd.f32 %v722, 1.0
    %v726 = vadd.f32 %v724, 1.0
    %v727 = vrcp.pop %v725
    %v728 = vmul.f32 1.0, %v727
    %v729 = vrcp.pop %v726
    %v730 = vmul.f32 1.0, %v729
    %v731 = vmul.f32 %v728, %v232
    %v732 = vmul.f32 %v730, %v233
    %v733 = vadd.f32 %v731, %v234
    %v734 = vadd.f32 %v732, %v235
    %v735 = vmul.f32 %v733, %v340
    %v736 = vmul.f32 %v733, %v734
    %738 = vrot.lane.b32.xlu0 %v736, 64
    %v739 = vpop.permute.xlu0 %738
    %v741 = vadd.f32 %v735, %v739
    %v742 = vtanh.pop %v741
    %v743 = vmul.f32 %v734, %v742
    %v744 = vpack.c.bf16 %v743, %v743
    %746 = vrot.lane.b32.xlu0 %v744, 64
    %v747 = vpop.permute.xlu0 %746
    %v749 = vsel %vm443, %v747, 0
    %751 = vmatprep.subr.bf16.mxu0 %v412
    %752 = vmatpush1.bf16.msra.mxu0 %v411
    %753 = vmatprep.subr.bf16.mxu0 %v416
    %754 = vmatpush1.bf16.msra.mxu0 %v415
    %755 = vmatprep.subr.bf16.mxu0 %v420
    %756 = vmatpush1.bf16.msra.mxu0 %v419
    %757 = vmatprep.subr.bf16.mxu0 %v424
    %758 = vmatpush1.bf16.msra.mxu0 %v423
    %759 = vmatprep.subr.bf16.mxu0 0
    %760 = vmatpush1.bf16.msra.mxu0 0
    %761 = vmatprep.subr.bf16.mxu0 0
    %762 = vmatpush1.bf16.msra.mxu0 0
    %763 = vmatprep.subr.bf16.mxu0 0
    %764 = vmatpush1.bf16.msra.mxu0 0
    %765 = vmatprep.subr.bf16.mxu0 0
    %766 = vmatpush1.bf16.msra.mxu0 0
    %767 = vmatprep.subr.bf16.mxu0 0
    %768 = vmatpush1.bf16.msra.mxu0 0
    %769 = vmatprep.subr.bf16.mxu0 0
    %770 = vmatpush1.bf16.msra.mxu0 0
    %771 = vmatprep.subr.bf16.mxu0 0
    %772 = vmatpush1.bf16.msra.mxu0 0
    %773 = vmatprep.subr.bf16.mxu0 0
    %774 = vmatpush1.bf16.msra.mxu0 0
    %775 = vmatprep.subr.bf16.mxu0 0
    %776 = vmatpush1.bf16.msra.mxu0 0
    %777 = vmatprep.subr.bf16.mxu0 0
    %778 = vmatpush1.bf16.msra.mxu0 0
    %779 = vmatprep.subr.bf16.mxu0 0
    %780 = vmatpush1.bf16.msra.mxu0 0
    %781 = vmatprep.subr.bf16.mxu0 0
    %782 = vmatpush1.bf16.msra.mxu0 0
    %783 = vmatprep.mubr.bf16.mxu0 0
    %784 = vmatmul.mubr.bf16.gmra.mrb[0].mxu0 %v749
    %v785 = vpop.f32.mrb[0].mxu0
    %v786 = vadd.f32 0.0, %v785
    %v787 = vpop.f32.mrb[0].mxu0
    %v788 = vadd.f32 0.0, %v787
    %v789 = vpop.f32.mrb[0].mxu0
    %v790 = vpop.f32.mrb[0].mxu0
    %791 = vdwg.mxu0
    %792 = vmatprep.subr.bf16.mxu0 %v414
    %793 = vmatpush1.bf16.msra.mxu0 %v413
    %794 = vmatprep.subr.bf16.mxu0 %v418
    %795 = vmatpush1.bf16.msra.mxu0 %v417
    %796 = vmatprep.subr.bf16.mxu0 %v422
    %797 = vmatpush1.bf16.msra.mxu0 %v421
    %798 = vmatprep.subr.bf16.mxu0 %v426
    %799 = vmatpush1.bf16.msra.mxu0 %v425
    %800 = vmatprep.subr.bf16.mxu0 0
    %801 = vmatpush1.bf16.msra.mxu0 0
    %802 = vmatprep.subr.bf16.mxu0 0
    %803 = vmatpush1.bf16.msra.mxu0 0
    %804 = vmatprep.subr.bf16.mxu0 0
    %805 = vmatpush1.bf16.msra.mxu0 0
    %806 = vmatprep.subr.bf16.mxu0 0
    %807 = vmatpush1.bf16.msra.mxu0 0
    %808 = vmatprep.subr.bf16.mxu0 0
    %809 = vmatpush1.bf16.msra.mxu0 0
    %810 = vmatprep.subr.bf16.mxu0 0
    %811 = vmatpush1.bf16.msra.mxu0 0
    %812 = vmatprep.subr.bf16.mxu0 0
    %813 = vmatpush1.bf16.msra.mxu0 0
    %814 = vmatprep.subr.bf16.mxu0 0
    %815 = vmatpush1.bf16.msra.mxu0 0
    %816 = vmatprep.subr.bf16.mxu0 0
    %817 = vmatpush1.bf16.msra.mxu0 0
    %818 = vmatprep.subr.bf16.mxu0 0
    %819 = vmatpush1.bf16.msra.mxu0 0
    %820 = vmatprep.subr.bf16.mxu0 0
    %821 = vmatpush1.bf16.msra.mxu0 0
    %822 = vmatprep.subr.bf16.mxu0 0
    %823 = vmatpush1.bf16.msra.mxu0 0
    %824 = vmatprep.mubr.bf16.mxu0 0
    %825 = vmatmul.mubr.bf16.gmra.mrb[0].mxu0 %v749
    %v826 = vpop.f32.mrb[0].mxu0
    %v827 = vadd.f32 0.0, %v826
    %v828 = vpop.f32.mrb[0].mxu0
    %v829 = vadd.f32 0.0, %v828
    %v830 = vpop.f32.mrb[0].mxu0
    %v831 = vpop.f32.mrb[0].mxu0
    %832 = vdwg.mxu0
    %v833 = vadd.f32 %v827, %v534
    %v834 = vadd.f32 %v829, %v538
    %v835 = vadd.f32 %v833, %v662
    %v836 = vadd.f32 %v834, %v664
    %v837 = vmul.f32 %v835, %v232
    %v838 = vmul.f32 %v836, %v233
    %v839 = vxor.u32 %v837, 2147483648
    %v840 = vxor.u32 %v838, 2147483648
    %v841 = vmul.f32 %v839, 1.442695
    %v842 = vpow.pop %v841
    %v843 = vmul.f32 %v840, 1.442695
    %v844 = vpow.pop %v843
    %v845 = vadd.f32 %v842, 1.0
    %v846 = vadd.f32 %v844, 1.0
    %v847 = vrcp.pop %v845
    %v848 = vmul.f32 1.0, %v847
    %v849 = vrcp.pop %v846
    %v850 = vmul.f32 1.0, %v849
    %v851 = vmul.f32 %v848, %v232
    %v852 = vmul.f32 %v850, %v233
    %v853 = vadd.f32 %v851, %v234
    %v854 = vadd.f32 %v852, %v235
    %v855 = vmul.f32 %v853, %v569
    %v856 = vmul.f32 %v853, %v854
    %858 = vrot.lane.b32.xlu0 %v856, 64
    %v859 = vpop.permute.xlu0 %858
    %v861 = vadd.f32 %v855, %v859
    %v862 = vtanh.pop %v861
    %v863 = vmul.f32 %v854, %v862
    %v864 = vpack.c.bf16 %v863, %v863
    %866 = vrot.lane.b32.xlu0 %v864, 64
    %v867 = vpop.permute.xlu0 %866
    %v869 = vsel %vm443, %v867, 0
    %871 = vmatprep.subr.bf16.mxu0 %v609
    %872 = vmatpush1.bf16.msra.mxu0 %v608
    %873 = vmatprep.subr.bf16.mxu0 %v611
    %874 = vmatpush1.bf16.msra.mxu0 %v610
    %875 = vmatprep.subr.bf16.mxu0 %v613
    %876 = vmatpush1.bf16.msra.mxu0 %v612
    %877 = vmatprep.subr.bf16.mxu0 %v615
    %878 = vmatpush1.bf16.msra.mxu0 %v614
    %879 = vmatprep.subr.bf16.mxu0 0
    %880 = vmatpush1.bf16.msra.mxu0 0
    %881 = vmatprep.subr.bf16.mxu0 0
    %882 = vmatpush1.bf16.msra.mxu0 0
    %883 = vmatprep.subr.bf16.mxu0 0
    %884 = vmatpush1.bf16.msra.mxu0 0
    %885 = vmatprep.subr.bf16.mxu0 0
    %886 = vmatpush1.bf16.msra.mxu0 0
    %887 = vmatprep.subr.bf16.mxu0 0
    %888 = vmatpush1.bf16.msra.mxu0 0
    %889 = vmatprep.subr.bf16.mxu0 0
    %890 = vmatpush1.bf16.msra.mxu0 0
    %891 = vmatprep.subr.bf16.mxu0 0
    %892 = vmatpush1.bf16.msra.mxu0 0
    %893 = vmatprep.subr.bf16.mxu0 0
    %894 = vmatpush1.bf16.msra.mxu0 0
    %895 = vmatprep.subr.bf16.mxu0 0
    %896 = vmatpush1.bf16.msra.mxu0 0
    %897 = vmatprep.subr.bf16.mxu0 0
    %898 = vmatpush1.bf16.msra.mxu0 0
    %899 = vmatprep.subr.bf16.mxu0 0
    %900 = vmatpush1.bf16.msra.mxu0 0
    %901 = vmatprep.subr.bf16.mxu0 0
    %902 = vmatpush1.bf16.msra.mxu0 0
    %903 = vmatprep.mubr.bf16.mxu0 0
    %904 = vmatmul.mubr.bf16.gmra.mrb[0].mxu0 %v869
    %v905 = vpop.f32.mrb[0].mxu0
    %v906 = vadd.f32 0.0, %v905
    %v907 = vpop.f32.mrb[0].mxu0
    %v908 = vadd.f32 0.0, %v907
    %v909 = vpop.f32.mrb[0].mxu0
    %v910 = vpop.f32.mrb[0].mxu0
    %911 = vdwg.mxu0
    %912 = vrot.lane.b32.xlu0 %v236, 98
    %v913 = vpop.permute.xlu0 %912
    %v915 = vsel %vm259, %v913, 0
    %917 = vmatprep.subr.bf16.mxu0 %v271
    %918 = vmatpush1.bf16.msra.mxu0 %v268
    %919 = vmatprep.subr.bf16.mxu0 0
    %920 = vmatpush1.bf16.msra.mxu0 0
    %921 = vmatprep.subr.bf16.mxu0 0
    %922 = vmatpush1.bf16.msra.mxu0 0
    %923 = vmatprep.subr.bf16.mxu0 0
    %924 = vmatpush1.bf16.msra.mxu0 0
    %925 = vmatprep.subr.bf16.mxu0 0
    %926 = vmatpush1.bf16.msra.mxu0 0
    %927 = vmatprep.subr.bf16.mxu0 0
    %928 = vmatpush1.bf16.msra.mxu0 0
    %929 = vmatprep.subr.bf16.mxu0 0
    %930 = vmatpush1.bf16.msra.mxu0 0
    %931 = vmatprep.subr.bf16.mxu0 0
    %932 = vmatpush1.bf16.msra.mxu0 0
    %933 = vmatprep.subr.bf16.mxu0 0
    %934 = vmatpush1.bf16.msra.mxu0 0
    %935 = vmatprep.subr.bf16.mxu0 0
    %936 = vmatpush1.bf16.msra.mxu0 0
    %937 = vmatprep.subr.bf16.mxu0 0
    %938 = vmatpush1.bf16.msra.mxu0 0
    %939 = vmatprep.subr.bf16.mxu0 0
    %940 = vmatpush1.bf16.msra.mxu0 0
    %941 = vmatprep.subr.bf16.mxu0 0
    %942 = vmatpush1.bf16.msra.mxu0 0
    %943 = vmatprep.subr.bf16.mxu0 0
    %944 = vmatpush1.bf16.msra.mxu0 0
    %945 = vmatprep.subr.bf16.mxu0 0
    %946 = vmatpush1.bf16.msra.mxu0 0
    %947 = vmatprep.subr.bf16.mxu0 0
    %948 = vmatpush1.bf16.msra.mxu0 0
    %949 = vmatprep.mubr.bf16.mxu0 0
    %950 = vmatmul.mubr.bf16.gmra.mrb[0].mxu0 %v915
    %v951 = vpop.f32.mrb[0].mxu0
    %v952 = vadd.f32 %v244, %v951
    %v953 = vpop.f32.mrb[0].mxu0
    %v954 = vadd.f32 %v248, %v953
    %v955 = vpop.f32.mrb[0].mxu0
    %v956 = vpop.f32.mrb[0].mxu0
    %957 = vdwg.mxu0
    %v958 = vadd.f32 %v952, %v786
    %v959 = vadd.f32 %v954, %v788
    %v960 = vmul.f32 %v958, %v232
    %v961 = vmul.f32 %v959, %v233
    %v962 = vxor.u32 %v960, 2147483648
    %v963 = vxor.u32 %v961, 2147483648
    %v964 = vmul.f32 %v962, 1.442695
    %v965 = vpow.pop %v964
    %v966 = vmul.f32 %v963, 1.442695
    %v967 = vpow.pop %v966
    %v968 = vadd.f32 %v965, 1.0
    %v969 = vadd.f32 %v967, 1.0
    %v970 = vrcp.pop %v968
    %v971 = vmul.f32 1.0, %v970
    %v972 = vrcp.pop %v969
    %v973 = vmul.f32 1.0, %v972
    %v974 = vmul.f32 %v971, %v232
    %v975 = vmul.f32 %v973, %v233
    %v976 = vadd.f32 %v974, %v234
    %v977 = vadd.f32 %v975, %v235
    %v978 = vmul.f32 %v976, %v741
    %v979 = vmul.f32 %v976, %v977
    %981 = vrot.lane.b32.xlu0 %v979, 64
    %v982 = vpop.permute.xlu0 %981
    %v984 = vadd.f32 %v978, %v982
    %v985 = vtanh.pop %v984
    %v986 = vmul.f32 %v977, %v985
    %v987 = vpack.c.bf16 %v986, %v986
    %989 = vrot.lane.b32.xlu0 %v987, 64
    %v990 = vpop.permute.xlu0 %989
    %v992 = vsel %vm443, %v990, 0
    %994 = vmatprep.subr.bf16.mxu0 %v412
    %995 = vmatpush1.bf16.msra.mxu0 %v411
    %996 = vmatprep.subr.bf16.mxu0 %v416
    %997 = vmatpush1.bf16.msra.mxu0 %v415
    %998 = vmatprep.subr.bf16.mxu0 %v420
    %999 = vmatpush1.bf16.msra.mxu0 %v419
    %1000 = vmatprep.subr.bf16.mxu0 %v424
    %1001 = vmatpush1.bf16.msra.mxu0 %v423
    %1002 = vmatprep.subr.bf16.mxu0 0
    %1003 = vmatpush1.bf16.msra.mxu0 0
    %1004 = vmatprep.subr.bf16.mxu0 0
    %1005 = vmatpush1.bf16.msra.mxu0 0
    %1006 = vmatprep.subr.bf16.mxu0 0
    %1007 = vmatpush1.bf16.msra.mxu0 0
    %1008 = vmatprep.subr.bf16.mxu0 0
    %1009 = vmatpush1.bf16.msra.mxu0 0
    %1010 = vmatprep.subr.bf16.mxu0 0
    %1011 = vmatpush1.bf16.msra.mxu0 0
    %1012 = vmatprep.subr.bf16.mxu0 0
    %1013 = vmatpush1.bf16.msra.mxu0 0
    %1014 = vmatprep.subr.bf16.mxu0 0
    %1015 = vmatpush1.bf16.msra.mxu0 0
    %1016 = vmatprep.subr.bf16.mxu0 0
    %1017 = vmatpush1.bf16.msra.mxu0 0
    %1018 = vmatprep.subr.bf16.mxu0 0
    %1019 = vmatpush1.bf16.msra.mxu0 0
    %1020 = vmatprep.subr.bf16.mxu0 0
    %1021 = vmatpush1.bf16.msra.mxu0 0
    %1022 = vmatprep.subr.bf16.mxu0 0
    %1023 = vmatpush1.bf16.msra.mxu0 0
    %1024 = vmatprep.subr.bf16.mxu0 0
    %1025 = vmatpush1.bf16.msra.mxu0 0
    %1026 = vmatprep.mubr.bf16.mxu0 0
    %1027 = vmatmul.mubr.bf16.gmra.mrb[0].mxu0 %v992
    %v1028 = vpop.f32.mrb[0].mxu0
    %v1029 = vadd.f32 0.0, %v1028
    %v1030 = vpop.f32.mrb[0].mxu0
    %v1031 = vadd.f32 0.0, %v1030
    %v1032 = vpop.f32.mrb[0].mxu0
    %v1033 = vpop.f32.mrb[0].mxu0
    %1034 = vdwg.mxu0
    %1035 = vmatprep.subr.bf16.mxu0 %v414
    %1036 = vmatpush1.bf16.msra.mxu0 %v413
    %1037 = vmatprep.subr.bf16.mxu0 %v418
    %1038 = vmatpush1.bf16.msra.mxu0 %v417
    %1039 = vmatprep.subr.bf16.mxu0 %v422
    %1040 = vmatpush1.bf16.msra.mxu0 %v421
    %1041 = vmatprep.subr.bf16.mxu0 %v426
    %1042 = vmatpush1.bf16.msra.mxu0 %v425
    %1043 = vmatprep.subr.bf16.mxu0 0
    %1044 = vmatpush1.bf16.msra.mxu0 0
    %1045 = vmatprep.subr.bf16.mxu0 0
    %1046 = vmatpush1.bf16.msra.mxu0 0
    %1047 = vmatprep.subr.bf16.mxu0 0
    %1048 = vmatpush1.bf16.msra.mxu0 0
    %1049 = vmatprep.subr.bf16.mxu0 0
    %1050 = vmatpush1.bf16.msra.mxu0 0
    %1051 = vmatprep.subr.bf16.mxu0 0
    %1052 = vmatpush1.bf16.msra.mxu0 0
    %1053 = vmatprep.subr.bf16.mxu0 0
    %1054 = vmatpush1.bf16.msra.mxu0 0
    %1055 = vmatprep.subr.bf16.mxu0 0
    %1056 = vmatpush1.bf16.msra.mxu0 0
    %1057 = vmatprep.subr.bf16.mxu0 0
    %1058 = vmatpush1.bf16.msra.mxu0 0
    %1059 = vmatprep.subr.bf16.mxu0 0
    %1060 = vmatpush1.bf16.msra.mxu0 0
    %1061 = vmatprep.subr.bf16.mxu0 0
    %1062 = vmatpush1.bf16.msra.mxu0 0
    %1063 = vmatprep.subr.bf16.mxu0 0
    %1064 = vmatpush1.bf16.msra.mxu0 0
    %1065 = vmatprep.subr.bf16.mxu0 0
    %1066 = vmatpush1.bf16.msra.mxu0 0
    %1067 = vmatprep.mubr.bf16.mxu0 0
    %1068 = vmatmul.mubr.bf16.gmra.mrb[0].mxu0 %v992
    %v1069 = vpop.f32.mrb[0].mxu0
    %v1070 = vadd.f32 0.0, %v1069
    %v1071 = vpop.f32.mrb[0].mxu0
    %v1072 = vadd.f32 0.0, %v1071
    %v1073 = vpop.f32.mrb[0].mxu0
    %v1074 = vpop.f32.mrb[0].mxu0
    %1075 = vdwg.mxu0
    %v1076 = vadd.f32 %v1070, %v534
    %v1077 = vadd.f32 %v1072, %v538
    %v1078 = vadd.f32 %v1076, %v906
    %v1079 = vadd.f32 %v1077, %v908
    %v1080 = vmul.f32 %v1078, %v232
    %v1081 = vmul.f32 %v1079, %v233
    %v1082 = vxor.u32 %v1080, 2147483648
    %v1083 = vxor.u32 %v1081, 2147483648
    %v1084 = vmul.f32 %v1082, 1.442695
    %v1085 = vpow.pop %v1084
    %v1086 = vmul.f32 %v1083, 1.442695
    %v1087 = vpow.pop %v1086
    %v1088 = vadd.f32 %v1085, 1.0
    %v1089 = vadd.f32 %v1087, 1.0
    %v1090 = vrcp.pop %v1088
    %v1091 = vmul.f32 1.0, %v1090
    %v1092 = vrcp.pop %v1089
    %v1093 = vmul.f32 1.0, %v1092
    %v1094 = vmul.f32 %v1091, %v232
    %v1095 = vmul.f32 %v1093, %v233
    %v1096 = vadd.f32 %v1094, %v234
    %v1097 = vadd.f32 %v1095, %v235
    %v1098 = vmul.f32 %v1096, %v861
    %v1099 = vmul.f32 %v1096, %v1097
    %1101 = vrot.lane.b32.xlu0 %v1099, 64
    %v1102 = vpop.permute.xlu0 %1101
    %v1104 = vadd.f32 %v1098, %v1102
    %v1105 = vtanh.pop %v1104
    %v1106 = vmul.f32 %v1097, %v1105
    %v1107 = vpack.c.bf16 %v1106, %v1106
    %1109 = vrot.lane.b32.xlu0 %v1107, 64
    %v1110 = vpop.permute.xlu0 %1109
    %v1112 = vsel %vm443, %v1110, 0
    %1114 = vmatprep.subr.bf16.mxu0 %v609
    %1115 = vmatpush1.bf16.msra.mxu0 %v608
    %1116 = vmatprep.subr.bf16.mxu0 %v611
    %1117 = vmatpush1.bf16.msra.mxu0 %v610
    %1118 = vmatprep.subr.bf16.mxu0 %v613
    %1119 = vmatpush1.bf16.msra.mxu0 %v612
    %1120 = vmatprep.subr.bf16.mxu0 %v615
    %1121 = vmatpush1.bf16.msra.mxu0 %v614
    %1122 = vmatprep.subr.bf16.mxu0 0
    %1123 = vmatpush1.bf16.msra.mxu0 0
    %1124 = vmatprep.subr.bf16.mxu0 0
    %1125 = vmatpush1.bf16.msra.mxu0 0
    %1126 = vmatprep.subr.bf16.mxu0 0
    %1127 = vmatpush1.bf16.msra.mxu0 0
    %1128 = vmatprep.subr.bf16.mxu0 0
    %1129 = vmatpush1.bf16.msra.mxu0 0
    %1130 = vmatprep.subr.bf16.mxu0 0
    %1131 = vmatpush1.bf16.msra.mxu0 0
    %1132 = vmatprep.subr.bf16.mxu0 0
    %1133 = vmatpush1.bf16.msra.mxu0 0
    %1134 = vmatprep.subr.bf16.mxu0 0
    %1135 = vmatpush1.bf16.msra.mxu0 0
    %1136 = vmatprep.subr.bf16.mxu0 0
    %1137 = vmatpush1.bf16.msra.mxu0 0
    %1138 = vmatprep.subr.bf16.mxu0 0
    %1139 = vmatpush1.bf16.msra.mxu0 0
    %1140 = vmatprep.subr.bf16.mxu0 0
    %1141 = vmatpush1.bf16.msra.mxu0 0
    %1142 = vmatprep.subr.bf16.mxu0 0
    %1143 = vmatpush1.bf16.msra.mxu0 0
    %1144 = vmatprep.subr.bf16.mxu0 0
    %1145 = vmatpush1.bf16.msra.mxu0 0
    %1146 = vmatprep.mubr.bf16.mxu0 0
    %1147 = vmatmul.mubr.bf16.gmra.mrb[0].mxu0 %v1112
    %v1148 = vpop.f32.mrb[0].mxu0
    %v1149 = vadd.f32 0.0, %v1148
    %v1150 = vpop.f32.mrb[0].mxu0
    %v1151 = vadd.f32 0.0, %v1150
    %v1152 = vpop.f32.mrb[0].mxu0
    %v1153 = vpop.f32.mrb[0].mxu0
    %1154 = vdwg.mxu0
    %1155 = vrot.lane.b32.xlu0 %v236, 83
    %v1156 = vpop.permute.xlu0 %1155
    %v1158 = vsel %vm259, %v1156, 0
    %1160 = vmatprep.subr.bf16.mxu0 %v271
    %1161 = vmatpush1.bf16.msra.mxu0 %v268
    %1162 = vmatprep.subr.bf16.mxu0 0
    %1163 = vmatpush1.bf16.msra.mxu0 0
    %1164 = vmatprep.subr.bf16.mxu0 0
    %1165 = vmatpush1.bf16.msra.mxu0 0
    %1166 = vmatprep.subr.bf16.mxu0 0
    %1167 = vmatpush1.bf16.msra.mxu0 0
    %1168 = vmatprep.subr.bf16.mxu0 0
    %1169 = vmatpush1.bf16.msra.mxu0 0
    %1170 = vmatprep.subr.bf16.mxu0 0
    %1171 = vmatpush1.bf16.msra.mxu0 0
    %1172 = vmatprep.subr.bf16.mxu0 0
    %1173 = vmatpush1.bf16.msra.mxu0 0
    %1174 = vmatprep.subr.bf16.mxu0 0
    %1175 = vmatpush1.bf16.msra.mxu0 0
    %1176 = vmatprep.subr.bf16.mxu0 0
    %1177 = vmatpush1.bf16.msra.mxu0 0
    %1178 = vmatprep.subr.bf16.mxu0 0
    %1179 = vmatpush1.bf16.msra.mxu0 0
    %1180 = vmatprep.subr.bf16.mxu0 0
    %1181 = vmatpush1.bf16.msra.mxu0 0
    %1182 = vmatprep.subr.bf16.mxu0 0
    %1183 = vmatpush1.bf16.msra.mxu0 0
    %1184 = vmatprep.subr.bf16.mxu0 0
    %1185 = vmatpush1.bf16.msra.mxu0 0
    %1186 = vmatprep.subr.bf16.mxu0 0
    %1187 = vmatpush1.bf16.msra.mxu0 0
    %1188 = vmatprep.subr.bf16.mxu0 0
    %1189 = vmatpush1.bf16.msra.mxu0 0
    %1190 = vmatprep.subr.bf16.mxu0 0
    %1191 = vmatpush1.bf16.msra.mxu0 0
    %1192 = vmatprep.mubr.bf16.mxu0 0
    %1193 = vmatmul.mubr.bf16.gmra.mrb[0].mxu0 %v1158
    %v1194 = vpop.f32.mrb[0].mxu0
    %v1195 = vadd.f32 %v244, %v1194
    %v1196 = vpop.f32.mrb[0].mxu0
    %v1197 = vadd.f32 %v248, %v1196
    %v1198 = vpop.f32.mrb[0].mxu0
    %v1199 = vpop.f32.mrb[0].mxu0
    %1200 = vdwg.mxu0
    %v1201 = vadd.f32 %v1195, %v1029
    %v1202 = vadd.f32 %v1197, %v1031
    %v1203 = vmul.f32 %v1201, %v232
    %v1204 = vmul.f32 %v1202, %v233
    %v1205 = vxor.u32 %v1203, 2147483648
    %v1206 = vxor.u32 %v1204, 2147483648
    %v1207 = vmul.f32 %v1205, 1.442695
    %v1208 = vpow.pop %v1207
    %v1209 = vmul.f32 %v1206, 1.442695
    %v1210 = vpow.pop %v1209
    %v1211 = vadd.f32 %v1208, 1.0
    %v1212 = vadd.f32 %v1210, 1.0
    %v1213 = vrcp.pop %v1211
    %v1214 = vmul.f32 1.0, %v1213
    %v1215 = vrcp.pop %v1212
    %v1216 = vmul.f32 1.0, %v1215
    %v1217 = vmul.f32 %v1214, %v232
    %v1218 = vmul.f32 %v1216, %v233
    %v1219 = vadd.f32 %v1217, %v234
    %v1220 = vadd.f32 %v1218, %v235
    %v1221 = vmul.f32 %v1219, %v984
    %v1222 = vmul.f32 %v1219, %v1220
    %1224 = vrot.lane.b32.xlu0 %v1222, 64
    %v1225 = vpop.permute.xlu0 %1224
    %v1227 = vadd.f32 %v1221, %v1225
    %v1228 = vtanh.pop %v1227
    %v1229 = vmul.f32 %v1220, %v1228
    %v1230 = vpack.c.bf16 %v1229, %v1229
    %1232 = vrot.lane.b32.xlu0 %v1230, 64
    %v1233 = vpop.permute.xlu0 %1232
    %v1235 = vsel %vm443, %v1233, 0
    %1237 = vmatprep.subr.bf16.mxu0 %v412
    %1238 = vmatpush1.bf16.msra.mxu0 %v411
    %1239 = vmatprep.subr.bf16.mxu0 %v416
    %1240 = vmatpush1.bf16.msra.mxu0 %v415
    %1241 = vmatprep.subr.bf16.mxu0 %v420
    %1242 = vmatpush1.bf16.msra.mxu0 %v419
    %1243 = vmatprep.subr.bf16.mxu0 %v424
    %1244 = vmatpush1.bf16.msra.mxu0 %v423
    %1245 = vmatprep.subr.bf16.mxu0 0
    %1246 = vmatpush1.bf16.msra.mxu0 0
    %1247 = vmatprep.subr.bf16.mxu0 0
    %1248 = vmatpush1.bf16.msra.mxu0 0
    %1249 = vmatprep.subr.bf16.mxu0 0
    %1250 = vmatpush1.bf16.msra.mxu0 0
    %1251 = vmatprep.subr.bf16.mxu0 0
    %1252 = vmatpush1.bf16.msra.mxu0 0
    %1253 = vmatprep.subr.bf16.mxu0 0
    %1254 = vmatpush1.bf16.msra.mxu0 0
    %1255 = vmatprep.subr.bf16.mxu0 0
    %1256 = vmatpush1.bf16.msra.mxu0 0
    %1257 = vmatprep.subr.bf16.mxu0 0
    %1258 = vmatpush1.bf16.msra.mxu0 0
    %1259 = vmatprep.subr.bf16.mxu0 0
    %1260 = vmatpush1.bf16.msra.mxu0 0
    %1261 = vmatprep.subr.bf16.mxu0 0
    %1262 = vmatpush1.bf16.msra.mxu0 0
    %1263 = vmatprep.subr.bf16.mxu0 0
    %1264 = vmatpush1.bf16.msra.mxu0 0
    %1265 = vmatprep.subr.bf16.mxu0 0
    %1266 = vmatpush1.bf16.msra.mxu0 0
    %1267 = vmatprep.subr.bf16.mxu0 0
    %1268 = vmatpush1.bf16.msra.mxu0 0
    %1269 = vmatprep.mubr.bf16.mxu0 0
    %1270 = vmatmul.mubr.bf16.gmra.mrb[0].mxu0 %v1235
    %v1271 = vpop.f32.mrb[0].mxu0
    %v1272 = vadd.f32 0.0, %v1271
    %v1273 = vpop.f32.mrb[0].mxu0
    %v1274 = vadd.f32 0.0, %v1273
    %v1275 = vpop.f32.mrb[0].mxu0
    %v1276 = vpop.f32.mrb[0].mxu0
    %1277 = vdwg.mxu0
    %1278 = vmatprep.subr.bf16.mxu0 %v414
    %1279 = vmatpush1.bf16.msra.mxu0 %v413
    %1280 = vmatprep.subr.bf16.mxu0 %v418
    %1281 = vmatpush1.bf16.msra.mxu0 %v417
    %1282 = vmatprep.subr.bf16.mxu0 %v422
    %1283 = vmatpush1.bf16.msra.mxu0 %v421
    %1284 = vmatprep.subr.bf16.mxu0 %v426
    %1285 = vmatpush1.bf16.msra.mxu0 %v425
    %1286 = vmatprep.subr.bf16.mxu0 0
    %1287 = vmatpush1.bf16.msra.mxu0 0
    %1288 = vmatprep.subr.bf16.mxu0 0
    %1289 = vmatpush1.bf16.msra.mxu0 0
    %1290 = vmatprep.subr.bf16.mxu0 0
    %1291 = vmatpush1.bf16.msra.mxu0 0
    %1292 = vmatprep.subr.bf16.mxu0 0
    %1293 = vmatpush1.bf16.msra.mxu0 0
    %1294 = vmatprep.subr.bf16.mxu0 0
    %1295 = vmatpush1.bf16.msra.mxu0 0
    %1296 = vmatprep.subr.bf16.mxu0 0
    %1297 = vmatpush1.bf16.msra.mxu0 0
    %1298 = vmatprep.subr.bf16.mxu0 0
    %1299 = vmatpush1.bf16.msra.mxu0 0
    %1300 = vmatprep.subr.bf16.mxu0 0
    %1301 = vmatpush1.bf16.msra.mxu0 0
    %1302 = vmatprep.subr.bf16.mxu0 0
    %1303 = vmatpush1.bf16.msra.mxu0 0
    %1304 = vmatprep.subr.bf16.mxu0 0
    %1305 = vmatpush1.bf16.msra.mxu0 0
    %1306 = vmatprep.subr.bf16.mxu0 0
    %1307 = vmatpush1.bf16.msra.mxu0 0
    %1308 = vmatprep.subr.bf16.mxu0 0
    %1309 = vmatpush1.bf16.msra.mxu0 0
    %1310 = vmatprep.mubr.bf16.mxu0 0
    %1311 = vmatmul.mubr.bf16.gmra.mrb[0].mxu0 %v1235
    %v1312 = vpop.f32.mrb[0].mxu0
    %v1313 = vadd.f32 0.0, %v1312
    %v1314 = vpop.f32.mrb[0].mxu0
    %v1315 = vadd.f32 0.0, %v1314
    %v1316 = vpop.f32.mrb[0].mxu0
    %v1317 = vpop.f32.mrb[0].mxu0
    %1318 = vdwg.mxu0
    %v1319 = vadd.f32 %v1313, %v534
    %v1320 = vadd.f32 %v1315, %v538
    %v1321 = vadd.f32 %v1319, %v1149
    %v1322 = vadd.f32 %v1320, %v1151
    %v1323 = vmul.f32 %v1321, %v232
    %v1324 = vmul.f32 %v1322, %v233
    %v1325 = vxor.u32 %v1323, 2147483648
    %v1326 = vxor.u32 %v1324, 2147483648
    %v1327 = vmul.f32 %v1325, 1.442695
    %v1328 = vpow.pop %v1327
    %v1329 = vmul.f32 %v1326, 1.442695
    %v1330 = vpow.pop %v1329
    %v1331 = vadd.f32 %v1328, 1.0
    %v1332 = vadd.f32 %v1330, 1.0
    %v1333 = vrcp.pop %v1331
    %v1334 = vmul.f32 1.0, %v1333
    %v1335 = vrcp.pop %v1332
    %v1336 = vmul.f32 1.0, %v1335
    %v1337 = vmul.f32 %v1334, %v232
    %v1338 = vmul.f32 %v1336, %v233
    %v1339 = vadd.f32 %v1337, %v234
    %v1340 = vadd.f32 %v1338, %v235
    %v1341 = vmul.f32 %v1339, %v1104
    %v1342 = vmul.f32 %v1339, %v1340
    %1344 = vrot.lane.b32.xlu0 %v1342, 64
    %v1345 = vpop.permute.xlu0 %1344
    %v1347 = vadd.f32 %v1341, %v1345
    %v1348 = vtanh.pop %v1347
    %v1349 = vmul.f32 %v1340, %v1348
    %v1350 = vpack.c.bf16 %v1349, %v1349
    %1352 = vrot.lane.b32.xlu0 %v1350, 64
    %v1353 = vpop.permute.xlu0 %1352
    %v1355 = vsel %vm443, %v1353, 0
    %1357 = vmatprep.subr.bf16.mxu0 %v609
    %1358 = vmatpush1.bf16.msra.mxu0 %v608
    %1359 = vmatprep.subr.bf16.mxu0 %v611
    %1360 = vmatpush1.bf16.msra.mxu0 %v610
    %1361 = vmatprep.subr.bf16.mxu0 %v613
    %1362 = vmatpush1.bf16.msra.mxu0 %v612
    %1363 = vmatprep.subr.bf16.mxu0 %v615
    %1364 = vmatpush1.bf16.msra.mxu0 %v614
    %1365 = vmatprep.subr.bf16.mxu0 0
    %1366 = vmatpush1.bf16.msra.mxu0 0
    %1367 = vmatprep.subr.bf16.mxu0 0
    %1368 = vmatpush1.bf16.msra.mxu0 0
    %1369 = vmatprep.subr.bf16.mxu0 0
    %1370 = vmatpush1.bf16.msra.mxu0 0
    %1371 = vmatprep.subr.bf16.mxu0 0
    %1372 = vmatpush1.bf16.msra.mxu0 0
    %1373 = vmatprep.subr.bf16.mxu0 0
    %1374 = vmatpush1.bf16.msra.mxu0 0
    %1375 = vmatprep.subr.bf16.mxu0 0
    %1376 = vmatpush1.bf16.msra.mxu0 0
    %1377 = vmatprep.subr.bf16.mxu0 0
    %1378 = vmatpush1.bf16.msra.mxu0 0
    %1379 = vmatprep.subr.bf16.mxu0 0
    %1380 = vmatpush1.bf16.msra.mxu0 0
    %1381 = vmatprep.subr.bf16.mxu0 0
    %1382 = vmatpush1.bf16.msra.mxu0 0
    %1383 = vmatprep.subr.bf16.mxu0 0
    %1384 = vmatpush1.bf16.msra.mxu0 0
    %1385 = vmatprep.subr.bf16.mxu0 0
    %1386 = vmatpush1.bf16.msra.mxu0 0
    %1387 = vmatprep.subr.bf16.mxu0 0
    %1388 = vmatpush1.bf16.msra.mxu0 0
    %1389 = vmatprep.mubr.bf16.mxu0 0
    %1390 = vmatmul.mubr.bf16.gmra.mrb[0].mxu0 %v1355
    %v1391 = vpop.f32.mrb[0].mxu0
    %v1392 = vadd.f32 0.0, %v1391
    %v1393 = vpop.f32.mrb[0].mxu0
    %v1394 = vadd.f32 0.0, %v1393
    %v1395 = vpop.f32.mrb[0].mxu0
    %v1396 = vpop.f32.mrb[0].mxu0
    %1397 = vdwg.mxu0
    %1398 = vrot.lane.b32.xlu0 %v236, 68
    %v1399 = vpop.permute.xlu0 %1398
    %v1401 = vsel %vm259, %v1399, 0
    %1403 = vmatprep.subr.bf16.mxu0 %v271
    %1404 = vmatpush1.bf16.msra.mxu0 %v268
    %1405 = vmatprep.subr.bf16.mxu0 0
    %1406 = vmatpush1.bf16.msra.mxu0 0
    %1407 = vmatprep.subr.bf16.mxu0 0
    %1408 = vmatpush1.bf16.msra.mxu0 0
    %1409 = vmatprep.subr.bf16.mxu0 0
    %1410 = vmatpush1.bf16.msra.mxu0 0
    %1411 = vmatprep.subr.bf16.mxu0 0
    %1412 = vmatpush1.bf16.msra.mxu0 0
    %1413 = vmatprep.subr.bf16.mxu0 0
    %1414 = vmatpush1.bf16.msra.mxu0 0
    %1415 = vmatprep.subr.bf16.mxu0 0
    %1416 = vmatpush1.bf16.msra.mxu0 0
    %1417 = vmatprep.subr.bf16.mxu0 0
    %1418 = vmatpush1.bf16.msra.mxu0 0
    %1419 = vmatprep.subr.bf16.mxu0 0
    %1420 = vmatpush1.bf16.msra.mxu0 0
    %1421 = vmatprep.subr.bf16.mxu0 0
    %1422 = vmatpush1.bf16.msra.mxu0 0
    %1423 = vmatprep.subr.bf16.mxu0 0
    %1424 = vmatpush1.bf16.msra.mxu0 0
    %1425 = vmatprep.subr.bf16.mxu0 0
    %1426 = vmatpush1.bf16.msra.mxu0 0
    %1427 = vmatprep.subr.bf16.mxu0 0
    %1428 = vmatpush1.bf16.msra.mxu0 0
    %1429 = vmatprep.subr.bf16.mxu0 0
    %1430 = vmatpush1.bf16.msra.mxu0 0
    %1431 = vmatprep.subr.bf16.mxu0 0
    %1432 = vmatpush1.bf16.msra.mxu0 0
    %1433 = vmatprep.subr.bf16.mxu0 0
    %1434 = vmatpush1.bf16.msra.mxu0 0
    %1435 = vmatprep.mubr.bf16.mxu0 0
    %1436 = vmatmul.mubr.bf16.gmra.mrb[0].mxu0 %v1401
    %v1437 = vpop.f32.mrb[0].mxu0
    %v1438 = vadd.f32 %v244, %v1437
    %v1439 = vpop.f32.mrb[0].mxu0
    %v1440 = vadd.f32 %v248, %v1439
    %v1441 = vpop.f32.mrb[0].mxu0
    %v1442 = vpop.f32.mrb[0].mxu0
    %1443 = vdwg.mxu0
    %v1444 = vadd.f32 %v1438, %v1272
    %v1445 = vadd.f32 %v1440, %v1274
    %v1446 = vmul.f32 %v1444, %v232
    %v1447 = vmul.f32 %v1445, %v233
    %v1448 = vxor.u32 %v1446, 2147483648
    %v1449 = vxor.u32 %v1447, 2147483648
    %v1450 = vmul.f32 %v1448, 1.442695
    %v1451 = vpow.pop %v1450
    %v1452 = vmul.f32 %v1449, 1.442695
    %v1453 = vpow.pop %v1452
    %v1454 = vadd.f32 %v1451, 1.0
    %v1455 = vadd.f32 %v1453, 1.0
    %v1456 = vrcp.pop %v1454
    %v1457 = vmul.f32 1.0, %v1456
    %v1458 = vrcp.pop %v1455
    %v1459 = vmul.f32 1.0, %v1458
    %v1460 = vmul.f32 %v1457, %v232
    %v1461 = vmul.f32 %v1459, %v233
    %v1462 = vadd.f32 %v1460, %v234
    %v1463 = vadd.f32 %v1461, %v235
    %v1464 = vmul.f32 %v1462, %v1227
    %v1465 = vmul.f32 %v1462, %v1463
    %1467 = vrot.lane.b32.xlu0 %v1465, 64
    %v1468 = vpop.permute.xlu0 %1467
    %v1470 = vadd.f32 %v1464, %v1468
    %v1471 = vtanh.pop %v1470
    %v1472 = vmul.f32 %v1463, %v1471
    %v1473 = vpack.c.bf16 %v1472, %v1472
    %1475 = vrot.lane.b32.xlu0 %v1473, 64
    %v1476 = vpop.permute.xlu0 %1475
    %v1478 = vsel %vm443, %v1476, 0
    %1480 = vmatprep.subr.bf16.mxu0 %v412
    %1481 = vmatpush1.bf16.msra.mxu0 %v411
    %1482 = vmatprep.subr.bf16.mxu0 %v416
    %1483 = vmatpush1.bf16.msra.mxu0 %v415
    %1484 = vmatprep.subr.bf16.mxu0 %v420
    %1485 = vmatpush1.bf16.msra.mxu0 %v419
    %1486 = vmatprep.subr.bf16.mxu0 %v424
    %1487 = vmatpush1.bf16.msra.mxu0 %v423
    %1488 = vmatprep.subr.bf16.mxu0 0
    %1489 = vmatpush1.bf16.msra.mxu0 0
    %1490 = vmatprep.subr.bf16.mxu0 0
    %1491 = vmatpush1.bf16.msra.mxu0 0
    %1492 = vmatprep.subr.bf16.mxu0 0
    %1493 = vmatpush1.bf16.msra.mxu0 0
    %1494 = vmatprep.subr.bf16.mxu0 0
    %1495 = vmatpush1.bf16.msra.mxu0 0
    %1496 = vmatprep.subr.bf16.mxu0 0
    %1497 = vmatpush1.bf16.msra.mxu0 0
    %1498 = vmatprep.subr.bf16.mxu0 0
    %1499 = vmatpush1.bf16.msra.mxu0 0
    %1500 = vmatprep.subr.bf16.mxu0 0
    %1501 = vmatpush1.bf16.msra.mxu0 0
    %1502 = vmatprep.subr.bf16.mxu0 0
    %1503 = vmatpush1.bf16.msra.mxu0 0
    %1504 = vmatprep.subr.bf16.mxu0 0
    %1505 = vmatpush1.bf16.msra.mxu0 0
    %1506 = vmatprep.subr.bf16.mxu0 0
    %1507 = vmatpush1.bf16.msra.mxu0 0
    %1508 = vmatprep.subr.bf16.mxu0 0
    %1509 = vmatpush1.bf16.msra.mxu0 0
    %1510 = vmatprep.subr.bf16.mxu0 0
    %1511 = vmatpush1.bf16.msra.mxu0 0
    %1512 = vmatprep.mubr.bf16.mxu0 0
    %1513 = vmatmul.mubr.bf16.gmra.mrb[0].mxu0 %v1478
    %v1514 = vpop.f32.mrb[0].mxu0
    %v1515 = vadd.f32 0.0, %v1514
    %v1516 = vpop.f32.mrb[0].mxu0
    %v1517 = vadd.f32 0.0, %v1516
    %v1518 = vpop.f32.mrb[0].mxu0
    %v1519 = vpop.f32.mrb[0].mxu0
    %1520 = vdwg.mxu0
    %1521 = vmatprep.subr.bf16.mxu0 %v414
    %1522 = vmatpush1.bf16.msra.mxu0 %v413
    %1523 = vmatprep.subr.bf16.mxu0 %v418
    %1524 = vmatpush1.bf16.msra.mxu0 %v417
    %1525 = vmatprep.subr.bf16.mxu0 %v422
    %1526 = vmatpush1.bf16.msra.mxu0 %v421
    %1527 = vmatprep.subr.bf16.mxu0 %v426
    %1528 = vmatpush1.bf16.msra.mxu0 %v425
    %1529 = vmatprep.subr.bf16.mxu0 0
    %1530 = vmatpush1.bf16.msra.mxu0 0
    %1531 = vmatprep.subr.bf16.mxu0 0
    %1532 = vmatpush1.bf16.msra.mxu0 0
    %1533 = vmatprep.subr.bf16.mxu0 0
    %1534 = vmatpush1.bf16.msra.mxu0 0
    %1535 = vmatprep.subr.bf16.mxu0 0
    %1536 = vmatpush1.bf16.msra.mxu0 0
    %1537 = vmatprep.subr.bf16.mxu0 0
    %1538 = vmatpush1.bf16.msra.mxu0 0
    %1539 = vmatprep.subr.bf16.mxu0 0
    %1540 = vmatpush1.bf16.msra.mxu0 0
    %1541 = vmatprep.subr.bf16.mxu0 0
    %1542 = vmatpush1.bf16.msra.mxu0 0
    %1543 = vmatprep.subr.bf16.mxu0 0
    %1544 = vmatpush1.bf16.msra.mxu0 0
    %1545 = vmatprep.subr.bf16.mxu0 0
    %1546 = vmatpush1.bf16.msra.mxu0 0
    %1547 = vmatprep.subr.bf16.mxu0 0
    %1548 = vmatpush1.bf16.msra.mxu0 0
    %1549 = vmatprep.subr.bf16.mxu0 0
    %1550 = vmatpush1.bf16.msra.mxu0 0
    %1551 = vmatprep.subr.bf16.mxu0 0
    %1552 = vmatpush1.bf16.msra.mxu0 0
    %1553 = vmatprep.mubr.bf16.mxu0 0
    %1554 = vmatmul.mubr.bf16.gmra.mrb[0].mxu0 %v1478
    %v1555 = vpop.f32.mrb[0].mxu0
    %v1556 = vadd.f32 0.0, %v1555
    %v1557 = vpop.f32.mrb[0].mxu0
    %v1558 = vadd.f32 0.0, %v1557
    %v1559 = vpop.f32.mrb[0].mxu0
    %v1560 = vpop.f32.mrb[0].mxu0
    %1561 = vdwg.mxu0
    %v1562 = vadd.f32 %v1556, %v534
    %v1563 = vadd.f32 %v1558, %v538
    %v1564 = vadd.f32 %v1562, %v1392
    %v1565 = vadd.f32 %v1563, %v1394
    %v1566 = vmul.f32 %v1564, %v232
    %v1567 = vmul.f32 %v1565, %v233
    %v1568 = vxor.u32 %v1566, 2147483648
    %v1569 = vxor.u32 %v1567, 2147483648
    %v1570 = vmul.f32 %v1568, 1.442695
    %v1571 = vpow.pop %v1570
    %v1572 = vmul.f32 %v1569, 1.442695
    %v1573 = vpow.pop %v1572
    %v1574 = vadd.f32 %v1571, 1.0
    %v1575 = vadd.f32 %v1573, 1.0
    %v1576 = vrcp.pop %v1574
    %v1577 = vmul.f32 1.0, %v1576
    %v1578 = vrcp.pop %v1575
    %v1579 = vmul.f32 1.0, %v1578
    %v1580 = vmul.f32 %v1577, %v232
    %v1581 = vmul.f32 %v1579, %v233
    %v1582 = vadd.f32 %v1580, %v234
    %v1583 = vadd.f32 %v1581, %v235
    %v1584 = vmul.f32 %v1582, %v1347
    %v1585 = vmul.f32 %v1582, %v1583
    %1587 = vrot.lane.b32.xlu0 %v1585, 64
    %v1588 = vpop.permute.xlu0 %1587
    %v1590 = vadd.f32 %v1584, %v1588
    %v1591 = vtanh.pop %v1590
    %v1592 = vmul.f32 %v1583, %v1591
    %v1593 = vpack.c.bf16 %v1592, %v1592
    %1595 = vrot.lane.b32.xlu0 %v1593, 64
    %v1596 = vpop.permute.xlu0 %1595
    %v1598 = vsel %vm443, %v1596, 0
    %1600 = vmatprep.subr.bf16.mxu0 %v609
    %1601 = vmatpush1.bf16.msra.mxu0 %v608
    %1602 = vmatprep.subr.bf16.mxu0 %v611
    %1603 = vmatpush1.bf16.msra.mxu0 %v610
    %1604 = vmatprep.subr.bf16.mxu0 %v613
    %1605 = vmatpush1.bf16.msra.mxu0 %v612
    %1606 = vmatprep.subr.bf16.mxu0 %v615
    %1607 = vmatpush1.bf16.msra.mxu0 %v614
    %1608 = vmatprep.subr.bf16.mxu0 0
    %1609 = vmatpush1.bf16.msra.mxu0 0
    %1610 = vmatprep.subr.bf16.mxu0 0
    %1611 = vmatpush1.bf16.msra.mxu0 0
    %1612 = vmatprep.subr.bf16.mxu0 0
    %1613 = vmatpush1.bf16.msra.mxu0 0
    %1614 = vmatprep.subr.bf16.mxu0 0
    %1615 = vmatpush1.bf16.msra.mxu0 0
    %1616 = vmatprep.subr.bf16.mxu0 0
    %1617 = vmatpush1.bf16.msra.mxu0 0
    %1618 = vmatprep.subr.bf16.mxu0 0
    %1619 = vmatpush1.bf16.msra.mxu0 0
    %1620 = vmatprep.subr.bf16.mxu0 0
    %1621 = vmatpush1.bf16.msra.mxu0 0
    %1622 = vmatprep.subr.bf16.mxu0 0
    %1623 = vmatpush1.bf16.msra.mxu0 0
    %1624 = vmatprep.subr.bf16.mxu0 0
    %1625 = vmatpush1.bf16.msra.mxu0 0
    %1626 = vmatprep.subr.bf16.mxu0 0
    %1627 = vmatpush1.bf16.msra.mxu0 0
    %1628 = vmatprep.subr.bf16.mxu0 0
    %1629 = vmatpush1.bf16.msra.mxu0 0
    %1630 = vmatprep.subr.bf16.mxu0 0
    %1631 = vmatpush1.bf16.msra.mxu0 0
    %1632 = vmatprep.mubr.bf16.mxu0 0
    %1633 = vmatmul.mubr.bf16.gmra.mrb[0].mxu0 %v1598
    %v1634 = vpop.f32.mrb[0].mxu0
    %v1635 = vadd.f32 0.0, %v1634
    %v1636 = vpop.f32.mrb[0].mxu0
    %v1637 = vadd.f32 0.0, %v1636
    %v1638 = vpop.f32.mrb[0].mxu0
    %v1639 = vpop.f32.mrb[0].mxu0
    %1640 = vdwg.mxu0
    %1641 = vrot.lane.b32.xlu0 %v236, 53
    %v1642 = vpop.permute.xlu0 %1641
    %v1644 = vsel %vm259, %v1642, 0
    %1646 = vmatprep.subr.bf16.mxu0 %v271
    %1647 = vmatpush1.bf16.msra.mxu0 %v268
    %1648 = vmatprep.subr.bf16.mxu0 0
    %1649 = vmatpush1.bf16.msra.mxu0 0
    %1650 = vmatprep.subr.bf16.mxu0 0
    %1651 = vmatpush1.bf16.msra.mxu0 0
    %1652 = vmatprep.subr.bf16.mxu0 0
    %1653 = vmatpush1.bf16.msra.mxu0 0
    %1654 = vmatprep.subr.bf16.mxu0 0
    %1655 = vmatpush1.bf16.msra.mxu0 0
    %1656 = vmatprep.subr.bf16.mxu0 0
    %1657 = vmatpush1.bf16.msra.mxu0 0
    %1658 = vmatprep.subr.bf16.mxu0 0
    %1659 = vmatpush1.bf16.msra.mxu0 0
    %1660 = vmatprep.subr.bf16.mxu0 0
    %1661 = vmatpush1.bf16.msra.mxu0 0
    %1662 = vmatprep.subr.bf16.mxu0 0
    %1663 = vmatpush1.bf16.msra.mxu0 0
    %1664 = vmatprep.subr.bf16.mxu0 0
    %1665 = vmatpush1.bf16.msra.mxu0 0
    %1666 = vmatprep.subr.bf16.mxu0 0
    %1667 = vmatpush1.bf16.msra.mxu0 0
    %1668 = vmatprep.subr.bf16.mxu0 0
    %1669 = vmatpush1.bf16.msra.mxu0 0
    %1670 = vmatprep.subr.bf16.mxu0 0
    %1671 = vmatpush1.bf16.msra.mxu0 0
    %1672 = vmatprep.subr.bf16.mxu0 0
    %1673 = vmatpush1.bf16.msra.mxu0 0
    %1674 = vmatprep.subr.bf16.mxu0 0
    %1675 = vmatpush1.bf16.msra.mxu0 0
    %1676 = vmatprep.subr.bf16.mxu0 0
    %1677 = vmatpush1.bf16.msra.mxu0 0
    %1678 = vmatprep.mubr.bf16.mxu0 0
    %1679 = vmatmul.mubr.bf16.gmra.mrb[0].mxu0 %v1644
    %v1680 = vpop.f32.mrb[0].mxu0
    %v1681 = vadd.f32 %v244, %v1680
    %v1682 = vpop.f32.mrb[0].mxu0
    %v1683 = vadd.f32 %v248, %v1682
    %v1684 = vpop.f32.mrb[0].mxu0
    %v1685 = vpop.f32.mrb[0].mxu0
    %1686 = vdwg.mxu0
    %v1687 = vadd.f32 %v1681, %v1515
    %v1688 = vadd.f32 %v1683, %v1517
    %v1689 = vmul.f32 %v1687, %v232
    %v1690 = vmul.f32 %v1688, %v233
    %v1691 = vxor.u32 %v1689, 2147483648
    %v1692 = vxor.u32 %v1690, 2147483648
    %v1693 = vmul.f32 %v1691, 1.442695
    %v1694 = vpow.pop %v1693
    %v1695 = vmul.f32 %v1692, 1.442695
    %v1696 = vpow.pop %v1695
    %v1697 = vadd.f32 %v1694, 1.0
    %v1698 = vadd.f32 %v1696, 1.0
    %v1699 = vrcp.pop %v1697
    %v1700 = vmul.f32 1.0, %v1699
    %v1701 = vrcp.pop %v1698
    %v1702 = vmul.f32 1.0, %v1701
    %v1703 = vmul.f32 %v1700, %v232
    %v1704 = vmul.f32 %v1702, %v233
    %v1705 = vadd.f32 %v1703, %v234
    %v1706 = vadd.f32 %v1704, %v235
    %v1707 = vmul.f32 %v1705, %v1470
    %v1708 = vmul.f32 %v1705, %v1706
    %1710 = vrot.lane.b32.xlu0 %v1708, 64
    %v1711 = vpop.permute.xlu0 %1710
    %v1713 = vadd.f32 %v1707, %v1711
    %v1714 = vtanh.pop %v1713
    %v1715 = vmul.f32 %v1706, %v1714
    %v1716 = vpack.c.bf16 %v1715, %v1715
    %1718 = vrot.lane.b32.xlu0 %v1716, 64
    %v1719 = vpop.permute.xlu0 %1718
    %v1721 = vsel %vm443, %v1719, 0
    %1723 = vmatprep.subr.bf16.mxu0 %v412
    %1724 = vmatpush1.bf16.msra.mxu0 %v411
    %1725 = vmatprep.subr.bf16.mxu0 %v416
    %1726 = vmatpush1.bf16.msra.mxu0 %v415
    %1727 = vmatprep.subr.bf16.mxu0 %v420
    %1728 = vmatpush1.bf16.msra.mxu0 %v419
    %1729 = vmatprep.subr.bf16.mxu0 %v424
    %1730 = vmatpush1.bf16.msra.mxu0 %v423
    %1731 = vmatprep.subr.bf16.mxu0 0
    %1732 = vmatpush1.bf16.msra.mxu0 0
    %1733 = vmatprep.subr.bf16.mxu0 0
    %1734 = vmatpush1.bf16.msra.mxu0 0
    %1735 = vmatprep.subr.bf16.mxu0 0
    %1736 = vmatpush1.bf16.msra.mxu0 0
    %1737 = vmatprep.subr.bf16.mxu0 0
    %1738 = vmatpush1.bf16.msra.mxu0 0
    %1739 = vmatprep.subr.bf16.mxu0 0
    %1740 = vmatpush1.bf16.msra.mxu0 0
    %1741 = vmatprep.subr.bf16.mxu0 0
    %1742 = vmatpush1.bf16.msra.mxu0 0
    %1743 = vmatprep.subr.bf16.mxu0 0
    %1744 = vmatpush1.bf16.msra.mxu0 0
    %1745 = vmatprep.subr.bf16.mxu0 0
    %1746 = vmatpush1.bf16.msra.mxu0 0
    %1747 = vmatprep.subr.bf16.mxu0 0
    %1748 = vmatpush1.bf16.msra.mxu0 0
    %1749 = vmatprep.subr.bf16.mxu0 0
    %1750 = vmatpush1.bf16.msra.mxu0 0
    %1751 = vmatprep.subr.bf16.mxu0 0
    %1752 = vmatpush1.bf16.msra.mxu0 0
    %1753 = vmatprep.subr.bf16.mxu0 0
    %1754 = vmatpush1.bf16.msra.mxu0 0
    %1755 = vmatprep.mubr.bf16.mxu0 0
    %1756 = vmatmul.mubr.bf16.gmra.mrb[0].mxu0 %v1721
    %v1757 = vpop.f32.mrb[0].mxu0
    %v1758 = vadd.f32 0.0, %v1757
    %v1759 = vpop.f32.mrb[0].mxu0
    %v1760 = vadd.f32 0.0, %v1759
    %v1761 = vpop.f32.mrb[0].mxu0
    %v1762 = vpop.f32.mrb[0].mxu0
    %1763 = vdwg.mxu0
    %1764 = vmatprep.subr.bf16.mxu0 %v414
    %1765 = vmatpush1.bf16.msra.mxu0 %v413
    %1766 = vmatprep.subr.bf16.mxu0 %v418
    %1767 = vmatpush1.bf16.msra.mxu0 %v417
    %1768 = vmatprep.subr.bf16.mxu0 %v422
    %1769 = vmatpush1.bf16.msra.mxu0 %v421
    %1770 = vmatprep.subr.bf16.mxu0 %v426
    %1771 = vmatpush1.bf16.msra.mxu0 %v425
    %1772 = vmatprep.subr.bf16.mxu0 0
    %1773 = vmatpush1.bf16.msra.mxu0 0
    %1774 = vmatprep.subr.bf16.mxu0 0
    %1775 = vmatpush1.bf16.msra.mxu0 0
    %1776 = vmatprep.subr.bf16.mxu0 0
    %1777 = vmatpush1.bf16.msra.mxu0 0
    %1778 = vmatprep.subr.bf16.mxu0 0
    %1779 = vmatpush1.bf16.msra.mxu0 0
    %1780 = vmatprep.subr.bf16.mxu0 0
    %1781 = vmatpush1.bf16.msra.mxu0 0
    %1782 = vmatprep.subr.bf16.mxu0 0
    %1783 = vmatpush1.bf16.msra.mxu0 0
    %1784 = vmatprep.subr.bf16.mxu0 0
    %1785 = vmatpush1.bf16.msra.mxu0 0
    %1786 = vmatprep.subr.bf16.mxu0 0
    %1787 = vmatpush1.bf16.msra.mxu0 0
    %1788 = vmatprep.subr.bf16.mxu0 0
    %1789 = vmatpush1.bf16.msra.mxu0 0
    %1790 = vmatprep.subr.bf16.mxu0 0
    %1791 = vmatpush1.bf16.msra.mxu0 0
    %1792 = vmatprep.subr.bf16.mxu0 0
    %1793 = vmatpush1.bf16.msra.mxu0 0
    %1794 = vmatprep.subr.bf16.mxu0 0
    %1795 = vmatpush1.bf16.msra.mxu0 0
    %1796 = vmatprep.mubr.bf16.mxu0 0
    %1797 = vmatmul.mubr.bf16.gmra.mrb[0].mxu0 %v1721
    %v1798 = vpop.f32.mrb[0].mxu0
    %v1799 = vadd.f32 0.0, %v1798
    %v1800 = vpop.f32.mrb[0].mxu0
    %v1801 = vadd.f32 0.0, %v1800
    %v1802 = vpop.f32.mrb[0].mxu0
    %v1803 = vpop.f32.mrb[0].mxu0
    %1804 = vdwg.mxu0
    %v1805 = vadd.f32 %v1799, %v534
    %v1806 = vadd.f32 %v1801, %v538
    %v1807 = vadd.f32 %v1805, %v1635
    %v1808 = vadd.f32 %v1806, %v1637
    %v1809 = vmul.f32 %v1807, %v232
    %v1810 = vmul.f32 %v1808, %v233
    %v1811 = vxor.u32 %v1809, 2147483648
    %v1812 = vxor.u32 %v1810, 2147483648
    %v1813 = vmul.f32 %v1811, 1.442695
    %v1814 = vpow.pop %v1813
    %v1815 = vmul.f32 %v1812, 1.442695
    %v1816 = vpow.pop %v1815
    %v1817 = vadd.f32 %v1814, 1.0
    %v1818 = vadd.f32 %v1816, 1.0
    %v1819 = vrcp.pop %v1817
    %v1820 = vmul.f32 1.0, %v1819
    %v1821 = vrcp.pop %v1818
    %v1822 = vmul.f32 1.0, %v1821
    %v1823 = vmul.f32 %v1820, %v232
    %v1824 = vmul.f32 %v1822, %v233
    %v1825 = vadd.f32 %v1823, %v234
    %v1826 = vadd.f32 %v1824, %v235
    %v1827 = vmul.f32 %v1825, %v1590
    %v1828 = vmul.f32 %v1825, %v1826
    %1830 = vrot.lane.b32.xlu0 %v1828, 64
    %v1831 = vpop.permute.xlu0 %1830
    %v1833 = vadd.f32 %v1827, %v1831
    %v1834 = vtanh.pop %v1833
    %v1835 = vmul.f32 %v1826, %v1834
    %v1836 = vpack.c.bf16 %v1835, %v1835
    %1838 = vrot.lane.b32.xlu0 %v1836, 64
    %v1839 = vpop.permute.xlu0 %1838
    %v1841 = vsel %vm443, %v1839, 0
    %1843 = vmatprep.subr.bf16.mxu0 %v609
    %1844 = vmatpush1.bf16.msra.mxu0 %v608
    %1845 = vmatprep.subr.bf16.mxu0 %v611
    %1846 = vmatpush1.bf16.msra.mxu0 %v610
    %1847 = vmatprep.subr.bf16.mxu0 %v613
    %1848 = vmatpush1.bf16.msra.mxu0 %v612
    %1849 = vmatprep.subr.bf16.mxu0 %v615
    %1850 = vmatpush1.bf16.msra.mxu0 %v614
    %1851 = vmatprep.subr.bf16.mxu0 0
    %1852 = vmatpush1.bf16.msra.mxu0 0
    %1853 = vmatprep.subr.bf16.mxu0 0
    %1854 = vmatpush1.bf16.msra.mxu0 0
    %1855 = vmatprep.subr.bf16.mxu0 0
    %1856 = vmatpush1.bf16.msra.mxu0 0
    %1857 = vmatprep.subr.bf16.mxu0 0
    %1858 = vmatpush1.bf16.msra.mxu0 0
    %1859 = vmatprep.subr.bf16.mxu0 0
    %1860 = vmatpush1.bf16.msra.mxu0 0
    %1861 = vmatprep.subr.bf16.mxu0 0
    %1862 = vmatpush1.bf16.msra.mxu0 0
    %1863 = vmatprep.subr.bf16.mxu0 0
    %1864 = vmatpush1.bf16.msra.mxu0 0
    %1865 = vmatprep.subr.bf16.mxu0 0
    %1866 = vmatpush1.bf16.msra.mxu0 0
    %1867 = vmatprep.subr.bf16.mxu0 0
    %1868 = vmatpush1.bf16.msra.mxu0 0
    %1869 = vmatprep.subr.bf16.mxu0 0
    %1870 = vmatpush1.bf16.msra.mxu0 0
    %1871 = vmatprep.subr.bf16.mxu0 0
    %1872 = vmatpush1.bf16.msra.mxu0 0
    %1873 = vmatprep.subr.bf16.mxu0 0
    %1874 = vmatpush1.bf16.msra.mxu0 0
    %1875 = vmatprep.mubr.bf16.mxu0 0
    %1876 = vmatmul.mubr.bf16.gmra.mrb[0].mxu0 %v1841
    %v1877 = vpop.f32.mrb[0].mxu0
    %v1878 = vadd.f32 0.0, %v1877
    %v1879 = vpop.f32.mrb[0].mxu0
    %v1880 = vadd.f32 0.0, %v1879
    %v1881 = vpop.f32.mrb[0].mxu0
    %v1882 = vpop.f32.mrb[0].mxu0
    %1883 = vdwg.mxu0
    %1884 = vrot.lane.b32.xlu0 %v236, 38
    %v1885 = vpop.permute.xlu0 %1884
    %v1887 = vsel %vm259, %v1885, 0
    %1889 = vmatprep.subr.bf16.mxu0 %v271
    %1890 = vmatpush1.bf16.msra.mxu0 %v268
    %1891 = vmatprep.subr.bf16.mxu0 0
    %1892 = vmatpush1.bf16.msra.mxu0 0
    %1893 = vmatprep.subr.bf16.mxu0 0
    %1894 = vmatpush1.bf16.msra.mxu0 0
    %1895 = vmatprep.subr.bf16.mxu0 0
    %1896 = vmatpush1.bf16.msra.mxu0 0
    %1897 = vmatprep.subr.bf16.mxu0 0
    %1898 = vmatpush1.bf16.msra.mxu0 0
    %1899 = vmatprep.subr.bf16.mxu0 0
    %1900 = vmatpush1.bf16.msra.mxu0 0
    %1901 = vmatprep.subr.bf16.mxu0 0
    %1902 = vmatpush1.bf16.msra.mxu0 0
    %1903 = vmatprep.subr.bf16.mxu0 0
    %1904 = vmatpush1.bf16.msra.mxu0 0
    %1905 = vmatprep.subr.bf16.mxu0 0
    %1906 = vmatpush1.bf16.msra.mxu0 0
    %1907 = vmatprep.subr.bf16.mxu0 0
    %1908 = vmatpush1.bf16.msra.mxu0 0
    %1909 = vmatprep.subr.bf16.mxu0 0
    %1910 = vmatpush1.bf16.msra.mxu0 0
    %1911 = vmatprep.subr.bf16.mxu0 0
    %1912 = vmatpush1.bf16.msra.mxu0 0
    %1913 = vmatprep.subr.bf16.mxu0 0
    %1914 = vmatpush1.bf16.msra.mxu0 0
    %1915 = vmatprep.subr.bf16.mxu0 0
    %1916 = vmatpush1.bf16.msra.mxu0 0
    %1917 = vmatprep.subr.bf16.mxu0 0
    %1918 = vmatpush1.bf16.msra.mxu0 0
    %1919 = vmatprep.subr.bf16.mxu0 0
    %1920 = vmatpush1.bf16.msra.mxu0 0
    %1921 = vmatprep.mubr.bf16.mxu0 0
    %1922 = vmatmul.mubr.bf16.gmra.mrb[0].mxu0 %v1887
    %v1923 = vpop.f32.mrb[0].mxu0
    %v1924 = vadd.f32 %v244, %v1923
    %v1925 = vpop.f32.mrb[0].mxu0
    %v1926 = vadd.f32 %v248, %v1925
    %v1927 = vpop.f32.mrb[0].mxu0
    %v1928 = vpop.f32.mrb[0].mxu0
    %1929 = vdwg.mxu0
    %v1930 = vadd.f32 %v1924, %v1758
    %v1931 = vadd.f32 %v1926, %v1760
    %v1932 = vmul.f32 %v1930, %v232
    %v1933 = vmul.f32 %v1931, %v233
    %v1934 = vxor.u32 %v1932, 2147483648
    %v1935 = vxor.u32 %v1933, 2147483648
    %v1936 = vmul.f32 %v1934, 1.442695
    %v1937 = vpow.pop %v1936
    %v1938 = vmul.f32 %v1935, 1.442695
    %v1939 = vpow.pop %v1938
    %v1940 = vadd.f32 %v1937, 1.0
    %v1941 = vadd.f32 %v1939, 1.0
    %v1942 = vrcp.pop %v1940
    %v1943 = vmul.f32 1.0, %v1942
    %v1944 = vrcp.pop %v1941
    %v1945 = vmul.f32 1.0, %v1944
    %v1946 = vmul.f32 %v1943, %v232
    %v1947 = vmul.f32 %v1945, %v233
    %v1948 = vadd.f32 %v1946, %v234
    %v1949 = vadd.f32 %v1947, %v235
    %v1950 = vmul.f32 %v1948, %v1713
    %v1951 = vmul.f32 %v1948, %v1949
    %1953 = vrot.lane.b32.xlu0 %v1951, 64
    %v1954 = vpop.permute.xlu0 %1953
    %v1956 = vadd.f32 %v1950, %v1954
    %v1957 = vtanh.pop %v1956
    %v1958 = vmul.f32 %v1949, %v1957
    %v1959 = vpack.c.bf16 %v1958, %v1958
    %1961 = vrot.lane.b32.xlu0 %v1959, 64
    %v1962 = vpop.permute.xlu0 %1961
    %v1964 = vsel %vm443, %v1962, 0
    %1966 = vmatprep.subr.bf16.mxu0 %v412
    %1967 = vmatpush1.bf16.msra.mxu0 %v411
    %1968 = vmatprep.subr.bf16.mxu0 %v416
    %1969 = vmatpush1.bf16.msra.mxu0 %v415
    %1970 = vmatprep.subr.bf16.mxu0 %v420
    %1971 = vmatpush1.bf16.msra.mxu0 %v419
    %1972 = vmatprep.subr.bf16.mxu0 %v424
    %1973 = vmatpush1.bf16.msra.mxu0 %v423
    %1974 = vmatprep.subr.bf16.mxu0 0
    %1975 = vmatpush1.bf16.msra.mxu0 0
    %1976 = vmatprep.subr.bf16.mxu0 0
    %1977 = vmatpush1.bf16.msra.mxu0 0
    %1978 = vmatprep.subr.bf16.mxu0 0
    %1979 = vmatpush1.bf16.msra.mxu0 0
    %1980 = vmatprep.subr.bf16.mxu0 0
    %1981 = vmatpush1.bf16.msra.mxu0 0
    %1982 = vmatprep.subr.bf16.mxu0 0
    %1983 = vmatpush1.bf16.msra.mxu0 0
    %1984 = vmatprep.subr.bf16.mxu0 0
    %1985 = vmatpush1.bf16.msra.mxu0 0
    %1986 = vmatprep.subr.bf16.mxu0 0
    %1987 = vmatpush1.bf16.msra.mxu0 0
    %1988 = vmatprep.subr.bf16.mxu0 0
    %1989 = vmatpush1.bf16.msra.mxu0 0
    %1990 = vmatprep.subr.bf16.mxu0 0
    %1991 = vmatpush1.bf16.msra.mxu0 0
    %1992 = vmatprep.subr.bf16.mxu0 0
    %1993 = vmatpush1.bf16.msra.mxu0 0
    %1994 = vmatprep.subr.bf16.mxu0 0
    %1995 = vmatpush1.bf16.msra.mxu0 0
    %1996 = vmatprep.subr.bf16.mxu0 0
    %1997 = vmatpush1.bf16.msra.mxu0 0
    %1998 = vmatprep.mubr.bf16.mxu0 0
    %1999 = vmatmul.mubr.bf16.gmra.mrb[0].mxu0 %v1964
    %v2000 = vpop.f32.mrb[0].mxu0
    %v2001 = vadd.f32 0.0, %v2000
    %v2002 = vpop.f32.mrb[0].mxu0
    %v2003 = vadd.f32 0.0, %v2002
    %v2004 = vpop.f32.mrb[0].mxu0
    %v2005 = vpop.f32.mrb[0].mxu0
    %2006 = vdwg.mxu0
    %2007 = vmatprep.subr.bf16.mxu0 %v414
    %2008 = vmatpush1.bf16.msra.mxu0 %v413
    %2009 = vmatprep.subr.bf16.mxu0 %v418
    %2010 = vmatpush1.bf16.msra.mxu0 %v417
    %2011 = vmatprep.subr.bf16.mxu0 %v422
    %2012 = vmatpush1.bf16.msra.mxu0 %v421
    %2013 = vmatprep.subr.bf16.mxu0 %v426
    %2014 = vmatpush1.bf16.msra.mxu0 %v425
    %2015 = vmatprep.subr.bf16.mxu0 0
    %2016 = vmatpush1.bf16.msra.mxu0 0
    %2017 = vmatprep.subr.bf16.mxu0 0
    %2018 = vmatpush1.bf16.msra.mxu0 0
    %2019 = vmatprep.subr.bf16.mxu0 0
    %2020 = vmatpush1.bf16.msra.mxu0 0
    %2021 = vmatprep.subr.bf16.mxu0 0
    %2022 = vmatpush1.bf16.msra.mxu0 0
    %2023 = vmatprep.subr.bf16.mxu0 0
    %2024 = vmatpush1.bf16.msra.mxu0 0
    %2025 = vmatprep.subr.bf16.mxu0 0
    %2026 = vmatpush1.bf16.msra.mxu0 0
    %2027 = vmatprep.subr.bf16.mxu0 0
    %2028 = vmatpush1.bf16.msra.mxu0 0
    %2029 = vmatprep.subr.bf16.mxu0 0
    %2030 = vmatpush1.bf16.msra.mxu0 0
    %2031 = vmatprep.subr.bf16.mxu0 0
    %2032 = vmatpush1.bf16.msra.mxu0 0
    %2033 = vmatprep.subr.bf16.mxu0 0
    %2034 = vmatpush1.bf16.msra.mxu0 0
    %2035 = vmatprep.subr.bf16.mxu0 0
    %2036 = vmatpush1.bf16.msra.mxu0 0
    %2037 = vmatprep.subr.bf16.mxu0 0
    %2038 = vmatpush1.bf16.msra.mxu0 0
    %2039 = vmatprep.mubr.bf16.mxu0 0
    %2040 = vmatmul.mubr.bf16.gmra.mrb[0].mxu0 %v1964
    %v2041 = vpop.f32.mrb[0].mxu0
    %v2042 = vadd.f32 0.0, %v2041
    %v2043 = vpop.f32.mrb[0].mxu0
    %v2044 = vadd.f32 0.0, %v2043
    %v2045 = vpop.f32.mrb[0].mxu0
    %v2046 = vpop.f32.mrb[0].mxu0
    %2047 = vdwg.mxu0
    %v2048 = vadd.f32 %v2042, %v534
    %v2049 = vadd.f32 %v2044, %v538
    %v2050 = vadd.f32 %v2048, %v1878
    %v2051 = vadd.f32 %v2049, %v1880
    %v2052 = vmul.f32 %v2050, %v232
    %v2053 = vmul.f32 %v2051, %v233
    %v2054 = vxor.u32 %v2052, 2147483648
    %v2055 = vxor.u32 %v2053, 2147483648
    %v2056 = vmul.f32 %v2054, 1.442695
    %v2057 = vpow.pop %v2056
    %v2058 = vmul.f32 %v2055, 1.442695
    %v2059 = vpow.pop %v2058
    %v2060 = vadd.f32 %v2057, 1.0
    %v2061 = vadd.f32 %v2059, 1.0
    %v2062 = vrcp.pop %v2060
    %v2063 = vmul.f32 1.0, %v2062
    %v2064 = vrcp.pop %v2061
    %v2065 = vmul.f32 1.0, %v2064
    %v2066 = vmul.f32 %v2063, %v232
    %v2067 = vmul.f32 %v2065, %v233
    %v2068 = vadd.f32 %v2066, %v234
    %v2069 = vadd.f32 %v2067, %v235
    %v2070 = vmul.f32 %v2068, %v1833
    %v2071 = vmul.f32 %v2068, %v2069
    %2073 = vrot.lane.b32.xlu0 %v2071, 64
    %v2074 = vpop.permute.xlu0 %2073
    %v2076 = vadd.f32 %v2070, %v2074
    %v2077 = vtanh.pop %v2076
    %v2078 = vmul.f32 %v2069, %v2077
    %v2079 = vpack.c.bf16 %v2078, %v2078
    %2081 = vrot.lane.b32.xlu0 %v2079, 64
    %v2082 = vpop.permute.xlu0 %2081
    %v2084 = vsel %vm443, %v2082, 0
    %2086 = vmatprep.subr.bf16.mxu0 %v609
    %2087 = vmatpush1.bf16.msra.mxu0 %v608
    %2088 = vmatprep.subr.bf16.mxu0 %v611
    %2089 = vmatpush1.bf16.msra.mxu0 %v610
    %2090 = vmatprep.subr.bf16.mxu0 %v613
    %2091 = vmatpush1.bf16.msra.mxu0 %v612
    %2092 = vmatprep.subr.bf16.mxu0 %v615
    %2093 = vmatpush1.bf16.msra.mxu0 %v614
    %2094 = vmatprep.subr.bf16.mxu0 0
    %2095 = vmatpush1.bf16.msra.mxu0 0
    %2096 = vmatprep.subr.bf16.mxu0 0
    %2097 = vmatpush1.bf16.msra.mxu0 0
    %2098 = vmatprep.subr.bf16.mxu0 0
    %2099 = vmatpush1.bf16.msra.mxu0 0
    %2100 = vmatprep.subr.bf16.mxu0 0
    %2101 = vmatpush1.bf16.msra.mxu0 0
    %2102 = vmatprep.subr.bf16.mxu0 0
    %2103 = vmatpush1.bf16.msra.mxu0 0
    %2104 = vmatprep.subr.bf16.mxu0 0
    %2105 = vmatpush1.bf16.msra.mxu0 0
    %2106 = vmatprep.subr.bf16.mxu0 0
    %2107 = vmatpush1.bf16.msra.mxu0 0
    %2108 = vmatprep.subr.bf16.mxu0 0
    %2109 = vmatpush1.bf16.msra.mxu0 0
    %2110 = vmatprep.subr.bf16.mxu0 0
    %2111 = vmatpush1.bf16.msra.mxu0 0
    %2112 = vmatprep.subr.bf16.mxu0 0
    %2113 = vmatpush1.bf16.msra.mxu0 0
    %2114 = vmatprep.subr.bf16.mxu0 0
    %2115 = vmatpush1.bf16.msra.mxu0 0
    %2116 = vmatprep.subr.bf16.mxu0 0
    %2117 = vmatpush1.bf16.msra.mxu0 0
    %2118 = vmatprep.mubr.bf16.mxu0 0
    %2119 = vmatmul.mubr.bf16.gmra.mrb[0].mxu0 %v2084
    %v2120 = vpop.f32.mrb[0].mxu0
    %v2121 = vadd.f32 0.0, %v2120
    %v2122 = vpop.f32.mrb[0].mxu0
    %v2123 = vadd.f32 0.0, %v2122
    %v2124 = vpop.f32.mrb[0].mxu0
    %v2125 = vpop.f32.mrb[0].mxu0
    %2126 = vdwg.mxu0
    %2127 = vrot.lane.b32.xlu0 %v236, 23
    %v2128 = vpop.permute.xlu0 %2127
    %v2130 = vsel %vm259, %v2128, 0
    %2132 = vmatprep.subr.bf16.mxu0 %v271
    %2133 = vmatpush1.bf16.msra.mxu0 %v268
    %2134 = vmatprep.subr.bf16.mxu0 0
    %2135 = vmatpush1.bf16.msra.mxu0 0
    %2136 = vmatprep.subr.bf16.mxu0 0
    %2137 = vmatpush1.bf16.msra.mxu0 0
    %2138 = vmatprep.subr.bf16.mxu0 0
    %2139 = vmatpush1.bf16.msra.mxu0 0
    %2140 = vmatprep.subr.bf16.mxu0 0
    %2141 = vmatpush1.bf16.msra.mxu0 0
    %2142 = vmatprep.subr.bf16.mxu0 0
    %2143 = vmatpush1.bf16.msra.mxu0 0
    %2144 = vmatprep.subr.bf16.mxu0 0
    %2145 = vmatpush1.bf16.msra.mxu0 0
    %2146 = vmatprep.subr.bf16.mxu0 0
    %2147 = vmatpush1.bf16.msra.mxu0 0
    %2148 = vmatprep.subr.bf16.mxu0 0
    %2149 = vmatpush1.bf16.msra.mxu0 0
    %2150 = vmatprep.subr.bf16.mxu0 0
    %2151 = vmatpush1.bf16.msra.mxu0 0
    %2152 = vmatprep.subr.bf16.mxu0 0
    %2153 = vmatpush1.bf16.msra.mxu0 0
    %2154 = vmatprep.subr.bf16.mxu0 0
    %2155 = vmatpush1.bf16.msra.mxu0 0
    %2156 = vmatprep.subr.bf16.mxu0 0
    %2157 = vmatpush1.bf16.msra.mxu0 0
    %2158 = vmatprep.subr.bf16.mxu0 0
    %2159 = vmatpush1.bf16.msra.mxu0 0
    %2160 = vmatprep.subr.bf16.mxu0 0
    %2161 = vmatpush1.bf16.msra.mxu0 0
    %2162 = vmatprep.subr.bf16.mxu0 0
    %2163 = vmatpush1.bf16.msra.mxu0 0
    %2164 = vmatprep.mubr.bf16.mxu0 0
    %2165 = vmatmul.mubr.bf16.gmra.mrb[0].mxu0 %v2130
    %v2166 = vpop.f32.mrb[0].mxu0
    %v2167 = vadd.f32 %v244, %v2166
    %v2168 = vpop.f32.mrb[0].mxu0
    %v2169 = vadd.f32 %v248, %v2168
    %v2170 = vpop.f32.mrb[0].mxu0
    %v2171 = vpop.f32.mrb[0].mxu0
    %2172 = vdwg.mxu0
    %v2173 = vadd.f32 %v2167, %v2001
    %v2174 = vadd.f32 %v2169, %v2003
    %v2175 = vmul.f32 %v2173, %v232
    %v2176 = vmul.f32 %v2174, %v233
    %v2177 = vxor.u32 %v2175, 2147483648
    %v2178 = vxor.u32 %v2176, 2147483648
    %v2179 = vmul.f32 %v2177, 1.442695
    %v2180 = vpow.pop %v2179
    %v2181 = vmul.f32 %v2178, 1.442695
    %v2182 = vpow.pop %v2181
    %v2183 = vadd.f32 %v2180, 1.0
    %v2184 = vadd.f32 %v2182, 1.0
    %v2185 = vrcp.pop %v2183
    %v2186 = vmul.f32 1.0, %v2185
    %v2187 = vrcp.pop %v2184
    %v2188 = vmul.f32 1.0, %v2187
    %v2189 = vmul.f32 %v2186, %v232
    %v2190 = vmul.f32 %v2188, %v233
    %v2191 = vadd.f32 %v2189, %v234
    %v2192 = vadd.f32 %v2190, %v235
    %v2193 = vmul.f32 %v2191, %v1956
    %v2194 = vmul.f32 %v2191, %v2192
    %2196 = vrot.lane.b32.xlu0 %v2194, 64
    %v2197 = vpop.permute.xlu0 %2196
    %v2199 = vadd.f32 %v2193, %v2197
    %v2200 = vtanh.pop %v2199
    %v2201 = vmul.f32 %v2192, %v2200
    %v2202 = vpack.c.bf16 %v2201, %v2201
    %2204 = vrot.lane.b32.xlu0 %v2202, 64
    %v2205 = vpop.permute.xlu0 %2204
    %v2207 = vsel %vm443, %v2205, 0
    %2209 = vmatprep.subr.bf16.mxu0 %v414
    %2210 = vmatpush1.bf16.msra.mxu0 %v413
    %2211 = vmatprep.subr.bf16.mxu0 %v418
    %2212 = vmatpush1.bf16.msra.mxu0 %v417
    %2213 = vmatprep.subr.bf16.mxu0 %v422
    %2214 = vmatpush1.bf16.msra.mxu0 %v421
    %2215 = vmatprep.subr.bf16.mxu0 %v426
    %2216 = vmatpush1.bf16.msra.mxu0 %v425
    %2217 = vmatprep.subr.bf16.mxu0 0
    %2218 = vmatpush1.bf16.msra.mxu0 0
    %2219 = vmatprep.subr.bf16.mxu0 0
    %2220 = vmatpush1.bf16.msra.mxu0 0
    %2221 = vmatprep.subr.bf16.mxu0 0
    %2222 = vmatpush1.bf16.msra.mxu0 0
    %2223 = vmatprep.subr.bf16.mxu0 0
    %2224 = vmatpush1.bf16.msra.mxu0 0
    %2225 = vmatprep.subr.bf16.mxu0 0
    %2226 = vmatpush1.bf16.msra.mxu0 0
    %2227 = vmatprep.subr.bf16.mxu0 0
    %2228 = vmatpush1.bf16.msra.mxu0 0
    %2229 = vmatprep.subr.bf16.mxu0 0
    %2230 = vmatpush1.bf16.msra.mxu0 0
    %2231 = vmatprep.subr.bf16.mxu0 0
    %2232 = vmatpush1.bf16.msra.mxu0 0
    %2233 = vmatprep.subr.bf16.mxu0 0
    %2234 = vmatpush1.bf16.msra.mxu0 0
    %2235 = vmatprep.subr.bf16.mxu0 0
    %2236 = vmatpush1.bf16.msra.mxu0 0
    %2237 = vmatprep.subr.bf16.mxu0 0
    %2238 = vmatpush1.bf16.msra.mxu0 0
    %2239 = vmatprep.subr.bf16.mxu0 0
    %2240 = vmatpush1.bf16.msra.mxu0 0
    %2241 = vmatprep.mubr.bf16.mxu0 0
    %2242 = vmatmul.mubr.bf16.gmra.mrb[0].mxu0 %v2207
    %v2243 = vpop.f32.mrb[0].mxu0
    %v2244 = vadd.f32 0.0, %v2243
    %v2245 = vpop.f32.mrb[0].mxu0
    %v2246 = vadd.f32 0.0, %v2245
    %v2247 = vpop.f32.mrb[0].mxu0
    %v2248 = vpop.f32.mrb[0].mxu0
    %2249 = vdwg.mxu0
    %v2250 = vadd.f32 %v2244, %v534
    %v2251 = vadd.f32 %v2246, %v538
    %v2252 = vadd.f32 %v2250, %v2121
    %v2253 = vadd.f32 %v2251, %v2123
    %v2254 = vmul.f32 %v2252, %v232
    %v2255 = vmul.f32 %v2253, %v233
    %v2256 = vxor.u32 %v2254, 2147483648
    %v2257 = vxor.u32 %v2255, 2147483648
    %v2258 = vmul.f32 %v2256, 1.442695
    %v2259 = vpow.pop %v2258
    %v2260 = vmul.f32 %v2257, 1.442695
    %v2261 = vpow.pop %v2260
    %v2262 = vadd.f32 %v2259, 1.0
    %v2263 = vadd.f32 %v2261, 1.0
    %v2264 = vrcp.pop %v2262
    %v2265 = vmul.f32 1.0, %v2264
    %v2266 = vrcp.pop %v2263
    %v2267 = vmul.f32 1.0, %v2266
    %v2268 = vmul.f32 %v2265, %v232
    %v2269 = vmul.f32 %v2267, %v233
    %v2270 = vadd.f32 %v2268, %v234
    %v2271 = vadd.f32 %v2269, %v235
    %v2272 = vmul.f32 %v2270, %v2076
    %v2273 = vmul.f32 %v2270, %v2271
    %2275 = vrot.lane.b32.xlu0 %v2273, 64
    %v2276 = vpop.permute.xlu0 %2275
    %v2278 = vadd.f32 %v2272, %v2276
    %v2279 = vtanh.pop %v2278
    %v2280 = vmul.f32 %v2271, %v2279
    %v2281 = vld [vmem:[#allocation10] sm:$0xf]
    %v2282 = vld [vmem:[#allocation10 + $0x4] sm:$0xf]
    %v2283 = vld [vmem:[#allocation10 + $0x8] sm:$0xf]
    %v2284 = vld [vmem:[#allocation10 + $0xc] sm:$0xf]
    %v2285 = vld [vmem:[#allocation10 + $0x10] sm:$0xf]
    %v2286 = vld [vmem:[#allocation10 + $0x14] sm:$0xf]
    %v2287 = vld [vmem:[#allocation10 + $0x18] sm:$0xf]
    %v2288 = vld [vmem:[#allocation10 + $0x1c] sm:$0xf]
    %v2289 = vld [vmem:[#allocation11] sm:$0x1]
    %v2291 = vlaneseq
    %v2292 = vshrl.u32 %v2291, 7
    %v2293 = vsub.s32 0, %v2292
    %v2294 = vrot.slane %v2289, %v2293
    %v2304 = vunpack.c.l.b16 %v2281
    %v2305 = vunpack.c.l.b16 %v2282
    %v2306 = vunpack.c.l.b16 %v2283
    %v2307 = vunpack.c.l.b16 %v2284
    %v2308 = vunpack.c.l.b16 %v2285
    %v2309 = vunpack.c.l.b16 %v2286
    %v2310 = vunpack.c.l.b16 %v2287
    %v2311 = vunpack.c.l.b16 %v2288
    %v2312 = vpack.c.b16 %v2305, %v2304
    %v2313 = vpack.c.b16 %v2307, %v2306
    %v2314 = vpack.c.b16 %v2309, %v2308
    %v2315 = vpack.c.b16 %v2311, %v2310
    %2320 = vmatprep.subr.bf16.mxu0 0
    %2321 = vmatpush1.bf16.msra.mxu0 %v2312
    %2322 = vmatprep.subr.bf16.mxu0 0
    %2323 = vmatpush1.bf16.msra.mxu0 %v2313
    %2324 = vmatprep.subr.bf16.mxu0 0
    %2325 = vmatpush1.bf16.msra.mxu0 %v2314
    %2326 = vmatprep.subr.bf16.mxu0 0
    %2327 = vmatpush1.bf16.msra.mxu0 %v2315
    %2328 = vmatprep.subr.bf16.mxu0 0
    %2329 = vmatpush1.bf16.msra.mxu0 0
    %2330 = vmatprep.subr.bf16.mxu0 0
    %2331 = vmatpush1.bf16.msra.mxu0 0
    %2332 = vmatprep.subr.bf16.mxu0 0
    %2333 = vmatpush1.bf16.msra.mxu0 0
    %2334 = vmatprep.subr.bf16.mxu0 0
    %2335 = vmatpush1.bf16.msra.mxu0 0
    %2336 = vmatprep.subr.bf16.mxu0 0
    %2337 = vmatpush1.bf16.msra.mxu0 0
    %2338 = vmatprep.subr.bf16.mxu0 0
    %2339 = vmatpush1.bf16.msra.mxu0 0
    %2340 = vmatprep.subr.bf16.mxu0 0
    %2341 = vmatpush1.bf16.msra.mxu0 0
    %2342 = vmatprep.subr.bf16.mxu0 0
    %2343 = vmatpush1.bf16.msra.mxu0 0
    %2344 = vmatprep.subr.bf16.mxu0 0
    %2345 = vmatpush1.bf16.msra.mxu0 0
    %2346 = vmatprep.subr.bf16.mxu0 0
    %2347 = vmatpush1.bf16.msra.mxu0 0
    %2348 = vmatprep.subr.bf16.mxu0 0
    %2349 = vmatpush1.bf16.msra.mxu0 0
    %2350 = vmatprep.subr.bf16.mxu0 0
    %2351 = vmatpush1.bf16.msra.mxu0 0
    %2352 = vmatprep.mubr.bf16.mxu0 0
    %2353 = vmatmul.mubr.bf16.gmra.mrb[0].mxu0 %v2207
    %v2354 = vpop.f32.mrb[0].mxu0
    %v2355 = vadd.f32 %v2294, %v2354
    %v2356 = vpop.f32.mrb[0].mxu0
    %v2357 = vpop.f32.mrb[0].mxu0
    %v2358 = vpop.f32.mrb[0].mxu0
    %2359 = vdwg.mxu0
    %v2360 = vtanh.pop %v2355
    %v2361 = vpack.c.bf16 %v2280, %v2280
    %2363 = vrot.lane.b32.xlu0 %v2361, 64
    %v2364 = vpop.permute.xlu0 %2363
    %v2366 = vsel %vm443, %v2364, 0
    %2368 = vmatprep.subr.bf16.mxu0 0
    %2369 = vmatpush1.bf16.msra.mxu0 %v2312
    %2370 = vmatprep.subr.bf16.mxu0 0
    %2371 = vmatpush1.bf16.msra.mxu0 %v2313
    %2372 = vmatprep.subr.bf16.mxu0 0
    %2373 = vmatpush1.bf16.msra.mxu0 %v2314
    %2374 = vmatprep.subr.bf16.mxu0 0
    %2375 = vmatpush1.bf16.msra.mxu0 %v2315
    %2376 = vmatprep.subr.bf16.mxu0 0
    %2377 = vmatpush1.bf16.msra.mxu0 0
    %2378 = vmatprep.subr.bf16.mxu0 0
    %2379 = vmatpush1.bf16.msra.mxu0 0
    %2380 = vmatprep.subr.bf16.mxu0 0
    %2381 = vmatpush1.bf16.msra.mxu0 0
    %2382 = vmatprep.subr.bf16.mxu0 0
    %2383 = vmatpush1.bf16.msra.mxu0 0
    %2384 = vmatprep.subr.bf16.mxu0 0
    %2385 = vmatpush1.bf16.msra.mxu0 0
    %2386 = vmatprep.subr.bf16.mxu0 0
    %2387 = vmatpush1.bf16.msra.mxu0 0
    %2388 = vmatprep.subr.bf16.mxu0 0
    %2389 = vmatpush1.bf16.msra.mxu0 0
    %2390 = vmatprep.subr.bf16.mxu0 0
    %2391 = vmatpush1.bf16.msra.mxu0 0
    %2392 = vmatprep.subr.bf16.mxu0 0
    %2393 = vmatpush1.bf16.msra.mxu0 0
    %2394 = vmatprep.subr.bf16.mxu0 0
    %2395 = vmatpush1.bf16.msra.mxu0 0
    %2396 = vmatprep.subr.bf16.mxu0 0
    %2397 = vmatpush1.bf16.msra.mxu0 0
    %2398 = vmatprep.subr.bf16.mxu0 0
    %2399 = vmatpush1.bf16.msra.mxu0 0
    %2400 = vmatprep.mubr.bf16.mxu0 0
    %2401 = vmatmul.mubr.bf16.gmra.mrb[0].mxu0 %v2366
    %v2402 = vpop.f32.mrb[0].mxu0
    %v2403 = vadd.f32 %v2294, %v2402
    %v2404 = vpop.f32.mrb[0].mxu0
    %v2405 = vpop.f32.mrb[0].mxu0
    %v2406 = vpop.f32.mrb[0].mxu0
    %2407 = vdwg.mxu0
    %v2408 = vtanh.pop %v2403
    %v2409 = vpack.c.bf16 %v2360, %v2360
    %v2410 = vld [vmem:[#allocation13] sm:$0xff]
    %v2411 = vld [vmem:[#allocation13 + $0x8] sm:$0xff]
    %v2412 = vld [vmem:[#allocation13 + $0x10] sm:$0xff]
    %v2413 = vld [vmem:[#allocation13 + $0x18] sm:$0xff]
    %v2414 = vld [vmem:[#allocation13 + $0x20] sm:$0xff]
    %v2415 = vld [vmem:[#allocation13 + $0x28] sm:$0xff]
    %v2416 = vld [vmem:[#allocation13 + $0x30] sm:$0xff]
    %v2417 = vld [vmem:[#allocation13 + $0x38] sm:$0xff]
    %v2418 = vld [vmem:[%s9] sm:$0x3]
    %v2420 = vlaneseq
    %v2421 = vshrl.u32 %v2420, 7
    %v2422 = vsub.s32 0, %v2421
    %v2423 = vrot.slane %v2418, %v2422
    %v2424 = vlaneseq
    %v2425 = vshrl.u32 %v2424, 7
    %v2426 = vsub.s32 1, %v2425
    %v2427 = vrot.slane %v2418, %v2426
    %v2438 = vunpack.c.l.b16 %v2410
    %v2439 = vunpack.c.h.b16 %v2410
    %v2440 = vunpack.c.l.b16 %v2411
    %v2441 = vunpack.c.h.b16 %v2411
    %v2442 = vunpack.c.l.b16 %v2412
    %v2443 = vunpack.c.h.b16 %v2412
    %v2444 = vunpack.c.l.b16 %v2413
    %v2445 = vunpack.c.h.b16 %v2413
    %v2446 = vunpack.c.l.b16 %v2414
    %v2447 = vunpack.c.h.b16 %v2414
    %v2448 = vunpack.c.l.b16 %v2415
    %v2449 = vunpack.c.h.b16 %v2415
    %v2450 = vunpack.c.l.b16 %v2416
    %v2451 = vunpack.c.h.b16 %v2416
    %v2452 = vunpack.c.l.b16 %v2417
    %v2453 = vunpack.c.h.b16 %v2417
    %v2454 = vpack.c.b16 %v2440, %v2438
    %v2455 = vpack.c.b16 %v2441, %v2439
    %v2456 = vpack.c.b16 %v2444, %v2442
    %v2457 = vpack.c.b16 %v2445, %v2443
    %v2458 = vpack.c.b16 %v2448, %v2446
    %v2459 = vpack.c.b16 %v2449, %v2447
    %v2460 = vpack.c.b16 %v2452, %v2450
    %v2461 = vpack.c.b16 %v2453, %v2451
    %v2471 = vsel %vm443, %v2409, 0
    %2473 = vmatprep.subr.bf16.mxu0 %v2455
    %2474 = vmatpush1.bf16.msra.mxu0 %v2454
    %2475 = vmatprep.subr.bf16.mxu0 %v2457
    %2476 = vmatpush1.bf16.msra.mxu0 %v2456
    %2477 = vmatprep.subr.bf16.mxu0 %v2459
    %2478 = vmatpush1.bf16.msra.mxu0 %v2458
    %2479 = vmatprep.subr.bf16.mxu0 %v2461
    %2480 = vmatpush1.bf16.msra.mxu0 %v2460
    %2481 = vmatprep.subr.bf16.mxu0 0
    %2482 = vmatpush1.bf16.msra.mxu0 0
    %2483 = vmatprep.subr.bf16.mxu0 0
    %2484 = vmatpush1.bf16.msra.mxu0 0
    %2485 = vmatprep.subr.bf16.mxu0 0
    %2486 = vmatpush1.bf16.msra.mxu0 0
    %2487 = vmatprep.subr.bf16.mxu0 0
    %2488 = vmatpush1.bf16.msra.mxu0 0
    %2489 = vmatprep.subr.bf16.mxu0 0
    %2490 = vmatpush1.bf16.msra.mxu0 0
    %2491 = vmatprep.subr.bf16.mxu0 0
    %2492 = vmatpush1.bf16.msra.mxu0 0
    %2493 = vmatprep.subr.bf16.mxu0 0
    %2494 = vmatpush1.bf16.msra.mxu0 0
    %2495 = vmatprep.subr.bf16.mxu0 0
    %2496 = vmatpush1.bf16.msra.mxu0 0
    %2497 = vmatprep.subr.bf16.mxu0 0
    %2498 = vmatpush1.bf16.msra.mxu0 0
    %2499 = vmatprep.subr.bf16.mxu0 0
    %2500 = vmatpush1.bf16.msra.mxu0 0
    %2501 = vmatprep.subr.bf16.mxu0 0
    %2502 = vmatpush1.bf16.msra.mxu0 0
    %2503 = vmatprep.subr.bf16.mxu0 0
    %2504 = vmatpush1.bf16.msra.mxu0 0
    %2505 = vmatprep.mubr.bf16.mxu0 0
    %2506 = vmatmul.mubr.bf16.gmra.mrb[0].mxu0 %v2471
    %v2507 = vpop.f32.mrb[0].mxu0
    %v2508 = vadd.f32 %v2423, %v2507
    %v2509 = vpop.f32.mrb[0].mxu0
    %v2510 = vadd.f32 %v2427, %v2509
    %v2511 = vpop.f32.mrb[0].mxu0
    %v2512 = vpop.f32.mrb[0].mxu0
    %2513 = vdwg.mxu0
    %v2514 = vadd.f32 %v2508, 0.0
    %v2515 = vadd.f32 %v2510, 0.0
    %v2516 = vmul.f32 %v2514, %v232
    %v2517 = vmul.f32 %v2515, %v233
    %v2518 = vxor.u32 %v2516, 2147483648
    %v2519 = vxor.u32 %v2517, 2147483648
    %v2520 = vmul.f32 %v2518, 1.442695
    %v2521 = vpow.pop %v2520
    %v2522 = vmul.f32 %v2519, 1.442695
    %v2523 = vpow.pop %v2522
    %v2524 = vadd.f32 %v2521, 1.0
    %v2525 = vadd.f32 %v2523, 1.0
    %v2526 = vrcp.pop %v2524
    %v2527 = vmul.f32 1.0, %v2526
    %v2528 = vrcp.pop %v2525
    %v2529 = vmul.f32 1.0, %v2528
    %v2530 = vmul.f32 %v2527, %v232
    %v2531 = vmul.f32 %v2529, %v233
    %v2532 = vadd.f32 %v2530, %v234
    %v2533 = vadd.f32 %v2531, %v235
    %v2534 = vmul.f32 %v2532, 0.0
    %v2535 = vmul.f32 %v2532, %v2533
    %2537 = vrot.lane.b32.xlu0 %v2535, 64
    %v2538 = vpop.permute.xlu0 %2537
    %v2540 = vadd.f32 %v2534, %v2538
    %v2541 = vtanh.pop %v2540
    %v2542 = vmul.f32 %v2533, %v2541
    %v2543 = vpack.c.bf16 %v2542, %v2542
    %v2544 = vld [vmem:[#allocation14] sm:$0xff]
    %v2545 = vld [vmem:[#allocation14 + $0x8] sm:$0xff]
    %v2546 = vld [vmem:[#allocation14 + $0x10] sm:$0xff]
    %v2547 = vld [vmem:[#allocation14 + $0x18] sm:$0xff]
    %v2548 = vld [vmem:[#allocation14 + $0x20] sm:$0xff]
    %v2549 = vld [vmem:[#allocation14 + $0x28] sm:$0xff]
    %v2550 = vld [vmem:[#allocation14 + $0x30] sm:$0xff]
    %v2551 = vld [vmem:[#allocation14 + $0x38] sm:$0xff]
    %v2552 = vld [vmem:[#allocation14 + $0x40] sm:$0xff]
    %v2553 = vld [vmem:[#allocation14 + $0x48] sm:$0xff]
    %v2554 = vld [vmem:[#allocation14 + $0x50] sm:$0xff]
    %v2555 = vld [vmem:[#allocation14 + $0x58] sm:$0xff]
    %v2556 = vld [vmem:[#allocation14 + $0x60] sm:$0xff]
    %v2557 = vld [vmem:[#allocation14 + $0x68] sm:$0xff]
    %v2558 = vld [vmem:[#allocation14 + $0x70] sm:$0xff]
    %v2559 = vld [vmem:[#allocation14 + $0x78] sm:$0xff]
    %2561 = vrot.lane.b32.xlu0 %v2543, 64
    %v2562 = vpop.permute.xlu0 %2561
    %v2579 = vunpack.c.l.b16 %v2544
    %v2580 = vunpack.c.h.b16 %v2544
    %v2581 = vunpack.c.l.b16 %v2545
    %v2582 = vunpack.c.h.b16 %v2545
    %v2583 = vunpack.c.l.b16 %v2546
    %v2584 = vunpack.c.h.b16 %v2546
    %v2585 = vunpack.c.l.b16 %v2547
    %v2586 = vunpack.c.h.b16 %v2547
    %v2587 = vunpack.c.l.b16 %v2548
    %v2588 = vunpack.c.h.b16 %v2548
    %v2589 = vunpack.c.l.b16 %v2549
    %v2590 = vunpack.c.h.b16 %v2549
    %v2591 = vunpack.c.l.b16 %v2550
    %v2592 = vunpack.c.h.b16 %v2550
    %v2593 = vunpack.c.l.b16 %v2551
    %v2594 = vunpack.c.h.b16 %v2551
    %v2595 = vunpack.c.l.b16 %v2552
    %v2596 = vunpack.c.h.b16 %v2552
    %v2597 = vunpack.c.l.b16 %v2553
    %v2598 = vunpack.c.h.b16 %v2553
    %v2599 = vunpack.c.l.b16 %v2554
    %v2600 = vunpack.c.h.b16 %v2554
    %v2601 = vunpack.c.l.b16 %v2555
    %v2602 = vunpack.c.h.b16 %v2555
    %v2603 = vunpack.c.l.b16 %v2556
    %v2604 = vunpack.c.h.b16 %v2556
    %v2605 = vunpack.c.l.b16 %v2557
    %v2606 = vunpack.c.h.b16 %v2557
    %v2607 = vunpack.c.l.b16 %v2558
    %v2608 = vunpack.c.h.b16 %v2558
    %v2609 = vunpack.c.l.b16 %v2559
    %v2610 = vunpack.c.h.b16 %v2559
    %v2611 = vpack.c.b16 %v2583, %v2579
    %v2612 = vpack.c.b16 %v2584, %v2580
    %v2613 = vpack.c.b16 %v2585, %v2581
    %v2614 = vpack.c.b16 %v2586, %v2582
    %v2615 = vpack.c.b16 %v2591, %v2587
    %v2616 = vpack.c.b16 %v2592, %v2588
    %v2617 = vpack.c.b16 %v2593, %v2589
    %v2618 = vpack.c.b16 %v2594, %v2590
    %v2619 = vpack.c.b16 %v2599, %v2595
    %v2620 = vpack.c.b16 %v2600, %v2596
    %v2621 = vpack.c.b16 %v2601, %v2597
    %v2622 = vpack.c.b16 %v2602, %v2598
    %v2623 = vpack.c.b16 %v2607, %v2603
    %v2624 = vpack.c.b16 %v2608, %v2604
    %v2625 = vpack.c.b16 %v2609, %v2605
    %v2626 = vpack.c.b16 %v2610, %v2606
    %v2644 = vsel %vm443, %v2562, 0
    %2646 = vmatprep.subr.bf16.mxu0 %v2612
    %2647 = vmatpush1.bf16.msra.mxu0 %v2611
    %2648 = vmatprep.subr.bf16.mxu0 %v2616
    %2649 = vmatpush1.bf16.msra.mxu0 %v2615
    %2650 = vmatprep.subr.bf16.mxu0 %v2620
    %2651 = vmatpush1.bf16.msra.mxu0 %v2619
    %2652 = vmatprep.subr.bf16.mxu0 %v2624
    %2653 = vmatpush1.bf16.msra.mxu0 %v2623
    %2654 = vmatprep.subr.bf16.mxu0 0
    %2655 = vmatpush1.bf16.msra.mxu0 0
    %2656 = vmatprep.subr.bf16.mxu0 0
    %2657 = vmatpush1.bf16.msra.mxu0 0
    %2658 = vmatprep.subr.bf16.mxu0 0
    %2659 = vmatpush1.bf16.msra.mxu0 0
    %2660 = vmatprep.subr.bf16.mxu0 0
    %2661 = vmatpush1.bf16.msra.mxu0 0
    %2662 = vmatprep.subr.bf16.mxu0 0
    %2663 = vmatpush1.bf16.msra.mxu0 0
    %2664 = vmatprep.subr.bf16.mxu0 0
    %2665 = vmatpush1.bf16.msra.mxu0 0
    %2666 = vmatprep.subr.bf16.mxu0 0
    %2667 = vmatpush1.bf16.msra.mxu0 0
    %2668 = vmatprep.subr.bf16.mxu0 0
    %2669 = vmatpush1.bf16.msra.mxu0 0
    %2670 = vmatprep.subr.bf16.mxu0 0
    %2671 = vmatpush1.bf16.msra.mxu0 0
    %2672 = vmatprep.subr.bf16.mxu0 0
    %2673 = vmatpush1.bf16.msra.mxu0 0
    %2674 = vmatprep.subr.bf16.mxu0 0
    %2675 = vmatpush1.bf16.msra.mxu0 0
    %2676 = vmatprep.subr.bf16.mxu0 0
    %2677 = vmatpush1.bf16.msra.mxu0 0
    %2678 = vmatprep.mubr.bf16.mxu0 0
    %2679 = vmatmul.mubr.bf16.gmra.mrb[0].mxu0 %v2644
    %v2680 = vpop.f32.mrb[0].mxu0
    %v2681 = vadd.f32 0.0, %v2680
    %v2682 = vpop.f32.mrb[0].mxu0
    %v2683 = vadd.f32 0.0, %v2682
    %v2684 = vpop.f32.mrb[0].mxu0
    %v2685 = vpop.f32.mrb[0].mxu0
    %2686 = vdwg.mxu0
    %2687 = vmatprep.subr.bf16.mxu0 %v2614
    %2688 = vmatpush1.bf16.msra.mxu0 %v2613
    %2689 = vmatprep.subr.bf16.mxu0 %v2618
    %2690 = vmatpush1.bf16.msra.mxu0 %v2617
    %2691 = vmatprep.subr.bf16.mxu0 %v2622
    %2692 = vmatpush1.bf16.msra.mxu0 %v2621
    %2693 = vmatprep.subr.bf16.mxu0 %v2626
    %2694 = vmatpush1.bf16.msra.mxu0 %v2625
    %2695 = vmatprep.subr.bf16.mxu0 0
    %2696 = vmatpush1.bf16.msra.mxu0 0
    %2697 = vmatprep.subr.bf16.mxu0 0
    %2698 = vmatpush1.bf16.msra.mxu0 0
    %2699 = vmatprep.subr.bf16.mxu0 0
    %2700 = vmatpush1.bf16.msra.mxu0 0
    %2701 = vmatprep.subr.bf16.mxu0 0
    %2702 = vmatpush1.bf16.msra.mxu0 0
    %2703 = vmatprep.subr.bf16.mxu0 0
    %2704 = vmatpush1.bf16.msra.mxu0 0
    %2705 = vmatprep.subr.bf16.mxu0 0
    %2706 = vmatpush1.bf16.msra.mxu0 0
    %2707 = vmatprep.subr.bf16.mxu0 0
    %2708 = vmatpush1.bf16.msra.mxu0 0
    %2709 = vmatprep.subr.bf16.mxu0 0
    %2710 = vmatpush1.bf16.msra.mxu0 0
    %2711 = vmatprep.subr.bf16.mxu0 0
    %2712 = vmatpush1.bf16.msra.mxu0 0
    %2713 = vmatprep.subr.bf16.mxu0 0
    %2714 = vmatpush1.bf16.msra.mxu0 0
    %2715 = vmatprep.subr.bf16.mxu0 0
    %2716 = vmatpush1.bf16.msra.mxu0 0
    %2717 = vmatprep.subr.bf16.mxu0 0
    %2718 = vmatpush1.bf16.msra.mxu0 0
    %2719 = vmatprep.mubr.bf16.mxu0 0
    %2720 = vmatmul.mubr.bf16.gmra.mrb[0].mxu0 %v2644
    %v2721 = vpop.f32.mrb[0].mxu0
    %v2722 = vadd.f32 0.0, %v2721
    %v2723 = vpop.f32.mrb[0].mxu0
    %v2724 = vadd.f32 0.0, %v2723
    %v2725 = vpop.f32.mrb[0].mxu0
    %v2726 = vpop.f32.mrb[0].mxu0
    %2727 = vdwg.mxu0
    %v2728 = vld [vmem:[#allocation17] sm:$0x3]
    %v2730 = vlaneseq
    %v2731 = vshrl.u32 %v2730, 7
    %v2732 = vsub.s32 0, %v2731
    %v2733 = vrot.slane %v2728, %v2732
    %v2734 = vlaneseq
    %v2735 = vshrl.u32 %v2734, 7
    %v2736 = vsub.s32 1, %v2735
    %v2737 = vrot.slane %v2728, %v2736
    %v2740 = vadd.f32 %v2722, %v2733
    %v2741 = vadd.f32 %v2724, %v2737
    %v2742 = vadd.f32 %v2740, 0.0
    %v2743 = vadd.f32 %v2741, 0.0
    %v2744 = vmul.f32 %v2742, %v232
    %v2745 = vmul.f32 %v2743, %v233
    %v2746 = vxor.u32 %v2744, 2147483648
    %v2747 = vxor.u32 %v2745, 2147483648
    %v2748 = vmul.f32 %v2746, 1.442695
    %v2749 = vpow.pop %v2748
    %v2750 = vmul.f32 %v2747, 1.442695
    %v2751 = vpow.pop %v2750
    %v2752 = vadd.f32 %v2749, 1.0
    %v2753 = vadd.f32 %v2751, 1.0
    %v2754 = vrcp.pop %v2752
    %v2755 = vmul.f32 1.0, %v2754
    %v2756 = vrcp.pop %v2753
    %v2757 = vmul.f32 1.0, %v2756
    %v2758 = vmul.f32 %v2755, %v232
    %v2759 = vmul.f32 %v2757, %v233
    %v2760 = vadd.f32 %v2758, %v234
    %v2761 = vadd.f32 %v2759, %v235
    %v2762 = vmul.f32 %v2760, 0.0
    %v2763 = vmul.f32 %v2760, %v2761
    %2765 = vrot.lane.b32.xlu0 %v2763, 64
    %v2766 = vpop.permute.xlu0 %2765
    %v2768 = vadd.f32 %v2762, %v2766
    %v2769 = vtanh.pop %v2768
    %v2770 = vmul.f32 %v2761, %v2769
    %v2771 = vpack.c.bf16 %v2770, %v2770
    %v2772 = vld [vmem:[#allocation16] sm:$0xff]
    %v2773 = vld [vmem:[#allocation16 + $0x8] sm:$0xff]
    %v2774 = vld [vmem:[#allocation16 + $0x10] sm:$0xff]
    %v2775 = vld [vmem:[#allocation16 + $0x18] sm:$0xff]
    %v2776 = vld [vmem:[#allocation16 + $0x20] sm:$0xff]
    %v2777 = vld [vmem:[#allocation16 + $0x28] sm:$0xff]
    %v2778 = vld [vmem:[#allocation16 + $0x30] sm:$0xff]
    %v2779 = vld [vmem:[#allocation16 + $0x38] sm:$0xff]
    %2781 = vrot.lane.b32.xlu0 %v2771, 64
    %v2782 = vpop.permute.xlu0 %2781
    %v2791 = vunpack.c.l.b16 %v2772
    %v2792 = vunpack.c.h.b16 %v2772
    %v2793 = vunpack.c.l.b16 %v2773
    %v2794 = vunpack.c.h.b16 %v2773
    %v2795 = vunpack.c.l.b16 %v2774
    %v2796 = vunpack.c.h.b16 %v2774
    %v2797 = vunpack.c.l.b16 %v2775
    %v2798 = vunpack.c.h.b16 %v2775
    %v2799 = vunpack.c.l.b16 %v2776
    %v2800 = vunpack.c.h.b16 %v2776
    %v2801 = vunpack.c.l.b16 %v2777
    %v2802 = vunpack.c.h.b16 %v2777
    %v2803 = vunpack.c.l.b16 %v2778
    %v2804 = vunpack.c.h.b16 %v2778
    %v2805 = vunpack.c.l.b16 %v2779
    %v2806 = vunpack.c.h.b16 %v2779
    %v2807 = vpack.c.b16 %v2793, %v2791
    %v2808 = vpack.c.b16 %v2794, %v2792
    %v2809 = vpack.c.b16 %v2797, %v2795
    %v2810 = vpack.c.b16 %v2798, %v2796
    %v2811 = vpack.c.b16 %v2801, %v2799
    %v2812 = vpack.c.b16 %v2802, %v2800
    %v2813 = vpack.c.b16 %v2805, %v2803
    %v2814 = vpack.c.b16 %v2806, %v2804
    %v2824 = vsel %vm443, %v2782, 0
    %2826 = vmatprep.subr.bf16.mxu0 %v2808
    %2827 = vmatpush1.bf16.msra.mxu0 %v2807
    %2828 = vmatprep.subr.bf16.mxu0 %v2810
    %2829 = vmatpush1.bf16.msra.mxu0 %v2809
    %2830 = vmatprep.subr.bf16.mxu0 %v2812
    %2831 = vmatpush1.bf16.msra.mxu0 %v2811
    %2832 = vmatprep.subr.bf16.mxu0 %v2814
    %2833 = vmatpush1.bf16.msra.mxu0 %v2813
    %2834 = vmatprep.subr.bf16.mxu0 0
    %2835 = vmatpush1.bf16.msra.mxu0 0
    %2836 = vmatprep.subr.bf16.mxu0 0
    %2837 = vmatpush1.bf16.msra.mxu0 0
    %2838 = vmatprep.subr.bf16.mxu0 0
    %2839 = vmatpush1.bf16.msra.mxu0 0
    %2840 = vmatprep.subr.bf16.mxu0 0
    %2841 = vmatpush1.bf16.msra.mxu0 0
    %2842 = vmatprep.subr.bf16.mxu0 0
    %2843 = vmatpush1.bf16.msra.mxu0 0
    %2844 = vmatprep.subr.bf16.mxu0 0
    %2845 = vmatpush1.bf16.msra.mxu0 0
    %2846 = vmatprep.subr.bf16.mxu0 0
    %2847 = vmatpush1.bf16.msra.mxu0 0
    %2848 = vmatprep.subr.bf16.mxu0 0
    %2849 = vmatpush1.bf16.msra.mxu0 0
    %2850 = vmatprep.subr.bf16.mxu0 0
    %2851 = vmatpush1.bf16.msra.mxu0 0
    %2852 = vmatprep.subr.bf16.mxu0 0
    %2853 = vmatpush1.bf16.msra.mxu0 0
    %2854 = vmatprep.subr.bf16.mxu0 0
    %2855 = vmatpush1.bf16.msra.mxu0 0
    %2856 = vmatprep.subr.bf16.mxu0 0
    %2857 = vmatpush1.bf16.msra.mxu0 0
    %2858 = vmatprep.mubr.bf16.mxu0 0
    %2859 = vmatmul.mubr.bf16.gmra.mrb[0].mxu0 %v2824
    %v2860 = vpop.f32.mrb[0].mxu0
    %v2861 = vadd.f32 0.0, %v2860
    %v2862 = vpop.f32.mrb[0].mxu0
    %v2863 = vadd.f32 0.0, %v2862
    %v2864 = vpop.f32.mrb[0].mxu0
    %v2865 = vpop.f32.mrb[0].mxu0
    %2866 = vdwg.mxu0
    %v2867 = vpack.c.bf16 %v2408, %v2408
    %v2869 = vsel %vm443, %v2867, 0
    %2871 = vmatprep.subr.bf16.mxu0 %v2455
    %2872 = vmatpush1.bf16.msra.mxu0 %v2454
    %2873 = vmatprep.subr.bf16.mxu0 %v2457
    %2874 = vmatpush1.bf16.msra.mxu0 %v2456
    %2875 = vmatprep.subr.bf16.mxu0 %v2459
    %2876 = vmatpush1.bf16.msra.mxu0 %v2458
    %2877 = vmatprep.subr.bf16.mxu0 %v2461
    %2878 = vmatpush1.bf16.msra.mxu0 %v2460
    %2879 = vmatprep.subr.bf16.mxu0 0
    %2880 = vmatpush1.bf16.msra.mxu0 0
    %2881 = vmatprep.subr.bf16.mxu0 0
    %2882 = vmatpush1.bf16.msra.mxu0 0
    %2883 = vmatprep.subr.bf16.mxu0 0
    %2884 = vmatpush1.bf16.msra.mxu0 0
    %2885 = vmatprep.subr.bf16.mxu0 0
    %2886 = vmatpush1.bf16.msra.mxu0 0
    %2887 = vmatprep.subr.bf16.mxu0 0
    %2888 = vmatpush1.bf16.msra.mxu0 0
    %2889 = vmatprep.subr.bf16.mxu0 0
    %2890 = vmatpush1.bf16.msra.mxu0 0
    %2891 = vmatprep.subr.bf16.mxu0 0
    %2892 = vmatpush1.bf16.msra.mxu0 0
    %2893 = vmatprep.subr.bf16.mxu0 0
    %2894 = vmatpush1.bf16.msra.mxu0 0
    %2895 = vmatprep.subr.bf16.mxu0 0
    %2896 = vmatpush1.bf16.msra.mxu0 0
    %2897 = vmatprep.subr.bf16.mxu0 0
    %2898 = vmatpush1.bf16.msra.mxu0 0
    %2899 = vmatprep.subr.bf16.mxu0 0
    %2900 = vmatpush1.bf16.msra.mxu0 0
    %2901 = vmatprep.subr.bf16.mxu0 0
    %2902 = vmatpush1.bf16.msra.mxu0 0
    %2903 = vmatprep.mubr.bf16.mxu0 0
    %2904 = vmatmul.mubr.bf16.gmra.mrb[0].mxu0 %v2869
    %v2905 = vpop.f32.mrb[0].mxu0
    %v2906 = vadd.f32 %v2423, %v2905
    %v2907 = vpop.f32.mrb[0].mxu0
    %v2908 = vadd.f32 %v2427, %v2907
    %v2909 = vpop.f32.mrb[0].mxu0
    %v2910 = vpop.f32.mrb[0].mxu0
    %2911 = vdwg.mxu0
    %v2912 = vadd.f32 %v2906, %v2681
    %v2913 = vadd.f32 %v2908, %v2683
    %v2914 = vmul.f32 %v2912, %v232
    %v2915 = vmul.f32 %v2913, %v233
    %v2916 = vxor.u32 %v2914, 2147483648
    %v2917 = vxor.u32 %v2915, 2147483648
    %v2918 = vmul.f32 %v2916, 1.442695
    %v2919 = vpow.pop %v2918
    %v2920 = vmul.f32 %v2917, 1.442695
    %v2921 = vpow.pop %v2920
    %v2922 = vadd.f32 %v2919, 1.0
    %v2923 = vadd.f32 %v2921, 1.0
    %v2924 = vrcp.pop %v2922
    %v2925 = vmul.f32 1.0, %v2924
    %v2926 = vrcp.pop %v2923
    %v2927 = vmul.f32 1.0, %v2926
    %v2928 = vmul.f32 %v2925, %v232
    %v2929 = vmul.f32 %v2927, %v233
    %v2930 = vadd.f32 %v2928, %v234
    %v2931 = vadd.f32 %v2929, %v235
    %v2932 = vmul.f32 %v2930, %v2540
    %v2933 = vmul.f32 %v2930, %v2931
    %2935 = vrot.lane.b32.xlu0 %v2933, 64
    %v2936 = vpop.permute.xlu0 %2935
    %v2938 = vadd.f32 %v2932, %v2936
    %v2939 = vtanh.pop %v2938
    %v2940 = vmul.f32 %v2931, %v2939
    %v2941 = vpack.c.bf16 %v2940, %v2940
    %2943 = vrot.lane.b32.xlu0 %v2941, 64
    %v2944 = vpop.permute.xlu0 %2943
    %v2946 = vsel %vm443, %v2944, 0
    %2948 = vmatprep.subr.bf16.mxu0 %v2614
    %2949 = vmatpush1.bf16.msra.mxu0 %v2613
    %2950 = vmatprep.subr.bf16.mxu0 %v2618
    %2951 = vmatpush1.bf16.msra.mxu0 %v2617
    %2952 = vmatprep.subr.bf16.mxu0 %v2622
    %2953 = vmatpush1.bf16.msra.mxu0 %v2621
    %2954 = vmatprep.subr.bf16.mxu0 %v2626
    %2955 = vmatpush1.bf16.msra.mxu0 %v2625
    %2956 = vmatprep.subr.bf16.mxu0 0
    %2957 = vmatpush1.bf16.msra.mxu0 0
    %2958 = vmatprep.subr.bf16.mxu0 0
    %2959 = vmatpush1.bf16.msra.mxu0 0
    %2960 = vmatprep.subr.bf16.mxu0 0
    %2961 = vmatpush1.bf16.msra.mxu0 0
    %2962 = vmatprep.subr.bf16.mxu0 0
    %2963 = vmatpush1.bf16.msra.mxu0 0
    %2964 = vmatprep.subr.bf16.mxu0 0
    %2965 = vmatpush1.bf16.msra.mxu0 0
    %2966 = vmatprep.subr.bf16.mxu0 0
    %2967 = vmatpush1.bf16.msra.mxu0 0
    %2968 = vmatprep.subr.bf16.mxu0 0
    %2969 = vmatpush1.bf16.msra.mxu0 0
    %2970 = vmatprep.subr.bf16.mxu0 0
    %2971 = vmatpush1.bf16.msra.mxu0 0
    %2972 = vmatprep.subr.bf16.mxu0 0
    %2973 = vmatpush1.bf16.msra.mxu0 0
    %2974 = vmatprep.subr.bf16.mxu0 0
    %2975 = vmatpush1.bf16.msra.mxu0 0
    %2976 = vmatprep.subr.bf16.mxu0 0
    %2977 = vmatpush1.bf16.msra.mxu0 0
    %2978 = vmatprep.subr.bf16.mxu0 0
    %2979 = vmatpush1.bf16.msra.mxu0 0
    %2980 = vmatprep.mubr.bf16.mxu0 0
    %2981 = vmatmul.mubr.bf16.gmra.mrb[0].mxu0 %v2946
    %v2982 = vpop.f32.mrb[0].mxu0
    %v2983 = vadd.f32 0.0, %v2982
    %v2984 = vpop.f32.mrb[0].mxu0
    %v2985 = vadd.f32 0.0, %v2984
    %v2986 = vpop.f32.mrb[0].mxu0
    %v2987 = vpop.f32.mrb[0].mxu0
    %2988 = vdwg.mxu0
    %v2989 = vadd.f32 %v2983, %v2733
    %v2990 = vadd.f32 %v2985, %v2737
    %v2991 = vadd.f32 %v2989, %v2861
    %v2992 = vadd.f32 %v2990, %v2863
    %v2993 = vmul.f32 %v2991, %v232
    %v2994 = vmul.f32 %v2992, %v233
    %v2995 = vxor.u32 %v2993, 2147483648
    %v2996 = vxor.u32 %v2994, 2147483648
    %v2997 = vmul.f32 %v2995, 1.442695
    %v2998 = vpow.pop %v2997
    %v2999 = vmul.f32 %v2996, 1.442695
    %v3000 = vpow.pop %v2999
    %v3001 = vadd.f32 %v2998, 1.0
    %v3002 = vadd.f32 %v3000, 1.0
    %v3003 = vrcp.pop %v3001
    %v3004 = vmul.f32 1.0, %v3003
    %v3005 = vrcp.pop %v3002
    %v3006 = vmul.f32 1.0, %v3005
    %v3007 = vmul.f32 %v3004, %v232
    %v3008 = vmul.f32 %v3006, %v233
    %v3009 = vadd.f32 %v3007, %v234
    %v3010 = vadd.f32 %v3008, %v235
    %v3011 = vmul.f32 %v3009, %v2768
    %v3012 = vmul.f32 %v3009, %v3010
    %3014 = vrot.lane.b32.xlu0 %v3012, 64
    %v3015 = vpop.permute.xlu0 %3014
    %v3017 = vadd.f32 %v3011, %v3015
    %v3018 = vtanh.pop %v3017
    %v3019 = vmul.f32 %v3010, %v3018
    %v3020 = vld [vmem:[%s13] sm:$0xf]
    %v3021 = vld [vmem:[%s13 + $0x4] sm:$0xf]
    %v3022 = vld [vmem:[%s13 + $0x8] sm:$0xf]
    %v3023 = vld [vmem:[%s13 + $0xc] sm:$0xf]
    %v3024 = vld [vmem:[%s13 + $0x10] sm:$0xf]
    %v3025 = vld [vmem:[%s13 + $0x14] sm:$0xf]
    %v3026 = vld [vmem:[%s13 + $0x18] sm:$0xf]
    %v3027 = vld [vmem:[%s13 + $0x1c] sm:$0xf]
    %v3028 = vld [vmem:[#allocation19] sm:$0x1]
    %v3030 = vlaneseq
    %v3031 = vshrl.u32 %v3030, 7
    %v3032 = vsub.s32 0, %v3031
    %v3033 = vrot.slane %v3028, %v3032
    %v3043 = vunpack.c.l.b16 %v3020
    %v3044 = vunpack.c.l.b16 %v3021
    %v3045 = vunpack.c.l.b16 %v3022
    %v3046 = vunpack.c.l.b16 %v3023
    %v3047 = vunpack.c.l.b16 %v3024
    %v3048 = vunpack.c.l.b16 %v3025
    %v3049 = vunpack.c.l.b16 %v3026
    %v3050 = vunpack.c.l.b16 %v3027
    %v3051 = vpack.c.b16 %v3044, %v3043
    %v3052 = vpack.c.b16 %v3046, %v3045
    %v3053 = vpack.c.b16 %v3048, %v3047
    %v3054 = vpack.c.b16 %v3050, %v3049
    %3059 = vmatprep.subr.bf16.mxu0 0
    %3060 = vmatpush1.bf16.msra.mxu0 %v3051
    %3061 = vmatprep.subr.bf16.mxu0 0
    %3062 = vmatpush1.bf16.msra.mxu0 %v3052
    %3063 = vmatprep.subr.bf16.mxu0 0
    %3064 = vmatpush1.bf16.msra.mxu0 %v3053
    %3065 = vmatprep.subr.bf16.mxu0 0
    %3066 = vmatpush1.bf16.msra.mxu0 %v3054
    %3067 = vmatprep.subr.bf16.mxu0 0
    %3068 = vmatpush1.bf16.msra.mxu0 0
    %3069 = vmatprep.subr.bf16.mxu0 0
    %3070 = vmatpush1.bf16.msra.mxu0 0
    %3071 = vmatprep.subr.bf16.mxu0 0
    %3072 = vmatpush1.bf16.msra.mxu0 0
    %3073 = vmatprep.subr.bf16.mxu0 0
    %3074 = vmatpush1.bf16.msra.mxu0 0
    %3075 = vmatprep.subr.bf16.mxu0 0
    %3076 = vmatpush1.bf16.msra.mxu0 0
    %3077 = vmatprep.subr.bf16.mxu0 0
    %3078 = vmatpush1.bf16.msra.mxu0 0
    %3079 = vmatprep.subr.bf16.mxu0 0
    %3080 = vmatpush1.bf16.msra.mxu0 0
    %3081 = vmatprep.subr.bf16.mxu0 0
    %3082 = vmatpush1.bf16.msra.mxu0 0
    %3083 = vmatprep.subr.bf16.mxu0 0
    %3084 = vmatpush1.bf16.msra.mxu0 0
    %3085 = vmatprep.subr.bf16.mxu0 0
    %3086 = vmatpush1.bf16.msra.mxu0 0
    %3087 = vmatprep.subr.bf16.mxu0 0
    %3088 = vmatpush1.bf16.msra.mxu0 0
    %3089 = vmatprep.subr.bf16.mxu0 0
    %3090 = vmatpush1.bf16.msra.mxu0 0
    %3091 = vmatprep.mubr.bf16.mxu0 0
    %3092 = vmatmul.mubr.bf16.gmra.mrb[0].mxu0 %v2946
    %v3093 = vpop.f32.mrb[0].mxu0
    %v3094 = vadd.f32 %v3033, %v3093
    %v3095 = vpop.f32.mrb[0].mxu0
    %v3096 = vpop.f32.mrb[0].mxu0
    %v3097 = vpop.f32.mrb[0].mxu0
    %3098 = vdwg.mxu0
    %v3099 = vtanh.pop %v3094
    %v3100 = vpack.c.bf16 %v3019, %v3019
    %3102 = vrot.lane.b32.xlu0 %v3100, 64
    %v3103 = vpop.permute.xlu0 %3102
    %v3105 = vsel %vm443, %v3103, 0
    %3107 = vmatprep.subr.bf16.mxu0 0
    %3108 = vmatpush1.bf16.msra.mxu0 %v3051
    %3109 = vmatprep.subr.bf16.mxu0 0
    %3110 = vmatpush1.bf16.msra.mxu0 %v3052
    %3111 = vmatprep.subr.bf16.mxu0 0
    %3112 = vmatpush1.bf16.msra.mxu0 %v3053
    %3113 = vmatprep.subr.bf16.mxu0 0
    %3114 = vmatpush1.bf16.msra.mxu0 %v3054
    %3115 = vmatprep.subr.bf16.mxu0 0
    %3116 = vmatpush1.bf16.msra.mxu0 0
    %3117 = vmatprep.subr.bf16.mxu0 0
    %3118 = vmatpush1.bf16.msra.mxu0 0
    %3119 = vmatprep.subr.bf16.mxu0 0
    %3120 = vmatpush1.bf16.msra.mxu0 0
    %3121 = vmatprep.subr.bf16.mxu0 0
    %3122 = vmatpush1.bf16.msra.mxu0 0
    %3123 = vmatprep.subr.bf16.mxu0 0
    %3124 = vmatpush1.bf16.msra.mxu0 0
    %3125 = vmatprep.subr.bf16.mxu0 0
    %3126 = vmatpush1.bf16.msra.mxu0 0
    %3127 = vmatprep.subr.bf16.mxu0 0
    %3128 = vmatpush1.bf16.msra.mxu0 0
    %3129 = vmatprep.subr.bf16.mxu0 0
    %3130 = vmatpush1.bf16.msra.mxu0 0
    %3131 = vmatprep.subr.bf16.mxu0 0
    %3132 = vmatpush1.bf16.msra.mxu0 0
    %3133 = vmatprep.subr.bf16.mxu0 0
    %3134 = vmatpush1.bf16.msra.mxu0 0
    %3135 = vmatprep.subr.bf16.mxu0 0
    %3136 = vmatpush1.bf16.msra.mxu0 0
    %3137 = vmatprep.subr.bf16.mxu0 0
    %3138 = vmatpush1.bf16.msra.mxu0 0
    %3139 = vmatprep.mubr.bf16.mxu0 0
    %3140 = vmatmul.mubr.bf16.gmra.mrb[0].mxu0 %v3105
    %v3141 = vpop.f32.mrb[0].mxu0
    %v3142 = vadd.f32 %v3033, %v3141
    %v3143 = vpop.f32.mrb[0].mxu0
    %v3144 = vpop.f32.mrb[0].mxu0
    %v3145 = vpop.f32.mrb[0].mxu0
    %3146 = vdwg.mxu0
    %v3147 = vtanh.pop %v3142
    %vm3148 = vcmp.ge.s32.totalorder %v224, 64
    %vm3149 = vcmp.lt.s32.totalorder %v224, 96
    %vm3150 = vmand %vm3148, %vm3149
    %v3151 = vsel %vm3150, 2.0, 1.0
    %v3152 = vsel %vm3150, -1.0, 0.0
    %v3153 = vpack.c.bf16 %v3099, %v3099
    %v3154 = vld [vmem:[%s15] sm:$0xf]
    %v3155 = vld [vmem:[%s15 + $0x4] sm:$0xf]
    %v3156 = vld [vmem:[%s15 + $0x8] sm:$0xf]
    %v3157 = vld [vmem:[%s15 + $0xc] sm:$0xf]
    %v3158 = vld [vmem:[#allocation20] sm:$0x1]
    %v3160 = vlaneseq
    %v3161 = vshrl.u32 %v3160, 7
    %v3162 = vsub.s32 0, %v3161
    %v3163 = vrot.slane %v3158, %v3162
    %v3169 = vunpack.c.l.b16 %v3154
    %v3170 = vunpack.c.l.b16 %v3155
    %v3171 = vunpack.c.l.b16 %v3156
    %v3172 = vunpack.c.l.b16 %v3157
    %v3173 = vpack.c.b16 %v3170, %v3169
    %v3174 = vpack.c.b16 %v3172, %v3171
    %vm3177 = vcmask 261120
    %v3179 = vsel %vm3177, %v3153, 0
    %3181 = vmatprep.subr.bf16.mxu0 0
    %3182 = vmatpush1.bf16.msra.mxu0 %v3173
    %3183 = vmatprep.subr.bf16.mxu0 0
    %3184 = vmatpush1.bf16.msra.mxu0 %v3174
    %3185 = vmatprep.subr.bf16.mxu0 0
    %3186 = vmatpush1.bf16.msra.mxu0 0
    %3187 = vmatprep.subr.bf16.mxu0 0
    %3188 = vmatpush1.bf16.msra.mxu0 0
    %3189 = vmatprep.subr.bf16.mxu0 0
    %3190 = vmatpush1.bf16.msra.mxu0 0
    %3191 = vmatprep.subr.bf16.mxu0 0
    %3192 = vmatpush1.bf16.msra.mxu0 0
    %3193 = vmatprep.subr.bf16.mxu0 0
    %3194 = vmatpush1.bf16.msra.mxu0 0
    %3195 = vmatprep.subr.bf16.mxu0 0
    %3196 = vmatpush1.bf16.msra.mxu0 0
    %3197 = vmatprep.subr.bf16.mxu0 0
    %3198 = vmatpush1.bf16.msra.mxu0 0
    %3199 = vmatprep.subr.bf16.mxu0 0
    %3200 = vmatpush1.bf16.msra.mxu0 0
    %3201 = vmatprep.subr.bf16.mxu0 0
    %3202 = vmatpush1.bf16.msra.mxu0 0
    %3203 = vmatprep.subr.bf16.mxu0 0
    %3204 = vmatpush1.bf16.msra.mxu0 0
    %3205 = vmatprep.subr.bf16.mxu0 0
    %3206 = vmatpush1.bf16.msra.mxu0 0
    %3207 = vmatprep.subr.bf16.mxu0 0
    %3208 = vmatpush1.bf16.msra.mxu0 0
    %3209 = vmatprep.subr.bf16.mxu0 0
    %3210 = vmatpush1.bf16.msra.mxu0 0
    %3211 = vmatprep.subr.bf16.mxu0 0
    %3212 = vmatpush1.bf16.msra.mxu0 0
    %3213 = vmatprep.mubr.bf16.mxu0 0
    %3214 = vmatmul.mubr.bf16.gmra.mrb[0].mxu0 %v3179
    %v3215 = vpop.f32.mrb[0].mxu0
    %v3216 = vadd.f32 %v3163, %v3215
    %v3217 = vpop.f32.mrb[0].mxu0
    %v3218 = vpop.f32.mrb[0].mxu0
    %v3219 = vpop.f32.mrb[0].mxu0
    %3220 = vdwg.mxu0
    %v3221 = vadd.f32 %v3216, 0.0
    %v3222 = vmul.f32 %v3221, %v3151
    %v3223 = vxor.u32 %v3222, 2147483648
    %v3224 = vmul.f32 %v3223, 1.442695
    %v3225 = vpow.pop %v3224
    %v3226 = vadd.f32 %v3225, 1.0
    %v3227 = vrcp.pop %v3226
    %v3228 = vmul.f32 1.0, %v3227
    %v3229 = vmul.f32 %v3228, %v3151
    %v3230 = vadd.f32 %v3229, %v3152
    %v3231 = vmul.f32 %v3230, 0.0
    %3233 = vrot.lane.b32.xlu0 %v3230, 64
    %v3234 = vpop.permute.xlu0 %3233
    %v3236 = vmul.f32 %v3230, %v3234
    %3238 = vrot.lane.b32.xlu0 %v3236, 32
    %v3239 = vpop.permute.xlu0 %3238
    %v3241 = vadd.f32 %v3231, %v3239
    %v3242 = vtanh.pop %v3241
    %3244 = vrot.lane.b32.xlu0 %v3242, 64
    %v3245 = vpop.permute.xlu0 %3244
    %v3247 = vmul.f32 %v3230, %v3245
    %v3248 = vpack.c.bf16 %v3247, %v3247
    %v3249 = vld [vmem:[%s17] sm:$0xff]
    %v3250 = vld [vmem:[%s17 + $0x8] sm:$0xff]
    %v3251 = vld [vmem:[%s17 + $0x10] sm:$0xff]
    %v3252 = vld [vmem:[%s17 + $0x18] sm:$0xff]
    %3254 = vrot.lane.b32.xlu0 %v3248, 32
    %v3255 = vpop.permute.xlu0 %3254
    %v3260 = vunpack.c.l.b16 %v3249
    %v3261 = vunpack.c.h.b16 %v3249
    %v3262 = vunpack.c.l.b16 %v3250
    %v3263 = vunpack.c.h.b16 %v3250
    %v3264 = vunpack.c.l.b16 %v3251
    %v3265 = vunpack.c.h.b16 %v3251
    %v3266 = vunpack.c.l.b16 %v3252
    %v3267 = vunpack.c.h.b16 %v3252
    %v3268 = vpack.c.b16 %v3262, %v3260
    %v3269 = vpack.c.b16 %v3263, %v3261
    %v3270 = vpack.c.b16 %v3266, %v3264
    %v3271 = vpack.c.b16 %v3267, %v3265
    %v3277 = vsel %vm3177, %v3255, 0
    %3279 = vmatprep.subr.bf16.mxu0 %v3269
    %3280 = vmatpush1.bf16.msra.mxu0 %v3268
    %3281 = vmatprep.subr.bf16.mxu0 %v3271
    %3282 = vmatpush1.bf16.msra.mxu0 %v3270
    %3283 = vmatprep.subr.bf16.mxu0 0
    %3284 = vmatpush1.bf16.msra.mxu0 0
    %3285 = vmatprep.subr.bf16.mxu0 0
    %3286 = vmatpush1.bf16.msra.mxu0 0
    %3287 = vmatprep.subr.bf16.mxu0 0
    %3288 = vmatpush1.bf16.msra.mxu0 0
    %3289 = vmatprep.subr.bf16.mxu0 0
    %3290 = vmatpush1.bf16.msra.mxu0 0
    %3291 = vmatprep.subr.bf16.mxu0 0
    %3292 = vmatpush1.bf16.msra.mxu0 0
    %3293 = vmatprep.subr.bf16.mxu0 0
    %3294 = vmatpush1.bf16.msra.mxu0 0
    %3295 = vmatprep.subr.bf16.mxu0 0
    %3296 = vmatpush1.bf16.msra.mxu0 0
    %3297 = vmatprep.subr.bf16.mxu0 0
    %3298 = vmatpush1.bf16.msra.mxu0 0
    %3299 = vmatprep.subr.bf16.mxu0 0
    %3300 = vmatpush1.bf16.msra.mxu0 0
    %3301 = vmatprep.subr.bf16.mxu0 0
    %3302 = vmatpush1.bf16.msra.mxu0 0
    %3303 = vmatprep.subr.bf16.mxu0 0
    %3304 = vmatpush1.bf16.msra.mxu0 0
    %3305 = vmatprep.subr.bf16.mxu0 0
    %3306 = vmatpush1.bf16.msra.mxu0 0
    %3307 = vmatprep.subr.bf16.mxu0 0
    %3308 = vmatpush1.bf16.msra.mxu0 0
    %3309 = vmatprep.subr.bf16.mxu0 0
    %3310 = vmatpush1.bf16.msra.mxu0 0
    %3311 = vmatprep.mubr.bf16.mxu0 0
    %3312 = vmatmul.mubr.bf16.gmra.mrb[0].mxu0 %v3277
    %v3313 = vpop.f32.mrb[0].mxu0
    %v3314 = vadd.f32 0.0, %v3313
    %v3315 = vpop.f32.mrb[0].mxu0
    %v3316 = vadd.f32 0.0, %v3315
    %v3317 = vpop.f32.mrb[0].mxu0
    %v3318 = vpop.f32.mrb[0].mxu0
    %3319 = vdwg.mxu0
    %v3320 = vld [vmem:[%s19] sm:$0x1]
    %v3322 = vlaneseq
    %v3323 = vshrl.u32 %v3322, 7
    %v3324 = vsub.s32 0, %v3323
    %v3325 = vrot.slane %v3320, %v3324
    %v3327 = vadd.f32 %v3316, %v3325
    %v3328 = vadd.f32 %v3327, 0.0
    %v3329 = vmul.f32 %v3328, %v3151
    %v3330 = vxor.u32 %v3329, 2147483648
    %v3331 = vmul.f32 %v3330, 1.442695
    %v3332 = vpow.pop %v3331
    %v3333 = vadd.f32 %v3332, 1.0
    %v3334 = vrcp.pop %v3333
    %v3335 = vmul.f32 1.0, %v3334
    %v3336 = vmul.f32 %v3335, %v3151
    %v3337 = vadd.f32 %v3336, %v3152
    %v3338 = vmul.f32 %v3337, 0.0
    %3340 = vrot.lane.b32.xlu0 %v3337, 64
    %v3341 = vpop.permute.xlu0 %3340
    %v3343 = vmul.f32 %v3337, %v3341
    %3345 = vrot.lane.b32.xlu0 %v3343, 32
    %v3346 = vpop.permute.xlu0 %3345
    %v3348 = vadd.f32 %v3338, %v3346
    %v3349 = vtanh.pop %v3348
    %3351 = vrot.lane.b32.xlu0 %v3349, 64
    %v3352 = vpop.permute.xlu0 %3351
    %v3354 = vmul.f32 %v3337, %v3352
    %v3355 = vpack.c.bf16 %v3354, %v3354
    %v3356 = vld [vmem:[%s18] sm:$0xf]
    %v3357 = vld [vmem:[%s18 + $0x4] sm:$0xf]
    %v3358 = vld [vmem:[%s18 + $0x8] sm:$0xf]
    %v3359 = vld [vmem:[%s18 + $0xc] sm:$0xf]
    %3361 = vrot.lane.b32.xlu0 %v3355, 32
    %v3362 = vpop.permute.xlu0 %3361
    %v3367 = vunpack.c.l.b16 %v3356
    %v3368 = vunpack.c.l.b16 %v3357
    %v3369 = vunpack.c.l.b16 %v3358
    %v3370 = vunpack.c.l.b16 %v3359
    %v3371 = vpack.c.b16 %v3368, %v3367
    %v3372 = vpack.c.b16 %v3370, %v3369
    %v3376 = vsel %vm3177, %v3362, 0
    %3378 = vmatprep.subr.bf16.mxu0 0
    %3379 = vmatpush1.bf16.msra.mxu0 %v3371
    %3380 = vmatprep.subr.bf16.mxu0 0
    %3381 = vmatpush1.bf16.msra.mxu0 %v3372
    %3382 = vmatprep.subr.bf16.mxu0 0
    %3383 = vmatpush1.bf16.msra.mxu0 0
    %3384 = vmatprep.subr.bf16.mxu0 0
    %3385 = vmatpush1.bf16.msra.mxu0 0
    %3386 = vmatprep.subr.bf16.mxu0 0
    %3387 = vmatpush1.bf16.msra.mxu0 0
    %3388 = vmatprep.subr.bf16.mxu0 0
    %3389 = vmatpush1.bf16.msra.mxu0 0
    %3390 = vmatprep.subr.bf16.mxu0 0
    %3391 = vmatpush1.bf16.msra.mxu0 0
    %3392 = vmatprep.subr.bf16.mxu0 0
    %3393 = vmatpush1.bf16.msra.mxu0 0
    %3394 = vmatprep.subr.bf16.mxu0 0
    %3395 = vmatpush1.bf16.msra.mxu0 0
    %3396 = vmatprep.subr.bf16.mxu0 0
    %3397 = vmatpush1.bf16.msra.mxu0 0
    %3398 = vmatprep.subr.bf16.mxu0 0
    %3399 = vmatpush1.bf16.msra.mxu0 0
    %3400 = vmatprep.subr.bf16.mxu0 0
    %3401 = vmatpush1.bf16.msra.mxu0 0
    %3402 = vmatprep.subr.bf16.mxu0 0
    %3403 = vmatpush1.bf16.msra.mxu0 0
    %3404 = vmatprep.subr.bf16.mxu0 0
    %3405 = vmatpush1.bf16.msra.mxu0 0
    %3406 = vmatprep.subr.bf16.mxu0 0
    %3407 = vmatpush1.bf16.msra.mxu0 0
    %3408 = vmatprep.subr.bf16.mxu0 0
    %3409 = vmatpush1.bf16.msra.mxu0 0
    %3410 = vmatprep.mubr.bf16.mxu0 0
    %3411 = vmatmul.mubr.bf16.gmra.mrb[0].mxu0 %v3376
    %v3412 = vpop.f32.mrb[0].mxu0
    %v3413 = vadd.f32 0.0, %v3412
    %v3414 = vpop.f32.mrb[0].mxu0
    %v3415 = vpop.f32.mrb[0].mxu0
    %v3416 = vpop.f32.mrb[0].mxu0
    %3417 = vdwg.mxu0
    %v3418 = vpack.c.bf16 %v3147, %v3147
    %v3420 = vsel %vm3177, %v3418, 0
    %3422 = vmatprep.subr.bf16.mxu0 0
    %3423 = vmatpush1.bf16.msra.mxu0 %v3173
    %3424 = vmatprep.subr.bf16.mxu0 0
    %3425 = vmatpush1.bf16.msra.mxu0 %v3174
    %3426 = vmatprep.subr.bf16.mxu0 0
    %3427 = vmatpush1.bf16.msra.mxu0 0
    %3428 = vmatprep.subr.bf16.mxu0 0
    %3429 = vmatpush1.bf16.msra.mxu0 0
    %3430 = vmatprep.subr.bf16.mxu0 0
    %3431 = vmatpush1.bf16.msra.mxu0 0
    %3432 = vmatprep.subr.bf16.mxu0 0
    %3433 = vmatpush1.bf16.msra.mxu0 0
    %3434 = vmatprep.subr.bf16.mxu0 0
    %3435 = vmatpush1.bf16.msra.mxu0 0
    %3436 = vmatprep.subr.bf16.mxu0 0
    %3437 = vmatpush1.bf16.msra.mxu0 0
    %3438 = vmatprep.subr.bf16.mxu0 0
    %3439 = vmatpush1.bf16.msra.mxu0 0
    %3440 = vmatprep.subr.bf16.mxu0 0
    %3441 = vmatpush1.bf16.msra.mxu0 0
    %3442 = vmatprep.subr.bf16.mxu0 0
    %3443 = vmatpush1.bf16.msra.mxu0 0
    %3444 = vmatprep.subr.bf16.mxu0 0
    %3445 = vmatpush1.bf16.msra.mxu0 0
    %3446 = vmatprep.subr.bf16.mxu0 0
    %3447 = vmatpush1.bf16.msra.mxu0 0
    %3448 = vmatprep.subr.bf16.mxu0 0
    %3449 = vmatpush1.bf16.msra.mxu0 0
    %3450 = vmatprep.subr.bf16.mxu0 0
    %3451 = vmatpush1.bf16.msra.mxu0 0
    %3452 = vmatprep.subr.bf16.mxu0 0
    %3453 = vmatpush1.bf16.msra.mxu0 0
    %3454 = vmatprep.mubr.bf16.mxu0 0
    %3455 = vmatmul.mubr.bf16.gmra.mrb[0].mxu0 %v3420
    %v3456 = vpop.f32.mrb[0].mxu0
    %v3457 = vadd.f32 %v3163, %v3456
    %v3458 = vpop.f32.mrb[0].mxu0
    %v3459 = vpop.f32.mrb[0].mxu0
    %v3460 = vpop.f32.mrb[0].mxu0
    %3461 = vdwg.mxu0
    %v3462 = vadd.f32 %v3457, %v3314
    %v3463 = vmul.f32 %v3462, %v3151
    %v3464 = vxor.u32 %v3463, 2147483648
    %v3465 = vmul.f32 %v3464, 1.442695
    %v3466 = vpow.pop %v3465
    %v3467 = vadd.f32 %v3466, 1.0
    %v3468 = vrcp.pop %v3467
    %v3469 = vmul.f32 1.0, %v3468
    %v3470 = vmul.f32 %v3469, %v3151
    %v3471 = vadd.f32 %v3470, %v3152
    %v3472 = vmul.f32 %v3471, %v3241
    %3474 = vrot.lane.b32.xlu0 %v3471, 64
    %v3475 = vpop.permute.xlu0 %3474
    %v3477 = vmul.f32 %v3471, %v3475
    %3479 = vrot.lane.b32.xlu0 %v3477, 32
    %v3480 = vpop.permute.xlu0 %3479
    %v3482 = vadd.f32 %v3472, %v3480
    %v3483 = vtanh.pop %v3482
    %3485 = vrot.lane.b32.xlu0 %v3483, 64
    %v3486 = vpop.permute.xlu0 %3485
    %v3488 = vmul.f32 %v3471, %v3486
    %v3489 = vpack.c.bf16 %v3488, %v3488
    %3491 = vrot.lane.b32.xlu0 %v3489, 32
    %v3492 = vpop.permute.xlu0 %3491
    %v3494 = vsel %vm3177, %v3492, 0
    %3496 = vmatprep.subr.bf16.mxu0 %v3269
    %3497 = vmatpush1.bf16.msra.mxu0 %v3268
    %3498 = vmatprep.subr.bf16.mxu0 %v3271
    %3499 = vmatpush1.bf16.msra.mxu0 %v3270
    %3500 = vmatprep.subr.bf16.mxu0 0
    %3501 = vmatpush1.bf16.msra.mxu0 0
    %3502 = vmatprep.subr.bf16.mxu0 0
    %3503 = vmatpush1.bf16.msra.mxu0 0
    %3504 = vmatprep.subr.bf16.mxu0 0
    %3505 = vmatpush1.bf16.msra.mxu0 0
    %3506 = vmatprep.subr.bf16.mxu0 0
    %3507 = vmatpush1.bf16.msra.mxu0 0
    %3508 = vmatprep.subr.bf16.mxu0 0
    %3509 = vmatpush1.bf16.msra.mxu0 0
    %3510 = vmatprep.subr.bf16.mxu0 0
    %3511 = vmatpush1.bf16.msra.mxu0 0
    %3512 = vmatprep.subr.bf16.mxu0 0
    %3513 = vmatpush1.bf16.msra.mxu0 0
    %3514 = vmatprep.subr.bf16.mxu0 0
    %3515 = vmatpush1.bf16.msra.mxu0 0
    %3516 = vmatprep.subr.bf16.mxu0 0
    %3517 = vmatpush1.bf16.msra.mxu0 0
    %3518 = vmatprep.subr.bf16.mxu0 0
    %3519 = vmatpush1.bf16.msra.mxu0 0
    %3520 = vmatprep.subr.bf16.mxu0 0
    %3521 = vmatpush1.bf16.msra.mxu0 0
    %3522 = vmatprep.subr.bf16.mxu0 0
    %3523 = vmatpush1.bf16.msra.mxu0 0
    %3524 = vmatprep.subr.bf16.mxu0 0
    %3525 = vmatpush1.bf16.msra.mxu0 0
    %3526 = vmatprep.subr.bf16.mxu0 0
    %3527 = vmatpush1.bf16.msra.mxu0 0
    %3528 = vmatprep.mubr.bf16.mxu0 0
    %3529 = vmatmul.mubr.bf16.gmra.mrb[0].mxu0 %v3494
    %v3530 = vpop.f32.mrb[0].mxu0
    %v3531 = vpop.f32.mrb[0].mxu0
    %v3532 = vadd.f32 0.0, %v3531
    %v3533 = vpop.f32.mrb[0].mxu0
    %v3534 = vpop.f32.mrb[0].mxu0
    %3535 = vdwg.mxu0
    %v3536 = vadd.f32 %v3532, %v3325
    %v3537 = vadd.f32 %v3536, %v3413
    %v3538 = vmul.f32 %v3537, %v3151
    %v3539 = vxor.u32 %v3538, 2147483648
    %v3540 = vmul.f32 %v3539, 1.442695
    %v3541 = vpow.pop %v3540
    %v3542 = vadd.f32 %v3541, 1.0
    %v3543 = vrcp.pop %v3542
    %v3544 = vmul.f32 1.0, %v3543
    %v3545 = vmul.f32 %v3544, %v3151
    %v3546 = vadd.f32 %v3545, %v3152
    %v3547 = vmul.f32 %v3546, %v3348
    %3549 = vrot.lane.b32.xlu0 %v3546, 64
    %v3550 = vpop.permute.xlu0 %3549
    %v3552 = vmul.f32 %v3546, %v3550
    %3554 = vrot.lane.b32.xlu0 %v3552, 32
    %v3555 = vpop.permute.xlu0 %3554
    %v3557 = vadd.f32 %v3547, %v3555
    %v3558 = vtanh.pop %v3557
    %3560 = vrot.lane.b32.xlu0 %v3558, 64
    %v3561 = vpop.permute.xlu0 %3560
    %v3563 = vmul.f32 %v3546, %v3561
    %3565 = vrot.lane.b32.xlu0 %v3354, 32
    %v3566 = vpop.permute.xlu0 %3565
    %3569 = vrot.lane.b32.xlu0 %v3563, 64
    %v3570 = vpop.permute.xlu0 %3569
    %v3572 = vsel %vm3177, %v3566, %v3570
    %vm3573 = vcmask 517120
    %3574 = vst.msk [vmem:[%s20] sm:$0x3] %vm3573, %v3572
    %v3575 = vrot.slane %v3563, 6
    %vm3577 = vcmask 1041408
    %v3578 = vsel %vm3577, %v3488, %v3575
    %3580 = vrot.lane.b32.xlu0 %v3578, 32
    %v3581 = vpop.permute.xlu0 %3580
    %vm3583 = vcmask 257024
    %3584 = vst.msk [vmem:[#allocation22] sm:$0xf] %vm3583, %v3581
    %v3586 = vrot.slane %v3557, 6
    %v3588 = vsel %vm3577, %v3482, %v3586
    %3590 = vrot.lane.b32.xlu0 %v3588, 96
    %v3591 = vpop.permute.xlu0 %3590
    %3593 = vst.msk [vmem:[#allocation23] sm:$0xf] %vm3583, %v3591
    // Predicated region
    $region130: #{encoder_forward.1} parent=1 // pred_check
      _
    $region131: #{encoder_forward.1} parent=1 // pred_check_branch
      %3595 = sbr.rel (0) target = $region133
    $region132: #{encoder_forward.1} parent=1 // pred_region
      _
    $region133: #{encoder_forward.1} parent=1 // pred_fallthru
      _
    // Predicated region
    $region134: #{encoder_forward.1} parent=1 // pred_check
      _
    $region135: #{encoder_forward.1} parent=1 // pred_check_branch
      %3597 = sbr.rel (0) target = $region137
    $region136: #{encoder_forward.1} parent=1 // pred_region
      %s3599 = ssub.s32 64, 64
      %3600 = vsyncadd [#allocation4], %s3599
      %s3602 = sshll.u32 [#allocation22], 4
      %s3603 = int_to_ptr.vmem [resolvable:$true] %s3602
      %3605 = dma.vmem_to_hbm [thread:$0]  %s3603, 64, %s21, [#allocation4]
    $region137: #{encoder_forward.1} parent=1 // pred_fallthru
      _
    // Predicated region
    $region138: #{encoder_forward.1} parent=1 // pred_check
      _
    $region139: #{encoder_forward.1} parent=1 // pred_check_branch
      %3607 = sbr.rel (0) target = $region141
    $region140: #{encoder_forward.1} parent=1 // pred_region
      %s3609 = ssub.s32 64, 64
      %3610 = vsyncadd [#allocation24], %s3609
      %s3612 = sshll.u32 [#allocation23], 4
      %s3613 = int_to_ptr.vmem [resolvable:$true] %s3612
      %3615 = dma.vmem_to_hbm [thread:$0]  %s3613, 64, %s22, [#allocation24]
    $region141: #{encoder_forward.1} parent=1 // pred_fallthru
      _
    // Predicated region
    $region142: #{encoder_forward.1} parent=1 // pred_check
      _
    $region143: #{encoder_forward.1} parent=1 // pred_check_branch
      %3617 = sbr.rel (0) target = $region145
    $region144: #{encoder_forward.1} parent=1 // pred_region
      _
    $region145: #{encoder_forward.1} parent=1 // pred_fallthru
      _
    // Predicated region
    $region146: #{encoder_forward.1} parent=1 // pred_check
      _
    $region147: #{encoder_forward.1} parent=1 // pred_check_branch
      %3619 = sbr.rel (0) target = $region149
    $region148: #{encoder_forward.1} parent=1 // pred_region
      %3620 = dma.done [#allocation4], 64
    $region149: #{encoder_forward.1} parent=1 // pred_fallthru
      _
    // Predicated region
    $region150: #{encoder_forward.1} parent=1 // pred_check
      _
    $region151: #{encoder_forward.1} parent=1 // pred_check_branch
      %3622 = sbr.rel (0) target = $region153
    $region152: #{encoder_forward.1} parent=1 // pred_region
      %3623 = dma.done [#allocation24], 64
    $region153: #{encoder_forward.1} parent=1 // pred_fallthru
      _
    %3624 = vsyncpa [#allocation3], 1
    %3625 = vsyncpa [#allocation6], 1
    %3626 = vsyncpa [#allocation9], 1
    %3627 = vsyncpa [#allocation12], 1
    %3628 = vsyncpa [#allocation15], 1
    %3629 = vsyncpa [#allocation18], 1
    %3630 = vsyncpa [#allocation21], 1
    %3631 = vsyncpa [#allocation4], 1
    %3632 = vsyncpa [#allocation24], 1

</llo_original>
